<compile_context>
chip_gen: v7x
topology: tpu7x:2x2x1
jax: 0.10.0
libtpu: 0.0.40
codegen_flags: <defaults>
</compile_context>

<pallas_src>
import jax
import jax.numpy as jnp
from jax.experimental import pallas as pl
from jax.experimental.pallas import tpu as pltpu

K = 3  # cubic kernel, stride 1, padding 1 ("SAME")


def resblock_kernel(x_ref, w1_ref, w2_ref, o_ref):
    # x_ref : (TN, D, HWC) f32 — TN batch elements, channels-last, lanes = H*W*C
    # w1_ref: (3*HWC, HWC) bf16 — banded conv1 weight, kd taps stacked along rows
    # w2_ref: (3*HWC, HWC) bf16 — banded conv2 weight
    # o_ref : (TN, D, HWC)
    TN, D, HWC = x_ref.shape
    M = TN * D
    x = x_ref[...].astype(jnp.float32).reshape(M, HWC)

    # Row index within each batch element (row r holds (n, d) with d = r % D).
    d_idx = jax.lax.broadcasted_iota(jnp.int32, (M, HWC), 0) % D
    is_first = d_idx == 0          # d == 0   : kd=0 tap reads outside -> zero
    is_last = d_idx == (D - 1)     # d == D-1 : kd=2 tap reads outside -> zero

    def conv(v, w_ref):
        # kd=0 tap input: row (n, d) <- v[n, d-1]; kd=2 tap: row (n, d) <- v[n, d+1].
        # Roll over the stacked (TN*D) axis + row mask => SAME padding along D and
        # no leakage across batch elements.
        v_m1 = jnp.where(is_first, 0.0, pltpu.roll(v, 1, axis=0))
        v_p1 = jnp.where(is_last, 0.0, pltpu.roll(v, M - 1, axis=0))
        lhs = jnp.concatenate([v_m1, v, v_p1], axis=-1).astype(jnp.bfloat16)
        return jnp.dot(lhs, w_ref[...], preferred_element_type=jnp.float32)

    h = jnp.maximum(conv(x, w1_ref), 0.0)      # conv1 + ReLU
    out = conv(h, w2_ref) + x                  # conv2 + residual (Cin == Cout)
    o_ref[...] = jnp.maximum(out, 0.0).reshape(TN, D, HWC).astype(o_ref.dtype)


def _band_weights(w, H, W):
    """Fold the (kh, kw) taps and the SAME padding in H/W of a DHWIO conv kernel
    into one banded (H*W*Cin, H*W*Cout) matrix per kd tap."""
    KD, KH, KW, Cin, Cout = w.shape
    h_idx = jnp.arange(H)
    w_idx = jnp.arange(W)
    # sel_h[p, e, kh] == 1 iff input row p feeds output row e through tap kh
    # (out-of-range inputs never match -> zero padding for free).
    sel_h = (h_idx[:, None, None]
             == h_idx[None, :, None] + jnp.arange(KH)[None, None, :] - KH // 2
             ).astype(w.dtype)
    sel_w = (w_idx[:, None, None]
             == w_idx[None, :, None] + jnp.arange(KW)[None, None, :] - KW // 2
             ).astype(w.dtype)
    big = jnp.einsum('peh,qfv,dhvio->dpqiefo', sel_h, sel_w, w)
    return big.reshape(KD, H * W * Cin, H * W * Cout)


def prepare_banded_weights(w1, w2, H, W):
    """Built ONCE at init time (hoisted out of the jitted forward): banded matrices
    with the 3 kd taps stacked along the contraction dim, cast to bf16."""
    KD, _, _, Cin, Cout = w1.shape
    assert Cin == Cout, "no downsample => residual requires Cin == Cout"
    HWC = H * W * Cin
    w1b = _band_weights(w1, H, W).reshape(KD * HWC, HWC).astype(jnp.bfloat16)
    w2b = _band_weights(w2, H, W).reshape(KD * HWC, HWC).astype(jnp.bfloat16)
    return w1b, w2b


@jax.jit
def residual_block_forward(x, w1b, w2b):
    """x: (N, D, H, W, C) f32 NDHWC; w1b/w2b: (3*H*W*C, H*W*C) bf16 banded weights."""
    N, D, H, W, C = x.shape
    HWC = H * W * C
    assert w1b.shape == (K * HWC, HWC) and w2b.shape == (K * HWC, HWC)

    # Fold batch into the matmul M dimension, targeting M = TN*D ~ 256 rows.
    TN = max(1, min(N, 256 // max(D, 1)))
    while N % TN:
        TN -= 1

    x2d = x.reshape(N, D, HWC)  # pure relabel of the row-major NDHWC layout

    out = pl.pallas_call(
        resblock_kernel,
        out_shape=jax.ShapeDtypeStruct((N, D, HWC), x.dtype),
        grid_spec=pltpu.PrefetchScalarGridSpec(
            num_scalar_prefetch=0,
            grid=(N // TN,),
            in_specs=[
                pl.BlockSpec((TN, D, HWC), lambda n: (n, 0, 0)),          # x slab
                pl.BlockSpec((K * HWC, HWC), lambda n: (0, 0),            # w1 (resident,
                             pipeline_mode=pl.Buffered(1)),               #  single-buffered)
                pl.BlockSpec((K * HWC, HWC), lambda n: (0, 0),            # w2
                             pipeline_mode=pl.Buffered(1)),
            ],
            out_specs=pl.BlockSpec((TN, D, HWC), lambda n: (n, 0, 0)),
        ),
        compiler_params=pltpu.CompilerParams(
            dimension_semantics=("parallel",),   # shards batch tiles across TCs on v7x
        ),
    )(x2d, w1b, w2b)
    return out.reshape(N, D, H, W, C)


def ref_forward(x, w1, w2):
    """Pure-JAX f32 reference (NDHWC / DHWIO)."""
    dn = ("NDHWC", "DHWIO", "NDHWC")
    h = jax.lax.conv_general_dilated(x, w1, (1, 1, 1), "SAME", dimension_numbers=dn)
    h = jnp.maximum(h, 0.0)
    o = jax.lax.conv_general_dilated(h, w2, (1, 1, 1), "SAME", dimension_numbers=dn)
    return jnp.maximum(o + x, 0.0)


if __name__ == "__main__":
    # Small shapes consistent with the module: N=2, Cin=Cout=8, D=H=W=8.
    N, C, D, H, W = 2, 8, 8, 8, 8

    key = jax.random.PRNGKey(0)
    kx, k1, k2 = jax.random.split(key, 3)
    x = jax.random.normal(kx, (N, D, H, W, C), dtype=jnp.float32)
    # Conv3d(bias=False) weights, stored DHWIO.
    w1 = 0.1 * jax.random.normal(k1, (K, K, K, C, C), dtype=jnp.float32)
    w2 = 0.1 * jax.random.normal(k2, (K, K, K, C, C), dtype=jnp.float32)

    # Banded bf16 weights built once, outside the per-call forward.
    w1b, w2b = prepare_banded_weights(w1, w2, H, W)

    out = jax.block_until_ready(residual_block_forward(x, w1b, w2b))
    ref = jax.block_until_ready(ref_forward(x, w1, w2))
    assert out.shape == (N, D, H, W, C)
    # bf16 weights / matmul LHS (f32 accumulate) => looser tolerance vs the f32 reference.
    assert jnp.allclose(out, ref, atol=5e-2, rtol=5e-2), (
        f"mismatch vs JAX reference, max abs err = {jnp.max(jnp.abs(out - ref))}")

    print("KERNEL_OK")
</pallas_src>

<mosaic_0001>
module attributes {stable_mosaic.version = 11 : i64} {
  func.func @resblock_kernel(%arg0: i32, %arg1: memref<2x8x512xf32, #tpu.memory_space<vmem>>, %arg2: memref<1536x512xbf16, #tpu.memory_space<vmem>>, %arg3: memref<1536x512xbf16, #tpu.memory_space<vmem>>, %arg4: memref<2x8x512xf32, #tpu.memory_space<vmem>>) attributes {dimension_semantics = [#tpu.dimension_semantics<parallel>], iteration_bounds = array<i64: 1>, scalar_prefetch = 0 : i64, scratch_operands = 0 : i64, tpu.core_type = #tpu.core_type<tc>, window_params = [{transform_indices = @transform_0, window_bounds = array<i64: 2, 8, 512>}, {pipeline_mode = #tpu.pipeline_mode<synchronous>, transform_indices = @transform_1, window_bounds = array<i64: 1536, 512>}, {pipeline_mode = #tpu.pipeline_mode<synchronous>, transform_indices = @transform_2, window_bounds = array<i64: 1536, 512>}, {transform_indices = @transform_3, window_bounds = array<i64: 2, 8, 512>}]} {
    %c0 = arith.constant 0 : index
    %c0_0 = arith.constant 0 : index
    %c0_1 = arith.constant 0 : index
    %0 = vector.load %arg1[%c0, %c0_0, %c0_1] : memref<2x8x512xf32, #tpu.memory_space<vmem>>, vector<2x8x512xf32>
    %1 = vector.shape_cast %0 : vector<2x8x512xf32> to vector<16x512xf32>
    %2 = tpu.iota {dimensions = array<i32: 0>} : vector<16x512xi32>
    %c8_i32 = arith.constant 8 : i32
    %c0_i32 = arith.constant 0 : i32
    %3 = arith.cmpi eq, %c8_i32, %c0_i32 : i32
    %c1_i32 = arith.constant 1 : i32
    %4 = arith.select %3, %c1_i32, %c8_i32 : i32
    %5 = vector.broadcast %4 : i32 to vector<16x512xi32>
    %6 = arith.remsi %2, %5 : vector<16x512xi32>
    %c0_i32_2 = arith.constant 0 : i32
    %7 = vector.broadcast %c0_i32_2 : i32 to vector<16x512xi32>
    %8 = arith.cmpi ne, %6, %7 : vector<16x512xi32>
    %c0_i32_3 = arith.constant 0 : i32
    %9 = vector.broadcast %c0_i32_3 : i32 to vector<16x512xi32>
    %10 = arith.cmpi slt, %6, %9 : vector<16x512xi32>
    %c0_i32_4 = arith.constant 0 : i32
    %11 = arith.cmpi slt, %4, %c0_i32_4 : i32
    %12 = vector.broadcast %11 : i1 to vector<16x512xi1>
    %13 = vector.broadcast %12 : vector<16x512xi1> to vector<16x512xi1>
    %14 = arith.xori %10, %13 : vector<16x512xi1>
    %15 = arith.andi %14, %8 : vector<16x512xi1>
    %16 = vector.broadcast %4 : i32 to vector<16x512xi32>
    %17 = arith.addi %6, %16 : vector<16x512xi32>
    %18 = arith.select %15, %17, %6 : vector<16x512xi1>, vector<16x512xi32>
    %c0_i32_5 = arith.constant 0 : i32
    %19 = vector.broadcast %c0_i32_5 : i32 to vector<16x512xi32>
    %20 = arith.cmpi eq, %18, %19 : vector<16x512xi32>
    %c7_i32 = arith.constant 7 : i32
    %21 = vector.broadcast %c7_i32 : i32 to vector<16x512xi32>
    %22 = arith.cmpi eq, %18, %21 : vector<16x512xi32>
    %c1_i32_6 = arith.constant 1 : i32
    %23 = tpu.dynamic_rotate %1 by %c1_i32_6 dim 0 : vector<16x512xf32>, i32 -> vector<16x512xf32>
    %cst = arith.constant 0.000000e+00 : f32
    %24 = vector.broadcast %cst : f32 to vector<16x512xf32>
    %25 = arith.select %20, %24, %23 : vector<16x512xi1>, vector<16x512xf32>
    %c15_i32 = arith.constant 15 : i32
    %26 = tpu.dynamic_rotate %1 by %c15_i32 dim 0 : vector<16x512xf32>, i32 -> vector<16x512xf32>
    %cst_7 = arith.constant 0.000000e+00 : f32
    %27 = vector.broadcast %cst_7 : f32 to vector<16x512xf32>
    %28 = arith.select %22, %27, %26 : vector<16x512xi1>, vector<16x512xf32>
    %29 = tpu.concatenate %25, %1, %28 in 1 : vector<16x512xf32>, vector<16x512xf32>, vector<16x512xf32> -> vector<16x1536xf32>
    %30 = arith.truncf %29 : vector<16x1536xf32> to vector<16x1536xbf16>
    %c0_8 = arith.constant 0 : index
    %c0_9 = arith.constant 0 : index
    %31 = vector.load %arg2[%c0_8, %c0_9] : memref<1536x512xbf16, #tpu.memory_space<vmem>>, vector<1536x512xbf16>
    %cst_10 = arith.constant dense<0.000000e+00> : vector<16x512xf32>
    %32 = tpu.matmul %30, %31, %cst_10 {dimension_numbers = #tpu.dot_dimension_numbers<[1], [0], [0], [1], [0, 0, 1, 1], [], []>} : vector<16x1536xbf16>, vector<1536x512xbf16>, vector<16x512xf32> -> vector<16x512xf32>
    %cst_11 = arith.constant 0.000000e+00 : f32
    %33 = vector.broadcast %cst_11 : f32 to vector<16x512xf32>
    %34 = arith.maximumf %32, %33 : vector<16x512xf32>
    %c1_i32_12 = arith.constant 1 : i32
    %35 = tpu.dynamic_rotate %34 by %c1_i32_12 dim 0 : vector<16x512xf32>, i32 -> vector<16x512xf32>
    %cst_13 = arith.constant 0.000000e+00 : f32
    %36 = vector.broadcast %cst_13 : f32 to vector<16x512xf32>
    %37 = arith.select %20, %36, %35 : vector<16x512xi1>, vector<16x512xf32>
    %c15_i32_14 = arith.constant 15 : i32
    %38 = tpu.dynamic_rotate %34 by %c15_i32_14 dim 0 : vector<16x512xf32>, i32 -> vector<16x512xf32>
    %cst_15 = arith.constant 0.000000e+00 : f32
    %39 = vector.broadcast %cst_15 : f32 to vector<16x512xf32>
    %40 = arith.select %22, %39, %38 : vector<16x512xi1>, vector<16x512xf32>
    %41 = tpu.concatenate %37, %34, %40 in 1 : vector<16x512xf32>, vector<16x512xf32>, vector<16x512xf32> -> vector<16x1536xf32>
    %42 = arith.truncf %41 : vector<16x1536xf32> to vector<16x1536xbf16>
    %c0_16 = arith.constant 0 : index
    %c0_17 = arith.constant 0 : index
    %43 = vector.load %arg3[%c0_16, %c0_17] : memref<1536x512xbf16, #tpu.memory_space<vmem>>, vector<1536x512xbf16>
    %cst_18 = arith.constant dense<0.000000e+00> : vector<16x512xf32>
    %44 = tpu.matmul %42, %43, %cst_18 {dimension_numbers = #tpu.dot_dimension_numbers<[1], [0], [0], [1], [0, 0, 1, 1], [], []>} : vector<16x1536xbf16>, vector<1536x512xbf16>, vector<16x512xf32> -> vector<16x512xf32>
    %45 = arith.addf %44, %1 : vector<16x512xf32>
    %cst_19 = arith.constant 0.000000e+00 : f32
    %46 = vector.broadcast %cst_19 : f32 to vector<16x512xf32>
    %47 = arith.maximumf %45, %46 : vector<16x512xf32>
    %48 = vector.shape_cast %47 : vector<16x512xf32> to vector<2x8x512xf32>
    %c0_20 = arith.constant 0 : index
    %c0_21 = arith.constant 0 : index
    %c0_22 = arith.constant 0 : index
    %49 = vector.load %arg4[%c0_20, %c0_21, %c0_22] : memref<2x8x512xf32, #tpu.memory_space<vmem>>, vector<2x8x512xf32>
    tpu.vector_store %arg4[%c0_20, %c0_21, %c0_22], %48 {strides = array<i32>} : memref<2x8x512xf32, #tpu.memory_space<vmem>>, vector<2x8x512xf32>,
    return
  }
  func.func @transform_0(%arg0: i32) -> (i32, i32, i32) {
    %c0_i32 = arith.constant 0 : i32
    %c0_i32_0 = arith.constant 0 : i32
    %c0_i32_1 = arith.constant 0 : i32
    return %arg0, %c0_i32, %c0_i32_0 : i32, i32, i32
  }
  func.func @transform_1(%arg0: i32) -> (i32, i32) {
    %c0_i32 = arith.constant 0 : i32
    %c0_i32_0 = arith.constant 0 : i32
    %c0_i32_1 = arith.constant 0 : i32
    return %c0_i32, %c0_i32_0 : i32, i32
  }
  func.func @transform_2(%arg0: i32) -> (i32, i32) {
    %c0_i32 = arith.constant 0 : i32
    %c0_i32_0 = arith.constant 0 : i32
    %c0_i32_1 = arith.constant 0 : i32
    return %c0_i32, %c0_i32_0 : i32, i32
  }
  func.func @transform_3(%arg0: i32) -> (i32, i32, i32) {
    %c0_i32 = arith.constant 0 : i32
    %c0_i32_0 = arith.constant 0 : i32
    %c0_i32_1 = arith.constant 0 : i32
    return %arg0, %c0_i32, %c0_i32_0 : i32, i32, i32
  }
}

</mosaic_0001>

<llo_original>
// kernel: residual_block_forward.1
$region0: #{residual_block_forward.1}
  #allocation0 [shape = 'u32[]', space=smem, size = 0x4, offset = 0x4, fixed_abs, tag = 'smem constant byte address 0x4 - core index']
  #allocation1 [shape = 'u32[144,128]{1,0:T(1,128)}', space=vmem, size = 0x12000, scoped, tag = 'internal scratch']
  %s0 = inlined_call_operand.vmem [shape: f32[2,8,512], index: 0, kind: input, shape index: {}]
  %s1 = inlined_call_operand.hbm [shape: bf16[1536,512], index: 1, kind: input, shape index: {}]
  %s2 = inlined_call_operand.hbm [shape: bf16[1536,512], index: 2, kind: input, shape index: {}]
  %s3 = inlined_call_operand.vmem [shape: f32[2,8,512], index: 3, kind: output, shape index: {}]
  %s4 = sld [smem:[#allocation0]]
  $region30: #{residual_block_forward.1} parent=0
    _
  %s6 = ssub.s32 1, %s4
  %s7 = scalar_select 0, %s6, %s4
  $region1: #{residual_block_forward.1} parent=0
    #allocation2 [shape = 'u8[1572864]{0}', space=vmem, size = 0x180000, scoped, tag = 'input window, operand 1, single buffered']
    #allocation3 [shape = 's32[1]{0}', space=sflag, size = 0x4, scoped, tag = 'scoped memory for residual_block_forward.1']
    #allocation4 [shape = 'u8[1572864]{0}', space=vmem, size = 0x180000, scoped, tag = 'input window, operand 2, single buffered']
    #allocation5 [shape = 's32[1]{0}', space=sflag, size = 0x4, scoped, tag = 'scoped memory for residual_block_forward.1']
    %8 = vsyncpa [#allocation3], 0
    %9 = vsyncpa [#allocation5], 0
    // Predicated region
    $region2: #{residual_block_forward.1} parent=1 // pred_check
      _
    $region3: #{residual_block_forward.1} parent=1 // pred_check_branch
      %11 = sbr.rel (0) target = $region5
    $region4: #{residual_block_forward.1} parent=1 // pred_region
      _
    $region5: #{residual_block_forward.1} parent=1 // pred_fallthru
      _
    // Predicated region
    $region6: #{residual_block_forward.1} parent=1 // pred_check
      _
    $region7: #{residual_block_forward.1} parent=1 // pred_check_branch
      %13 = sbr.rel (0) target = $region9
    $region8: #{residual_block_forward.1} parent=1 // pred_region
      %s15 = ssub.s32 49152, 49152
      %16 = vsyncadd [#allocation3], %s15
      %s17 = sshll.u32 [#allocation2], 4
      %s18 = int_to_ptr.vmem [resolvable:$true] %s17
      %23 = dma.hbm_to_vmem [thread:$0]  %s1, 49152, %s18, [#allocation3], 256, 256, 16
    $region9: #{residual_block_forward.1} parent=1 // pred_fallthru
      _
    // Predicated region
    $region10: #{residual_block_forward.1} parent=1 // pred_check
      _
    $region11: #{residual_block_forward.1} parent=1 // pred_check_branch
      %25 = sbr.rel (0) target = $region13
    $region12: #{residual_block_forward.1} parent=1 // pred_region
      %s27 = ssub.s32 49152, 49152
      %28 = vsyncadd [#allocation5], %s27
      %s29 = sshll.u32 [#allocation4], 4
      %s30 = int_to_ptr.vmem [resolvable:$true] %s29
      %35 = dma.hbm_to_vmem [thread:$0]  %s2, 49152, %s30, [#allocation5], 256, 256, 16
    $region13: #{residual_block_forward.1} parent=1 // pred_fallthru
      _
    // Predicated region
    $region14: #{residual_block_forward.1} parent=1 // pred_check
      _
    $region15: #{residual_block_forward.1} parent=1 // pred_check_branch
      %37 = sbr.rel (0) target = $region17
    $region16: #{residual_block_forward.1} parent=1 // pred_region
      %38 = dma.done [#allocation3], 49152
    $region17: #{residual_block_forward.1} parent=1 // pred_fallthru
      _
    // Predicated region
    $region18: #{residual_block_forward.1} parent=1 // pred_check
      _
    $region19: #{residual_block_forward.1} parent=1 // pred_check_branch
      %40 = sbr.rel (0) target = $region21
    $region20: #{residual_block_forward.1} parent=1 // pred_region
      %41 = dma.done [#allocation5], 49152
    $region21: #{residual_block_forward.1} parent=1 // pred_fallthru
      _
    %v42 = vld [vmem:[%s0] sm:$0xff]
    %v43 = vld [vmem:[%s0 + $0x8] sm:$0xff]
    %v44 = vld [vmem:[%s0 + $0x10] sm:$0xff]
    %v45 = vld [vmem:[%s0 + $0x18] sm:$0xff]
    %v46 = vld [vmem:[%s0 + $0x20] sm:$0xff]
    %v47 = vld [vmem:[%s0 + $0x28] sm:$0xff]
    %v48 = vld [vmem:[%s0 + $0x30] sm:$0xff]
    %v49 = vld [vmem:[%s0 + $0x38] sm:$0xff]
    %v50 = vlaneseq
    %v51 = vshrl.u32 %v50, 7
    %v52 = vadd.s32 %v51, 8
    %vm53 = vcmp.lt.s32.totalorder %v51, 0
    %v54 = vsub.s32 0, %v51
    %v55 = vsel %vm53, %v54, %v51
    %v56 = vshrl.u32 %v55, 3
    %v57 = vand.u32 %v55, 7
    %v58 = vsub.s32 0, %v57
    %v59 = vsel %vm53, %v58, %v57
    %vm60 = vcmp.lt.s32.totalorder %v52, 0
    %v61 = vsub.s32 0, %v52
    %v62 = vsel %vm60, %v61, %v52
    %v63 = vshrl.u32 %v62, 3
    %v64 = vand.u32 %v62, 7
    %v65 = vsub.s32 0, %v64
    %v66 = vsel %vm60, %v65, %v64
    %vm67 = vcmp.ne.s32.totalorder %v59, 0
    %vm68 = vcmp.ne.s32.totalorder %v66, 0
    %vm69 = vcmp.lt.s32.totalorder %v59, 0
    %vm70 = vcmp.lt.s32.totalorder %v66, 0
    %vm71 = vmand %vm69, %vm67
    %vm72 = vmand %vm70, %vm68
    %v73 = vadd.s32 %v59, 8
    %v74 = vadd.s32 %v66, 8
    %v75 = vsel %vm71, %v73, %v59
    %v76 = vsel %vm72, %v74, %v66
    %vm77 = vcmp.eq.s32.totalorder %v75, 0
    %vm78 = vcmp.eq.s32.totalorder %v76, 0
    %vm79 = vcmp.eq.s32.totalorder %v75, 7
    %vm80 = vcmp.eq.s32.totalorder %v76, 7
    %v81 = vrot.slane %v42, 7
    %v82 = vrot.slane %v43, 7
    %v83 = vrot.slane %v44, 7
    %v84 = vrot.slane %v45, 7
    %v85 = vrot.slane %v46, 7
    %v86 = vrot.slane %v47, 7
    %v87 = vrot.slane %v48, 7
    %v88 = vrot.slane %v49, 7
    %vm89 = vcmp.lt.s32.totalorder %v51, 1
    %v90 = vsel %vm89, %v81, %v85
    %v91 = vsel %vm89, %v82, %v86
    %v92 = vsel %vm89, %v83, %v87
    %v93 = vsel %vm89, %v84, %v88
    %v94 = vsel %vm89, %v85, %v81
    %v95 = vsel %vm89, %v86, %v82
    %v96 = vsel %vm89, %v87, %v83
    %v97 = vsel %vm89, %v88, %v84
    %v98 = vsel %vm77, 0.0, %v94
    %v99 = vsel %vm77, 0.0, %v95
    %v100 = vsel %vm77, 0.0, %v96
    %v101 = vsel %vm77, 0.0, %v97
    %v102 = vsel %vm78, 0.0, %v90
    %v103 = vsel %vm78, 0.0, %v91
    %v104 = vsel %vm78, 0.0, %v92
    %v105 = vsel %vm78, 0.0, %v93
    %v106 = vrot.slane %v42, 1
    %v107 = vrot.slane %v43, 1
    %v108 = vrot.slane %v44, 1
    %v109 = vrot.slane %v45, 1
    %v110 = vrot.slane %v46, 1
    %v111 = vrot.slane %v47, 1
    %v112 = vrot.slane %v48, 1
    %v113 = vrot.slane %v49, 1
    %vm114 = vcmp.lt.s32.totalorder %v51, 7
    %v115 = vsel %vm114, %v106, %v110
    %v116 = vsel %vm114, %v107, %v111
    %v117 = vsel %vm114, %v108, %v112
    %v118 = vsel %vm114, %v109, %v113
    %v119 = vsel %vm114, %v110, %v106
    %v120 = vsel %vm114, %v111, %v107
    %v121 = vsel %vm114, %v112, %v108
    %v122 = vsel %vm114, %v113, %v109
    %v123 = vsel %vm79, 0.0, %v115
    %v124 = vsel %vm79, 0.0, %v116
    %v125 = vsel %vm79, 0.0, %v117
    %v126 = vsel %vm79, 0.0, %v118
    %v127 = vsel %vm80, 0.0, %v119
    %v128 = vsel %vm80, 0.0, %v120
    %v129 = vsel %vm80, 0.0, %v121
    %v130 = vsel %vm80, 0.0, %v122
    %v131 = vpack.c.bf16 %v102, %v98
    %v132 = vpack.c.bf16 %v103, %v99
    %v133 = vpack.c.bf16 %v104, %v100
    %v134 = vpack.c.bf16 %v105, %v101
    %v135 = vpack.c.bf16 %v46, %v42
    %v136 = vpack.c.bf16 %v47, %v43
    %v137 = vpack.c.bf16 %v48, %v44
    %v138 = vpack.c.bf16 %v49, %v45
    %v139 = vpack.c.bf16 %v127, %v123
    %v140 = vpack.c.bf16 %v128, %v124
    %v141 = vpack.c.bf16 %v129, %v125
    %v142 = vpack.c.bf16 %v130, %v126
    %v143 = vld [vmem:[#allocation2] sm:$0xff]
    %v144 = vld [vmem:[#allocation2 + $0x8] sm:$0xff]
    %v145 = vld [vmem:[#allocation2 + $0x10] sm:$0xff]
    %v146 = vld [vmem:[#allocation2 + $0x18] sm:$0xff]
    %v147 = vld [vmem:[#allocation2 + $0x20] sm:$0xff]
    %v148 = vld [vmem:[#allocation2 + $0x28] sm:$0xff]
    %v149 = vld [vmem:[#allocation2 + $0x30] sm:$0xff]
    %v150 = vld [vmem:[#allocation2 + $0x38] sm:$0xff]
    %v151 = vld [vmem:[#allocation2 + $0x40] sm:$0xff]
    %v152 = vld [vmem:[#allocation2 + $0x48] sm:$0xff]
    %v153 = vld [vmem:[#allocation2 + $0x50] sm:$0xff]
    %v154 = vld [vmem:[#allocation2 + $0x58] sm:$0xff]
    %v155 = vld [vmem:[#allocation2 + $0x60] sm:$0xff]
    %v156 = vld [vmem:[#allocation2 + $0x68] sm:$0xff]
    %v157 = vld [vmem:[#allocation2 + $0x70] sm:$0xff]
    %v158 = vld [vmem:[#allocation2 + $0x78] sm:$0xff]
    %v159 = vld [vmem:[#allocation2 + $0x80] sm:$0xff]
    %v160 = vld [vmem:[#allocation2 + $0x88] sm:$0xff]
    %v161 = vld [vmem:[#allocation2 + $0x90] sm:$0xff]
    %v162 = vld [vmem:[#allocation2 + $0x98] sm:$0xff]
    %v163 = vld [vmem:[#allocation2 + $0xa0] sm:$0xff]
    %v164 = vld [vmem:[#allocation2 + $0xa8] sm:$0xff]
    %v165 = vld [vmem:[#allocation2 + $0xb0] sm:$0xff]
    %v166 = vld [vmem:[#allocation2 + $0xb8] sm:$0xff]
    %v167 = vld [vmem:[#allocation2 + $0xc0] sm:$0xff]
    %v168 = vld [vmem:[#allocation2 + $0xc8] sm:$0xff]
    %v169 = vld [vmem:[#allocation2 + $0xd0] sm:$0xff]
    %v170 = vld [vmem:[#allocation2 + $0xd8] sm:$0xff]
    %v171 = vld [vmem:[#allocation2 + $0xe0] sm:$0xff]
    %v172 = vld [vmem:[#allocation2 + $0xe8] sm:$0xff]
    %v173 = vld [vmem:[#allocation2 + $0xf0] sm:$0xff]
    %v174 = vld [vmem:[#allocation2 + $0xf8] sm:$0xff]
    %v175 = vld [vmem:[#allocation2 + $0x100] sm:$0xff]
    %v176 = vld [vmem:[#allocation2 + $0x108] sm:$0xff]
    %v177 = vld [vmem:[#allocation2 + $0x110] sm:$0xff]
    %v178 = vld [vmem:[#allocation2 + $0x118] sm:$0xff]
    %v179 = vld [vmem:[#allocation2 + $0x120] sm:$0xff]
    %v180 = vld [vmem:[#allocation2 + $0x128] sm:$0xff]
    %v181 = vld [vmem:[#allocation2 + $0x130] sm:$0xff]
    %v182 = vld [vmem:[#allocation2 + $0x138] sm:$0xff]
    %v183 = vld [vmem:[#allocation2 + $0x140] sm:$0xff]
    %v184 = vld [vmem:[#allocation2 + $0x148] sm:$0xff]
    %v185 = vld [vmem:[#allocation2 + $0x150] sm:$0xff]
    %v186 = vld [vmem:[#allocation2 + $0x158] sm:$0xff]
    %v187 = vld [vmem:[#allocation2 + $0x160] sm:$0xff]
    %v188 = vld [vmem:[#allocation2 + $0x168] sm:$0xff]
    %v189 = vld [vmem:[#allocation2 + $0x170] sm:$0xff]
    %v190 = vld [vmem:[#allocation2 + $0x178] sm:$0xff]
    %v191 = vld [vmem:[#allocation2 + $0x180] sm:$0xff]
    %v192 = vld [vmem:[#allocation2 + $0x188] sm:$0xff]
    %v193 = vld [vmem:[#allocation2 + $0x190] sm:$0xff]
    %v194 = vld [vmem:[#allocation2 + $0x198] sm:$0xff]
    %v195 = vld [vmem:[#allocation2 + $0x1a0] sm:$0xff]
    %v196 = vld [vmem:[#allocation2 + $0x1a8] sm:$0xff]
    %v197 = vld [vmem:[#allocation2 + $0x1b0] sm:$0xff]
    %v198 = vld [vmem:[#allocation2 + $0x1b8] sm:$0xff]
    %v199 = vld [vmem:[#allocation2 + $0x1c0] sm:$0xff]
    %v200 = vld [vmem:[#allocation2 + $0x1c8] sm:$0xff]
    %v201 = vld [vmem:[#allocation2 + $0x1d0] sm:$0xff]
    %v202 = vld [vmem:[#allocation2 + $0x1d8] sm:$0xff]
    %v203 = vld [vmem:[#allocation2 + $0x1e0] sm:$0xff]
    %v204 = vld [vmem:[#allocation2 + $0x1e8] sm:$0xff]
    %v205 = vld [vmem:[#allocation2 + $0x1f0] sm:$0xff]
    %v206 = vld [vmem:[#allocation2 + $0x1f8] sm:$0xff]
    %v207 = vld [vmem:[#allocation2 + $0x200] sm:$0xff]
    %v208 = vld [vmem:[#allocation2 + $0x208] sm:$0xff]
    %v209 = vld [vmem:[#allocation2 + $0x210] sm:$0xff]
    %v210 = vld [vmem:[#allocation2 + $0x218] sm:$0xff]
    %v211 = vld [vmem:[#allocation2 + $0x220] sm:$0xff]
    %v212 = vld [vmem:[#allocation2 + $0x228] sm:$0xff]
    %v213 = vld [vmem:[#allocation2 + $0x230] sm:$0xff]
    %v214 = vld [vmem:[#allocation2 + $0x238] sm:$0xff]
    %v215 = vld [vmem:[#allocation2 + $0x240] sm:$0xff]
    %v216 = vld [vmem:[#allocation2 + $0x248] sm:$0xff]
    %v217 = vld [vmem:[#allocation2 + $0x250] sm:$0xff]
    %v218 = vld [vmem:[#allocation2 + $0x258] sm:$0xff]
    %v219 = vld [vmem:[#allocation2 + $0x260] sm:$0xff]
    %v220 = vld [vmem:[#allocation2 + $0x268] sm:$0xff]
    %v221 = vld [vmem:[#allocation2 + $0x270] sm:$0xff]
    %v222 = vld [vmem:[#allocation2 + $0x278] sm:$0xff]
    %v223 = vld [vmem:[#allocation2 + $0x280] sm:$0xff]
    %v224 = vld [vmem:[#allocation2 + $0x288] sm:$0xff]
    %v225 = vld [vmem:[#allocation2 + $0x290] sm:$0xff]
    %v226 = vld [vmem:[#allocation2 + $0x298] sm:$0xff]
    %v227 = vld [vmem:[#allocation2 + $0x2a0] sm:$0xff]
    %v228 = vld [vmem:[#allocation2 + $0x2a8] sm:$0xff]
    %v229 = vld [vmem:[#allocation2 + $0x2b0] sm:$0xff]
    %v230 = vld [vmem:[#allocation2 + $0x2b8] sm:$0xff]
    %v231 = vld [vmem:[#allocation2 + $0x2c0] sm:$0xff]
    %v232 = vld [vmem:[#allocation2 + $0x2c8] sm:$0xff]
    %v233 = vld [vmem:[#allocation2 + $0x2d0] sm:$0xff]
    %v234 = vld [vmem:[#allocation2 + $0x2d8] sm:$0xff]
    %v235 = vld [vmem:[#allocation2 + $0x2e0] sm:$0xff]
    %v236 = vld [vmem:[#allocation2 + $0x2e8] sm:$0xff]
    %v237 = vld [vmem:[#allocation2 + $0x2f0] sm:$0xff]
    %v238 = vld [vmem:[#allocation2 + $0x2f8] sm:$0xff]
    %v239 = vld [vmem:[#allocation2 + $0x300] sm:$0xff]
    %v240 = vld [vmem:[#allocation2 + $0x308] sm:$0xff]
    %v241 = vld [vmem:[#allocation2 + $0x310] sm:$0xff]
    %v242 = vld [vmem:[#allocation2 + $0x318] sm:$0xff]
    %v243 = vld [vmem:[#allocation2 + $0x320] sm:$0xff]
    %v244 = vld [vmem:[#allocation2 + $0x328] sm:$0xff]
    %v245 = vld [vmem:[#allocation2 + $0x330] sm:$0xff]
    %v246 = vld [vmem:[#allocation2 + $0x338] sm:$0xff]
    %v247 = vld [vmem:[#allocation2 + $0x340] sm:$0xff]
    %v248 = vld [vmem:[#allocation2 + $0x348] sm:$0xff]
    %v249 = vld [vmem:[#allocation2 + $0x350] sm:$0xff]
    %v250 = vld [vmem:[#allocation2 + $0x358] sm:$0xff]
    %v251 = vld [vmem:[#allocation2 + $0x360] sm:$0xff]
    %v252 = vld [vmem:[#allocation2 + $0x368] sm:$0xff]
    %v253 = vld [vmem:[#allocation2 + $0x370] sm:$0xff]
    %v254 = vld [vmem:[#allocation2 + $0x378] sm:$0xff]
    %v255 = vld [vmem:[#allocation2 + $0x380] sm:$0xff]
    %v256 = vld [vmem:[#allocation2 + $0x388] sm:$0xff]
    %v257 = vld [vmem:[#allocation2 + $0x390] sm:$0xff]
    %v258 = vld [vmem:[#allocation2 + $0x398] sm:$0xff]
    %v259 = vld [vmem:[#allocation2 + $0x3a0] sm:$0xff]
    %v260 = vld [vmem:[#allocation2 + $0x3a8] sm:$0xff]
    %v261 = vld [vmem:[#allocation2 + $0x3b0] sm:$0xff]
    %v262 = vld [vmem:[#allocation2 + $0x3b8] sm:$0xff]
    %v263 = vld [vmem:[#allocation2 + $0x3c0] sm:$0xff]
    %v264 = vld [vmem:[#allocation2 + $0x3c8] sm:$0xff]
    %v265 = vld [vmem:[#allocation2 + $0x3d0] sm:$0xff]
    %v266 = vld [vmem:[#allocation2 + $0x3d8] sm:$0xff]
    %v267 = vld [vmem:[#allocation2 + $0x3e0] sm:$0xff]
    %v268 = vld [vmem:[#allocation2 + $0x3e8] sm:$0xff]
    %v269 = vld [vmem:[#allocation2 + $0x3f0] sm:$0xff]
    %v270 = vld [vmem:[#allocation2 + $0x3f8] sm:$0xff]
    %v271 = vld [vmem:[#allocation2 + $0x400] sm:$0xff]
    %v272 = vld [vmem:[#allocation2 + $0x408] sm:$0xff]
    %v273 = vld [vmem:[#allocation2 + $0x410] sm:$0xff]
    %v274 = vld [vmem:[#allocation2 + $0x418] sm:$0xff]
    %v275 = vld [vmem:[#allocation2 + $0x420] sm:$0xff]
    %v276 = vld [vmem:[#allocation2 + $0x428] sm:$0xff]
    %v277 = vld [vmem:[#allocation2 + $0x430] sm:$0xff]
    %v278 = vld [vmem:[#allocation2 + $0x438] sm:$0xff]
    %v279 = vld [vmem:[#allocation2 + $0x440] sm:$0xff]
    %v280 = vld [vmem:[#allocation2 + $0x448] sm:$0xff]
    %v281 = vld [vmem:[#allocation2 + $0x450] sm:$0xff]
    %v282 = vld [vmem:[#allocation2 + $0x458] sm:$0xff]
    %v283 = vld [vmem:[#allocation2 + $0x460] sm:$0xff]
    %v284 = vld [vmem:[#allocation2 + $0x468] sm:$0xff]
    %v285 = vld [vmem:[#allocation2 + $0x470] sm:$0xff]
    %v286 = vld [vmem:[#allocation2 + $0x478] sm:$0xff]
    %v287 = vld [vmem:[#allocation2 + $0x480] sm:$0xff]
    %v288 = vld [vmem:[#allocation2 + $0x488] sm:$0xff]
    %v289 = vld [vmem:[#allocation2 + $0x490] sm:$0xff]
    %v290 = vld [vmem:[#allocation2 + $0x498] sm:$0xff]
    %v291 = vld [vmem:[#allocation2 + $0x4a0] sm:$0xff]
    %v292 = vld [vmem:[#allocation2 + $0x4a8] sm:$0xff]
    %v293 = vld [vmem:[#allocation2 + $0x4b0] sm:$0xff]
    %v294 = vld [vmem:[#allocation2 + $0x4b8] sm:$0xff]
    %v295 = vld [vmem:[#allocation2 + $0x4c0] sm:$0xff]
    %v296 = vld [vmem:[#allocation2 + $0x4c8] sm:$0xff]
    %v297 = vld [vmem:[#allocation2 + $0x4d0] sm:$0xff]
    %v298 = vld [vmem:[#allocation2 + $0x4d8] sm:$0xff]
    %v299 = vld [vmem:[#allocation2 + $0x4e0] sm:$0xff]
    %v300 = vld [vmem:[#allocation2 + $0x4e8] sm:$0xff]
    %v301 = vld [vmem:[#allocation2 + $0x4f0] sm:$0xff]
    %v302 = vld [vmem:[#allocation2 + $0x4f8] sm:$0xff]
    %v303 = vld [vmem:[#allocation2 + $0x500] sm:$0xff]
    %v304 = vld [vmem:[#allocation2 + $0x508] sm:$0xff]
    %v305 = vld [vmem:[#allocation2 + $0x510] sm:$0xff]
    %v306 = vld [vmem:[#allocation2 + $0x518] sm:$0xff]
    %v307 = vld [vmem:[#allocation2 + $0x520] sm:$0xff]
    %v308 = vld [vmem:[#allocation2 + $0x528] sm:$0xff]
    %v309 = vld [vmem:[#allocation2 + $0x530] sm:$0xff]
    %v310 = vld [vmem:[#allocation2 + $0x538] sm:$0xff]
    %v311 = vld [vmem:[#allocation2 + $0x540] sm:$0xff]
    %v312 = vld [vmem:[#allocation2 + $0x548] sm:$0xff]
    %v313 = vld [vmem:[#allocation2 + $0x550] sm:$0xff]
    %v314 = vld [vmem:[#allocation2 + $0x558] sm:$0xff]
    %v315 = vld [vmem:[#allocation2 + $0x560] sm:$0xff]
    %v316 = vld [vmem:[#allocation2 + $0x568] sm:$0xff]
    %v317 = vld [vmem:[#allocation2 + $0x570] sm:$0xff]
    %v318 = vld [vmem:[#allocation2 + $0x578] sm:$0xff]
    %v319 = vld [vmem:[#allocation2 + $0x580] sm:$0xff]
    %v320 = vld [vmem:[#allocation2 + $0x588] sm:$0xff]
    %v321 = vld [vmem:[#allocation2 + $0x590] sm:$0xff]
    %v322 = vld [vmem:[#allocation2 + $0x598] sm:$0xff]
    %v323 = vld [vmem:[#allocation2 + $0x5a0] sm:$0xff]
    %v324 = vld [vmem:[#allocation2 + $0x5a8] sm:$0xff]
    %v325 = vld [vmem:[#allocation2 + $0x5b0] sm:$0xff]
    %v326 = vld [vmem:[#allocation2 + $0x5b8] sm:$0xff]
    %v327 = vld [vmem:[#allocation2 + $0x5c0] sm:$0xff]
    %v328 = vld [vmem:[#allocation2 + $0x5c8] sm:$0xff]
    %v329 = vld [vmem:[#allocation2 + $0x5d0] sm:$0xff]
    %v330 = vld [vmem:[#allocation2 + $0x5d8] sm:$0xff]
    %v331 = vld [vmem:[#allocation2 + $0x5e0] sm:$0xff]
    %v332 = vld [vmem:[#allocation2 + $0x5e8] sm:$0xff]
    %v333 = vld [vmem:[#allocation2 + $0x5f0] sm:$0xff]
    %v334 = vld [vmem:[#allocation2 + $0x5f8] sm:$0xff]
    %v335 = vld [vmem:[#allocation2 + $0x600] sm:$0xff]
    %v336 = vld [vmem:[#allocation2 + $0x608] sm:$0xff]
    %v337 = vld [vmem:[#allocation2 + $0x610] sm:$0xff]
    %v338 = vld [vmem:[#allocation2 + $0x618] sm:$0xff]
    %v339 = vld [vmem:[#allocation2 + $0x620] sm:$0xff]
    %v340 = vld [vmem:[#allocation2 + $0x628] sm:$0xff]
    %v341 = vld [vmem:[#allocation2 + $0x630] sm:$0xff]
    %v342 = vld [vmem:[#allocation2 + $0x638] sm:$0xff]
    %v343 = vld [vmem:[#allocation2 + $0x640] sm:$0xff]
    %v344 = vld [vmem:[#allocation2 + $0x648] sm:$0xff]
    %v345 = vld [vmem:[#allocation2 + $0x650] sm:$0xff]
    %v346 = vld [vmem:[#allocation2 + $0x658] sm:$0xff]
    %v347 = vld [vmem:[#allocation2 + $0x660] sm:$0xff]
    %v348 = vld [vmem:[#allocation2 + $0x668] sm:$0xff]
    %v349 = vld [vmem:[#allocation2 + $0x670] sm:$0xff]
    %v350 = vld [vmem:[#allocation2 + $0x678] sm:$0xff]
    %v351 = vld [vmem:[#allocation2 + $0x680] sm:$0xff]
    %v352 = vld [vmem:[#allocation2 + $0x688] sm:$0xff]
    %v353 = vld [vmem:[#allocation2 + $0x690] sm:$0xff]
    %v354 = vld [vmem:[#allocation2 + $0x698] sm:$0xff]
    %v355 = vld [vmem:[#allocation2 + $0x6a0] sm:$0xff]
    %v356 = vld [vmem:[#allocation2 + $0x6a8] sm:$0xff]
    %v357 = vld [vmem:[#allocation2 + $0x6b0] sm:$0xff]
    %v358 = vld [vmem:[#allocation2 + $0x6b8] sm:$0xff]
    %v359 = vld [vmem:[#allocation2 + $0x6c0] sm:$0xff]
    %v360 = vld [vmem:[#allocation2 + $0x6c8] sm:$0xff]
    %v361 = vld [vmem:[#allocation2 + $0x6d0] sm:$0xff]
    %v362 = vld [vmem:[#allocation2 + $0x6d8] sm:$0xff]
    %v363 = vld [vmem:[#allocation2 + $0x6e0] sm:$0xff]
    %v364 = vld [vmem:[#allocation2 + $0x6e8] sm:$0xff]
    %v365 = vld [vmem:[#allocation2 + $0x6f0] sm:$0xff]
    %v366 = vld [vmem:[#allocation2 + $0x6f8] sm:$0xff]
    %v367 = vld [vmem:[#allocation2 + $0x700] sm:$0xff]
    %v368 = vld [vmem:[#allocation2 + $0x708] sm:$0xff]
    %v369 = vld [vmem:[#allocation2 + $0x710] sm:$0xff]
    %v370 = vld [vmem:[#allocation2 + $0x718] sm:$0xff]
    %v371 = vld [vmem:[#allocation2 + $0x720] sm:$0xff]
    %v372 = vld [vmem:[#allocation2 + $0x728] sm:$0xff]
    %v373 = vld [vmem:[#allocation2 + $0x730] sm:$0xff]
    %v374 = vld [vmem:[#allocation2 + $0x738] sm:$0xff]
    %v375 = vld [vmem:[#allocation2 + $0x740] sm:$0xff]
    %v376 = vld [vmem:[#allocation2 + $0x748] sm:$0xff]
    %v377 = vld [vmem:[#allocation2 + $0x750] sm:$0xff]
    %v378 = vld [vmem:[#allocation2 + $0x758] sm:$0xff]
    %v379 = vld [vmem:[#allocation2 + $0x760] sm:$0xff]
    %v380 = vld [vmem:[#allocation2 + $0x768] sm:$0xff]
    %v381 = vld [vmem:[#allocation2 + $0x770] sm:$0xff]
    %v382 = vld [vmem:[#allocation2 + $0x778] sm:$0xff]
    %v383 = vld [vmem:[#allocation2 + $0x780] sm:$0xff]
    %v384 = vld [vmem:[#allocation2 + $0x788] sm:$0xff]
    %v385 = vld [vmem:[#allocation2 + $0x790] sm:$0xff]
    %v386 = vld [vmem:[#allocation2 + $0x798] sm:$0xff]
    %v387 = vld [vmem:[#allocation2 + $0x7a0] sm:$0xff]
    %v388 = vld [vmem:[#allocation2 + $0x7a8] sm:$0xff]
    %v389 = vld [vmem:[#allocation2 + $0x7b0] sm:$0xff]
    %v390 = vld [vmem:[#allocation2 + $0x7b8] sm:$0xff]
    %v391 = vld [vmem:[#allocation2 + $0x7c0] sm:$0xff]
    %v392 = vld [vmem:[#allocation2 + $0x7c8] sm:$0xff]
    %v393 = vld [vmem:[#allocation2 + $0x7d0] sm:$0xff]
    %v394 = vld [vmem:[#allocation2 + $0x7d8] sm:$0xff]
    %v395 = vld [vmem:[#allocation2 + $0x7e0] sm:$0xff]
    %v396 = vld [vmem:[#allocation2 + $0x7e8] sm:$0xff]
    %v397 = vld [vmem:[#allocation2 + $0x7f0] sm:$0xff]
    %v398 = vld [vmem:[#allocation2 + $0x7f8] sm:$0xff]
    %v399 = vld [vmem:[#allocation2 + $0x800] sm:$0xff]
    %v400 = vld [vmem:[#allocation2 + $0x808] sm:$0xff]
    %v401 = vld [vmem:[#allocation2 + $0x810] sm:$0xff]
    %v402 = vld [vmem:[#allocation2 + $0x818] sm:$0xff]
    %v403 = vld [vmem:[#allocation2 + $0x820] sm:$0xff]
    %v404 = vld [vmem:[#allocation2 + $0x828] sm:$0xff]
    %v405 = vld [vmem:[#allocation2 + $0x830] sm:$0xff]
    %v406 = vld [vmem:[#allocation2 + $0x838] sm:$0xff]
    %v407 = vld [vmem:[#allocation2 + $0x840] sm:$0xff]
    %v408 = vld [vmem:[#allocation2 + $0x848] sm:$0xff]
    %v409 = vld [vmem:[#allocation2 + $0x850] sm:$0xff]
    %v410 = vld [vmem:[#allocation2 + $0x858] sm:$0xff]
    %v411 = vld [vmem:[#allocation2 + $0x860] sm:$0xff]
    %v412 = vld [vmem:[#allocation2 + $0x868] sm:$0xff]
    %v413 = vld [vmem:[#allocation2 + $0x870] sm:$0xff]
    %v414 = vld [vmem:[#allocation2 + $0x878] sm:$0xff]
    %v415 = vld [vmem:[#allocation2 + $0x880] sm:$0xff]
    %v416 = vld [vmem:[#allocation2 + $0x888] sm:$0xff]
    %v417 = vld [vmem:[#allocation2 + $0x890] sm:$0xff]
    %v418 = vld [vmem:[#allocation2 + $0x898] sm:$0xff]
    %v419 = vld [vmem:[#allocation2 + $0x8a0] sm:$0xff]
    %v420 = vld [vmem:[#allocation2 + $0x8a8] sm:$0xff]
    %v421 = vld [vmem:[#allocation2 + $0x8b0] sm:$0xff]
    %v422 = vld [vmem:[#allocation2 + $0x8b8] sm:$0xff]
    %v423 = vld [vmem:[#allocation2 + $0x8c0] sm:$0xff]
    %v424 = vld [vmem:[#allocation2 + $0x8c8] sm:$0xff]
    %v425 = vld [vmem:[#allocation2 + $0x8d0] sm:$0xff]
    %v426 = vld [vmem:[#allocation2 + $0x8d8] sm:$0xff]
    %v427 = vld [vmem:[#allocation2 + $0x8e0] sm:$0xff]
    %v428 = vld [vmem:[#allocation2 + $0x8e8] sm:$0xff]
    %v429 = vld [vmem:[#allocation2 + $0x8f0] sm:$0xff]
    %v430 = vld [vmem:[#allocation2 + $0x8f8] sm:$0xff]
    %v431 = vld [vmem:[#allocation2 + $0x900] sm:$0xff]
    %v432 = vld [vmem:[#allocation2 + $0x908] sm:$0xff]
    %v433 = vld [vmem:[#allocation2 + $0x910] sm:$0xff]
    %v434 = vld [vmem:[#allocation2 + $0x918] sm:$0xff]
    %v435 = vld [vmem:[#allocation2 + $0x920] sm:$0xff]
    %v436 = vld [vmem:[#allocation2 + $0x928] sm:$0xff]
    %v437 = vld [vmem:[#allocation2 + $0x930] sm:$0xff]
    %v438 = vld [vmem:[#allocation2 + $0x938] sm:$0xff]
    %v439 = vld [vmem:[#allocation2 + $0x940] sm:$0xff]
    %v440 = vld [vmem:[#allocation2 + $0x948] sm:$0xff]
    %v441 = vld [vmem:[#allocation2 + $0x950] sm:$0xff]
    %v442 = vld [vmem:[#allocation2 + $0x958] sm:$0xff]
    %v443 = vld [vmem:[#allocation2 + $0x960] sm:$0xff]
    %v444 = vld [vmem:[#allocation2 + $0x968] sm:$0xff]
    %v445 = vld [vmem:[#allocation2 + $0x970] sm:$0xff]
    %v446 = vld [vmem:[#allocation2 + $0x978] sm:$0xff]
    %v447 = vld [vmem:[#allocation2 + $0x980] sm:$0xff]
    %v448 = vld [vmem:[#allocation2 + $0x988] sm:$0xff]
    %v449 = vld [vmem:[#allocation2 + $0x990] sm:$0xff]
    %v450 = vld [vmem:[#allocation2 + $0x998] sm:$0xff]
    %v451 = vld [vmem:[#allocation2 + $0x9a0] sm:$0xff]
    %v452 = vld [vmem:[#allocation2 + $0x9a8] sm:$0xff]
    %v453 = vld [vmem:[#allocation2 + $0x9b0] sm:$0xff]
    %v454 = vld [vmem:[#allocation2 + $0x9b8] sm:$0xff]
    %v455 = vld [vmem:[#allocation2 + $0x9c0] sm:$0xff]
    %v456 = vld [vmem:[#allocation2 + $0x9c8] sm:$0xff]
    %v457 = vld [vmem:[#allocation2 + $0x9d0] sm:$0xff]
    %v458 = vld [vmem:[#allocation2 + $0x9d8] sm:$0xff]
    %v459 = vld [vmem:[#allocation2 + $0x9e0] sm:$0xff]
    %v460 = vld [vmem:[#allocation2 + $0x9e8] sm:$0xff]
    %v461 = vld [vmem:[#allocation2 + $0x9f0] sm:$0xff]
    %v462 = vld [vmem:[#allocation2 + $0x9f8] sm:$0xff]
    %v463 = vld [vmem:[#allocation2 + $0xa00] sm:$0xff]
    %v464 = vld [vmem:[#allocation2 + $0xa08] sm:$0xff]
    %v465 = vld [vmem:[#allocation2 + $0xa10] sm:$0xff]
    %v466 = vld [vmem:[#allocation2 + $0xa18] sm:$0xff]
    %v467 = vld [vmem:[#allocation2 + $0xa20] sm:$0xff]
    %v468 = vld [vmem:[#allocation2 + $0xa28] sm:$0xff]
    %v469 = vld [vmem:[#allocation2 + $0xa30] sm:$0xff]
    %v470 = vld [vmem:[#allocation2 + $0xa38] sm:$0xff]
    %v471 = vld [vmem:[#allocation2 + $0xa40] sm:$0xff]
    %v472 = vld [vmem:[#allocation2 + $0xa48] sm:$0xff]
    %v473 = vld [vmem:[#allocation2 + $0xa50] sm:$0xff]
    %v474 = vld [vmem:[#allocation2 + $0xa58] sm:$0xff]
    %v475 = vld [vmem:[#allocation2 + $0xa60] sm:$0xff]
    %v476 = vld [vmem:[#allocation2 + $0xa68] sm:$0xff]
    %v477 = vld [vmem:[#allocation2 + $0xa70] sm:$0xff]
    %v478 = vld [vmem:[#allocation2 + $0xa78] sm:$0xff]
    %v479 = vld [vmem:[#allocation2 + $0xa80] sm:$0xff]
    %v480 = vld [vmem:[#allocation2 + $0xa88] sm:$0xff]
    %v481 = vld [vmem:[#allocation2 + $0xa90] sm:$0xff]
    %v482 = vld [vmem:[#allocation2 + $0xa98] sm:$0xff]
    %v483 = vld [vmem:[#allocation2 + $0xaa0] sm:$0xff]
    %v484 = vld [vmem:[#allocation2 + $0xaa8] sm:$0xff]
    %v485 = vld [vmem:[#allocation2 + $0xab0] sm:$0xff]
    %v486 = vld [vmem:[#allocation2 + $0xab8] sm:$0xff]
    %v487 = vld [vmem:[#allocation2 + $0xac0] sm:$0xff]
    %v488 = vld [vmem:[#allocation2 + $0xac8] sm:$0xff]
    %v489 = vld [vmem:[#allocation2 + $0xad0] sm:$0xff]
    %v490 = vld [vmem:[#allocation2 + $0xad8] sm:$0xff]
    %v491 = vld [vmem:[#allocation2 + $0xae0] sm:$0xff]
    %v492 = vld [vmem:[#allocation2 + $0xae8] sm:$0xff]
    %v493 = vld [vmem:[#allocation2 + $0xaf0] sm:$0xff]
    %v494 = vld [vmem:[#allocation2 + $0xaf8] sm:$0xff]
    %v495 = vld [vmem:[#allocation2 + $0xb00] sm:$0xff]
    %v496 = vld [vmem:[#allocation2 + $0xb08] sm:$0xff]
    %v497 = vld [vmem:[#allocation2 + $0xb10] sm:$0xff]
    %v498 = vld [vmem:[#allocation2 + $0xb18] sm:$0xff]
    %v499 = vld [vmem:[#allocation2 + $0xb20] sm:$0xff]
    %v500 = vld [vmem:[#allocation2 + $0xb28] sm:$0xff]
    %v501 = vld [vmem:[#allocation2 + $0xb30] sm:$0xff]
    %v502 = vld [vmem:[#allocation2 + $0xb38] sm:$0xff]
    %v503 = vld [vmem:[#allocation2 + $0xb40] sm:$0xff]
    %v504 = vld [vmem:[#allocation2 + $0xb48] sm:$0xff]
    %v505 = vld [vmem:[#allocation2 + $0xb50] sm:$0xff]
    %v506 = vld [vmem:[#allocation2 + $0xb58] sm:$0xff]
    %v507 = vld [vmem:[#allocation2 + $0xb60] sm:$0xff]
    %v508 = vld [vmem:[#allocation2 + $0xb68] sm:$0xff]
    %v509 = vld [vmem:[#allocation2 + $0xb70] sm:$0xff]
    %v510 = vld [vmem:[#allocation2 + $0xb78] sm:$0xff]
    %v511 = vld [vmem:[#allocation2 + $0xb80] sm:$0xff]
    %v512 = vld [vmem:[#allocation2 + $0xb88] sm:$0xff]
    %v513 = vld [vmem:[#allocation2 + $0xb90] sm:$0xff]
    %v514 = vld [vmem:[#allocation2 + $0xb98] sm:$0xff]
    %v515 = vld [vmem:[#allocation2 + $0xba0] sm:$0xff]
    %v516 = vld [vmem:[#allocation2 + $0xba8] sm:$0xff]
    %v517 = vld [vmem:[#allocation2 + $0xbb0] sm:$0xff]
    %v518 = vld [vmem:[#allocation2 + $0xbb8] sm:$0xff]
    %v519 = vld [vmem:[#allocation2 + $0xbc0] sm:$0xff]
    %v520 = vld [vmem:[#allocation2 + $0xbc8] sm:$0xff]
    %v521 = vld [vmem:[#allocation2 + $0xbd0] sm:$0xff]
    %v522 = vld [vmem:[#allocation2 + $0xbd8] sm:$0xff]
    %v523 = vld [vmem:[#allocation2 + $0xbe0] sm:$0xff]
    %v524 = vld [vmem:[#allocation2 + $0xbe8] sm:$0xff]
    %v525 = vld [vmem:[#allocation2 + $0xbf0] sm:$0xff]
    %v526 = vld [vmem:[#allocation2 + $0xbf8] sm:$0xff]
    %v911 = vunpack.c.l.b16 %v143
    %v912 = vunpack.c.h.b16 %v143
    %v913 = vunpack.c.l.b16 %v144
    %v914 = vunpack.c.h.b16 %v144
    %v915 = vunpack.c.l.b16 %v145
    %v916 = vunpack.c.h.b16 %v145
    %v917 = vunpack.c.l.b16 %v146
    %v918 = vunpack.c.h.b16 %v146
    %v919 = vunpack.c.l.b16 %v147
    %v920 = vunpack.c.h.b16 %v147
    %v921 = vunpack.c.l.b16 %v148
    %v922 = vunpack.c.h.b16 %v148
    %v923 = vunpack.c.l.b16 %v149
    %v924 = vunpack.c.h.b16 %v149
    %v925 = vunpack.c.l.b16 %v150
    %v926 = vunpack.c.h.b16 %v150
    %v927 = vunpack.c.l.b16 %v151
    %v928 = vunpack.c.h.b16 %v151
    %v929 = vunpack.c.l.b16 %v152
    %v930 = vunpack.c.h.b16 %v152
    %v931 = vunpack.c.l.b16 %v153
    %v932 = vunpack.c.h.b16 %v153
    %v933 = vunpack.c.l.b16 %v154
    %v934 = vunpack.c.h.b16 %v154
    %v935 = vunpack.c.l.b16 %v155
    %v936 = vunpack.c.h.b16 %v155
    %v937 = vunpack.c.l.b16 %v156
    %v938 = vunpack.c.h.b16 %v156
    %v939 = vunpack.c.l.b16 %v157
    %v940 = vunpack.c.h.b16 %v157
    %v941 = vunpack.c.l.b16 %v158
    %v942 = vunpack.c.h.b16 %v158
    %v943 = vunpack.c.l.b16 %v159
    %v944 = vunpack.c.h.b16 %v159
    %v945 = vunpack.c.l.b16 %v160
    %v946 = vunpack.c.h.b16 %v160
    %v947 = vunpack.c.l.b16 %v161
    %v948 = vunpack.c.h.b16 %v161
    %v949 = vunpack.c.l.b16 %v162
    %v950 = vunpack.c.h.b16 %v162
    %v951 = vunpack.c.l.b16 %v163
    %v952 = vunpack.c.h.b16 %v163
    %v953 = vunpack.c.l.b16 %v164
    %v954 = vunpack.c.h.b16 %v164
    %v955 = vunpack.c.l.b16 %v165
    %v956 = vunpack.c.h.b16 %v165
    %v957 = vunpack.c.l.b16 %v166
    %v958 = vunpack.c.h.b16 %v166
    %v959 = vunpack.c.l.b16 %v167
    %v960 = vunpack.c.h.b16 %v167
    %v961 = vunpack.c.l.b16 %v168
    %v962 = vunpack.c.h.b16 %v168
    %v963 = vunpack.c.l.b16 %v169
    %v964 = vunpack.c.h.b16 %v169
    %v965 = vunpack.c.l.b16 %v170
    %v966 = vunpack.c.h.b16 %v170
    %v967 = vunpack.c.l.b16 %v171
    %v968 = vunpack.c.h.b16 %v171
    %v969 = vunpack.c.l.b16 %v172
    %v970 = vunpack.c.h.b16 %v172
    %v971 = vunpack.c.l.b16 %v173
    %v972 = vunpack.c.h.b16 %v173
    %v973 = vunpack.c.l.b16 %v174
    %v974 = vunpack.c.h.b16 %v174
    %v975 = vunpack.c.l.b16 %v175
    %v976 = vunpack.c.h.b16 %v175
    %v977 = vunpack.c.l.b16 %v176
    %v978 = vunpack.c.h.b16 %v176
    %v979 = vunpack.c.l.b16 %v177
    %v980 = vunpack.c.h.b16 %v177
    %v981 = vunpack.c.l.b16 %v178
    %v982 = vunpack.c.h.b16 %v178
    %v983 = vunpack.c.l.b16 %v179
    %v984 = vunpack.c.h.b16 %v179
    %v985 = vunpack.c.l.b16 %v180
    %v986 = vunpack.c.h.b16 %v180
    %v987 = vunpack.c.l.b16 %v181
    %v988 = vunpack.c.h.b16 %v181
    %v989 = vunpack.c.l.b16 %v182
    %v990 = vunpack.c.h.b16 %v182
    %v991 = vunpack.c.l.b16 %v183
    %v992 = vunpack.c.h.b16 %v183
    %v993 = vunpack.c.l.b16 %v184
    %v994 = vunpack.c.h.b16 %v184
    %v995 = vunpack.c.l.b16 %v185
    %v996 = vunpack.c.h.b16 %v185
    %v997 = vunpack.c.l.b16 %v186
    %v998 = vunpack.c.h.b16 %v186
    %v999 = vunpack.c.l.b16 %v187
    %v1000 = vunpack.c.h.b16 %v187
    %v1001 = vunpack.c.l.b16 %v188
    %v1002 = vunpack.c.h.b16 %v188
    %v1003 = vunpack.c.l.b16 %v189
    %v1004 = vunpack.c.h.b16 %v189
    %v1005 = vunpack.c.l.b16 %v190
    %v1006 = vunpack.c.h.b16 %v190
    %v1007 = vunpack.c.l.b16 %v191
    %v1008 = vunpack.c.h.b16 %v191
    %v1009 = vunpack.c.l.b16 %v192
    %v1010 = vunpack.c.h.b16 %v192
    %v1011 = vunpack.c.l.b16 %v193
    %v1012 = vunpack.c.h.b16 %v193
    %v1013 = vunpack.c.l.b16 %v194
    %v1014 = vunpack.c.h.b16 %v194
    %v1015 = vunpack.c.l.b16 %v195
    %v1016 = vunpack.c.h.b16 %v195
    %v1017 = vunpack.c.l.b16 %v196
    %v1018 = vunpack.c.h.b16 %v196
    %v1019 = vunpack.c.l.b16 %v197
    %v1020 = vunpack.c.h.b16 %v197
    %v1021 = vunpack.c.l.b16 %v198
    %v1022 = vunpack.c.h.b16 %v198
    %v1023 = vunpack.c.l.b16 %v199
    %v1024 = vunpack.c.h.b16 %v199
    %v1025 = vunpack.c.l.b16 %v200
    %v1026 = vunpack.c.h.b16 %v200
    %v1027 = vunpack.c.l.b16 %v201
    %v1028 = vunpack.c.h.b16 %v201
    %v1029 = vunpack.c.l.b16 %v202
    %v1030 = vunpack.c.h.b16 %v202
    %v1031 = vunpack.c.l.b16 %v203
    %v1032 = vunpack.c.h.b16 %v203
    %v1033 = vunpack.c.l.b16 %v204
    %v1034 = vunpack.c.h.b16 %v204
    %v1035 = vunpack.c.l.b16 %v205
    %v1036 = vunpack.c.h.b16 %v205
    %v1037 = vunpack.c.l.b16 %v206
    %v1038 = vunpack.c.h.b16 %v206
    %v1039 = vunpack.c.l.b16 %v207
    %v1040 = vunpack.c.h.b16 %v207
    %v1041 = vunpack.c.l.b16 %v208
    %v1042 = vunpack.c.h.b16 %v208
    %v1043 = vunpack.c.l.b16 %v209
    %v1044 = vunpack.c.h.b16 %v209
    %v1045 = vunpack.c.l.b16 %v210
    %v1046 = vunpack.c.h.b16 %v210
    %v1047 = vunpack.c.l.b16 %v211
    %v1048 = vunpack.c.h.b16 %v211
    %v1049 = vunpack.c.l.b16 %v212
    %v1050 = vunpack.c.h.b16 %v212
    %v1051 = vunpack.c.l.b16 %v213
    %v1052 = vunpack.c.h.b16 %v213
    %v1053 = vunpack.c.l.b16 %v214
    %v1054 = vunpack.c.h.b16 %v214
    %v1055 = vunpack.c.l.b16 %v215
    %v1056 = vunpack.c.h.b16 %v215
    %v1057 = vunpack.c.l.b16 %v216
    %v1058 = vunpack.c.h.b16 %v216
    %v1059 = vunpack.c.l.b16 %v217
    %v1060 = vunpack.c.h.b16 %v217
    %v1061 = vunpack.c.l.b16 %v218
    %v1062 = vunpack.c.h.b16 %v218
    %v1063 = vunpack.c.l.b16 %v219
    %v1064 = vunpack.c.h.b16 %v219
    %v1065 = vunpack.c.l.b16 %v220
    %v1066 = vunpack.c.h.b16 %v220
    %v1067 = vunpack.c.l.b16 %v221
    %v1068 = vunpack.c.h.b16 %v221
    %v1069 = vunpack.c.l.b16 %v222
    %v1070 = vunpack.c.h.b16 %v222
    %v1071 = vunpack.c.l.b16 %v223
    %v1072 = vunpack.c.h.b16 %v223
    %v1073 = vunpack.c.l.b16 %v224
    %v1074 = vunpack.c.h.b16 %v224
    %v1075 = vunpack.c.l.b16 %v225
    %v1076 = vunpack.c.h.b16 %v225
    %v1077 = vunpack.c.l.b16 %v226
    %v1078 = vunpack.c.h.b16 %v226
    %v1079 = vunpack.c.l.b16 %v227
    %v1080 = vunpack.c.h.b16 %v227
    %v1081 = vunpack.c.l.b16 %v228
    %v1082 = vunpack.c.h.b16 %v228
    %v1083 = vunpack.c.l.b16 %v229
    %v1084 = vunpack.c.h.b16 %v229
    %v1085 = vunpack.c.l.b16 %v230
    %v1086 = vunpack.c.h.b16 %v230
    %v1087 = vunpack.c.l.b16 %v231
    %v1088 = vunpack.c.h.b16 %v231
    %v1089 = vunpack.c.l.b16 %v232
    %v1090 = vunpack.c.h.b16 %v232
    %v1091 = vunpack.c.l.b16 %v233
    %v1092 = vunpack.c.h.b16 %v233
    %v1093 = vunpack.c.l.b16 %v234
    %v1094 = vunpack.c.h.b16 %v234
    %v1095 = vunpack.c.l.b16 %v235
    %v1096 = vunpack.c.h.b16 %v235
    %v1097 = vunpack.c.l.b16 %v236
    %v1098 = vunpack.c.h.b16 %v236
    %v1099 = vunpack.c.l.b16 %v237
    %v1100 = vunpack.c.h.b16 %v237
    %v1101 = vunpack.c.l.b16 %v238
    %v1102 = vunpack.c.h.b16 %v238
    %v1103 = vunpack.c.l.b16 %v239
    %v1104 = vunpack.c.h.b16 %v239
    %v1105 = vunpack.c.l.b16 %v240
    %v1106 = vunpack.c.h.b16 %v240
    %v1107 = vunpack.c.l.b16 %v241
    %v1108 = vunpack.c.h.b16 %v241
    %v1109 = vunpack.c.l.b16 %v242
    %v1110 = vunpack.c.h.b16 %v242
    %v1111 = vunpack.c.l.b16 %v243
    %v1112 = vunpack.c.h.b16 %v243
    %v1113 = vunpack.c.l.b16 %v244
    %v1114 = vunpack.c.h.b16 %v244
    %v1115 = vunpack.c.l.b16 %v245
    %v1116 = vunpack.c.h.b16 %v245
    %v1117 = vunpack.c.l.b16 %v246
    %v1118 = vunpack.c.h.b16 %v246
    %v1119 = vunpack.c.l.b16 %v247
    %v1120 = vunpack.c.h.b16 %v247
    %v1121 = vunpack.c.l.b16 %v248
    %v1122 = vunpack.c.h.b16 %v248
    %v1123 = vunpack.c.l.b16 %v249
    %v1124 = vunpack.c.h.b16 %v249
    %v1125 = vunpack.c.l.b16 %v250
    %v1126 = vunpack.c.h.b16 %v250
    %v1127 = vunpack.c.l.b16 %v251
    %v1128 = vunpack.c.h.b16 %v251
    %v1129 = vunpack.c.l.b16 %v252
    %v1130 = vunpack.c.h.b16 %v252
    %v1131 = vunpack.c.l.b16 %v253
    %v1132 = vunpack.c.h.b16 %v253
    %v1133 = vunpack.c.l.b16 %v254
    %v1134 = vunpack.c.h.b16 %v254
    %v1135 = vunpack.c.l.b16 %v255
    %v1136 = vunpack.c.h.b16 %v255
    %v1137 = vunpack.c.l.b16 %v256
    %v1138 = vunpack.c.h.b16 %v256
    %v1139 = vunpack.c.l.b16 %v257
    %v1140 = vunpack.c.h.b16 %v257
    %v1141 = vunpack.c.l.b16 %v258
    %v1142 = vunpack.c.h.b16 %v258
    %v1143 = vunpack.c.l.b16 %v259
    %v1144 = vunpack.c.h.b16 %v259
    %v1145 = vunpack.c.l.b16 %v260
    %v1146 = vunpack.c.h.b16 %v260
    %v1147 = vunpack.c.l.b16 %v261
    %v1148 = vunpack.c.h.b16 %v261
    %v1149 = vunpack.c.l.b16 %v262
    %v1150 = vunpack.c.h.b16 %v262
    %v1151 = vunpack.c.l.b16 %v263
    %v1152 = vunpack.c.h.b16 %v263
    %v1153 = vunpack.c.l.b16 %v264
    %v1154 = vunpack.c.h.b16 %v264
    %v1155 = vunpack.c.l.b16 %v265
    %v1156 = vunpack.c.h.b16 %v265
    %v1157 = vunpack.c.l.b16 %v266
    %v1158 = vunpack.c.h.b16 %v266
    %v1159 = vunpack.c.l.b16 %v267
    %v1160 = vunpack.c.h.b16 %v267
    %v1161 = vunpack.c.l.b16 %v268
    %v1162 = vunpack.c.h.b16 %v268
    %v1163 = vunpack.c.l.b16 %v269
    %v1164 = vunpack.c.h.b16 %v269
    %v1165 = vunpack.c.l.b16 %v270
    %v1166 = vunpack.c.h.b16 %v270
    %v1167 = vunpack.c.l.b16 %v271
    %v1168 = vunpack.c.h.b16 %v271
    %v1169 = vunpack.c.l.b16 %v272
    %v1170 = vunpack.c.h.b16 %v272
    %v1171 = vunpack.c.l.b16 %v273
    %v1172 = vunpack.c.h.b16 %v273
    %v1173 = vunpack.c.l.b16 %v274
    %v1174 = vunpack.c.h.b16 %v274
    %v1175 = vunpack.c.l.b16 %v275
    %v1176 = vunpack.c.h.b16 %v275
    %v1177 = vunpack.c.l.b16 %v276
    %v1178 = vunpack.c.h.b16 %v276
    %v1179 = vunpack.c.l.b16 %v277
    %v1180 = vunpack.c.h.b16 %v277
    %v1181 = vunpack.c.l.b16 %v278
    %v1182 = vunpack.c.h.b16 %v278
    %v1183 = vunpack.c.l.b16 %v279
    %v1184 = vunpack.c.h.b16 %v279
    %v1185 = vunpack.c.l.b16 %v280
    %v1186 = vunpack.c.h.b16 %v280
    %v1187 = vunpack.c.l.b16 %v281
    %v1188 = vunpack.c.h.b16 %v281
    %v1189 = vunpack.c.l.b16 %v282
    %v1190 = vunpack.c.h.b16 %v282
    %v1191 = vunpack.c.l.b16 %v283
    %v1192 = vunpack.c.h.b16 %v283
    %v1193 = vunpack.c.l.b16 %v284
    %v1194 = vunpack.c.h.b16 %v284
    %v1195 = vunpack.c.l.b16 %v285
    %v1196 = vunpack.c.h.b16 %v285
    %v1197 = vunpack.c.l.b16 %v286
    %v1198 = vunpack.c.h.b16 %v286
    %v1199 = vunpack.c.l.b16 %v287
    %v1200 = vunpack.c.h.b16 %v287
    %v1201 = vunpack.c.l.b16 %v288
    %v1202 = vunpack.c.h.b16 %v288
    %v1203 = vunpack.c.l.b16 %v289
    %v1204 = vunpack.c.h.b16 %v289
    %v1205 = vunpack.c.l.b16 %v290
    %v1206 = vunpack.c.h.b16 %v290
    %v1207 = vunpack.c.l.b16 %v291
    %v1208 = vunpack.c.h.b16 %v291
    %v1209 = vunpack.c.l.b16 %v292
    %v1210 = vunpack.c.h.b16 %v292
    %v1211 = vunpack.c.l.b16 %v293
    %v1212 = vunpack.c.h.b16 %v293
    %v1213 = vunpack.c.l.b16 %v294
    %v1214 = vunpack.c.h.b16 %v294
    %v1215 = vunpack.c.l.b16 %v295
    %v1216 = vunpack.c.h.b16 %v295
    %v1217 = vunpack.c.l.b16 %v296
    %v1218 = vunpack.c.h.b16 %v296
    %v1219 = vunpack.c.l.b16 %v297
    %v1220 = vunpack.c.h.b16 %v297
    %v1221 = vunpack.c.l.b16 %v298
    %v1222 = vunpack.c.h.b16 %v298
    %v1223 = vunpack.c.l.b16 %v299
    %v1224 = vunpack.c.h.b16 %v299
    %v1225 = vunpack.c.l.b16 %v300
    %v1226 = vunpack.c.h.b16 %v300
    %v1227 = vunpack.c.l.b16 %v301
    %v1228 = vunpack.c.h.b16 %v301
    %v1229 = vunpack.c.l.b16 %v302
    %v1230 = vunpack.c.h.b16 %v302
    %v1231 = vunpack.c.l.b16 %v303
    %v1232 = vunpack.c.h.b16 %v303
    %v1233 = vunpack.c.l.b16 %v304
    %v1234 = vunpack.c.h.b16 %v304
    %v1235 = vunpack.c.l.b16 %v305
    %v1236 = vunpack.c.h.b16 %v305
    %v1237 = vunpack.c.l.b16 %v306
    %v1238 = vunpack.c.h.b16 %v306
    %v1239 = vunpack.c.l.b16 %v307
    %v1240 = vunpack.c.h.b16 %v307
    %v1241 = vunpack.c.l.b16 %v308
    %v1242 = vunpack.c.h.b16 %v308
    %v1243 = vunpack.c.l.b16 %v309
    %v1244 = vunpack.c.h.b16 %v309
    %v1245 = vunpack.c.l.b16 %v310
    %v1246 = vunpack.c.h.b16 %v310
    %v1247 = vunpack.c.l.b16 %v311
    %v1248 = vunpack.c.h.b16 %v311
    %v1249 = vunpack.c.l.b16 %v312
    %v1250 = vunpack.c.h.b16 %v312
    %v1251 = vunpack.c.l.b16 %v313
    %v1252 = vunpack.c.h.b16 %v313
    %v1253 = vunpack.c.l.b16 %v314
    %v1254 = vunpack.c.h.b16 %v314
    %v1255 = vunpack.c.l.b16 %v315
    %v1256 = vunpack.c.h.b16 %v315
    %v1257 = vunpack.c.l.b16 %v316
    %v1258 = vunpack.c.h.b16 %v316
    %v1259 = vunpack.c.l.b16 %v317
    %v1260 = vunpack.c.h.b16 %v317
    %v1261 = vunpack.c.l.b16 %v318
    %v1262 = vunpack.c.h.b16 %v318
    %v1263 = vunpack.c.l.b16 %v319
    %v1264 = vunpack.c.h.b16 %v319
    %v1265 = vunpack.c.l.b16 %v320
    %v1266 = vunpack.c.h.b16 %v320
    %v1267 = vunpack.c.l.b16 %v321
    %v1268 = vunpack.c.h.b16 %v321
    %v1269 = vunpack.c.l.b16 %v322
    %v1270 = vunpack.c.h.b16 %v322
    %v1271 = vunpack.c.l.b16 %v323
    %v1272 = vunpack.c.h.b16 %v323
    %v1273 = vunpack.c.l.b16 %v324
    %v1274 = vunpack.c.h.b16 %v324
    %v1275 = vunpack.c.l.b16 %v325
    %v1276 = vunpack.c.h.b16 %v325
    %v1277 = vunpack.c.l.b16 %v326
    %v1278 = vunpack.c.h.b16 %v326
    %v1279 = vunpack.c.l.b16 %v327
    %v1280 = vunpack.c.h.b16 %v327
    %v1281 = vunpack.c.l.b16 %v328
    %v1282 = vunpack.c.h.b16 %v328
    %v1283 = vunpack.c.l.b16 %v329
    %v1284 = vunpack.c.h.b16 %v329
    %v1285 = vunpack.c.l.b16 %v330
    %v1286 = vunpack.c.h.b16 %v330
    %v1287 = vunpack.c.l.b16 %v331
    %v1288 = vunpack.c.h.b16 %v331
    %v1289 = vunpack.c.l.b16 %v332
    %v1290 = vunpack.c.h.b16 %v332
    %v1291 = vunpack.c.l.b16 %v333
    %v1292 = vunpack.c.h.b16 %v333
    %v1293 = vunpack.c.l.b16 %v334
    %v1294 = vunpack.c.h.b16 %v334
    %v1295 = vunpack.c.l.b16 %v335
    %v1296 = vunpack.c.h.b16 %v335
    %v1297 = vunpack.c.l.b16 %v336
    %v1298 = vunpack.c.h.b16 %v336
    %v1299 = vunpack.c.l.b16 %v337
    %v1300 = vunpack.c.h.b16 %v337
    %v1301 = vunpack.c.l.b16 %v338
    %v1302 = vunpack.c.h.b16 %v338
    %v1303 = vunpack.c.l.b16 %v339
    %v1304 = vunpack.c.h.b16 %v339
    %v1305 = vunpack.c.l.b16 %v340
    %v1306 = vunpack.c.h.b16 %v340
    %v1307 = vunpack.c.l.b16 %v341
    %v1308 = vunpack.c.h.b16 %v341
    %v1309 = vunpack.c.l.b16 %v342
    %v1310 = vunpack.c.h.b16 %v342
    %v1311 = vunpack.c.l.b16 %v343
    %v1312 = vunpack.c.h.b16 %v343
    %v1313 = vunpack.c.l.b16 %v344
    %v1314 = vunpack.c.h.b16 %v344
    %v1315 = vunpack.c.l.b16 %v345
    %v1316 = vunpack.c.h.b16 %v345
    %v1317 = vunpack.c.l.b16 %v346
    %v1318 = vunpack.c.h.b16 %v346
    %v1319 = vunpack.c.l.b16 %v347
    %v1320 = vunpack.c.h.b16 %v347
    %v1321 = vunpack.c.l.b16 %v348
    %v1322 = vunpack.c.h.b16 %v348
    %v1323 = vunpack.c.l.b16 %v349
    %v1324 = vunpack.c.h.b16 %v349
    %v1325 = vunpack.c.l.b16 %v350
    %v1326 = vunpack.c.h.b16 %v350
    %v1327 = vunpack.c.l.b16 %v351
    %v1328 = vunpack.c.h.b16 %v351
    %v1329 = vunpack.c.l.b16 %v352
    %v1330 = vunpack.c.h.b16 %v352
    %v1331 = vunpack.c.l.b16 %v353
    %v1332 = vunpack.c.h.b16 %v353
    %v1333 = vunpack.c.l.b16 %v354
    %v1334 = vunpack.c.h.b16 %v354
    %v1335 = vunpack.c.l.b16 %v355
    %v1336 = vunpack.c.h.b16 %v355
    %v1337 = vunpack.c.l.b16 %v356
    %v1338 = vunpack.c.h.b16 %v356
    %v1339 = vunpack.c.l.b16 %v357
    %v1340 = vunpack.c.h.b16 %v357
    %v1341 = vunpack.c.l.b16 %v358
    %v1342 = vunpack.c.h.b16 %v358
    %v1343 = vunpack.c.l.b16 %v359
    %v1344 = vunpack.c.h.b16 %v359
    %v1345 = vunpack.c.l.b16 %v360
    %v1346 = vunpack.c.h.b16 %v360
    %v1347 = vunpack.c.l.b16 %v361
    %v1348 = vunpack.c.h.b16 %v361
    %v1349 = vunpack.c.l.b16 %v362
    %v1350 = vunpack.c.h.b16 %v362
    %v1351 = vunpack.c.l.b16 %v363
    %v1352 = vunpack.c.h.b16 %v363
    %v1353 = vunpack.c.l.b16 %v364
    %v1354 = vunpack.c.h.b16 %v364
    %v1355 = vunpack.c.l.b16 %v365
    %v1356 = vunpack.c.h.b16 %v365
    %v1357 = vunpack.c.l.b16 %v366
    %v1358 = vunpack.c.h.b16 %v366
    %v1359 = vunpack.c.l.b16 %v367
    %v1360 = vunpack.c.h.b16 %v367
    %v1361 = vunpack.c.l.b16 %v368
    %v1362 = vunpack.c.h.b16 %v368
    %v1363 = vunpack.c.l.b16 %v369
    %v1364 = vunpack.c.h.b16 %v369
    %v1365 = vunpack.c.l.b16 %v370
    %v1366 = vunpack.c.h.b16 %v370
    %v1367 = vunpack.c.l.b16 %v371
    %v1368 = vunpack.c.h.b16 %v371
    %v1369 = vunpack.c.l.b16 %v372
    %v1370 = vunpack.c.h.b16 %v372
    %v1371 = vunpack.c.l.b16 %v373
    %v1372 = vunpack.c.h.b16 %v373
    %v1373 = vunpack.c.l.b16 %v374
    %v1374 = vunpack.c.h.b16 %v374
    %v1375 = vunpack.c.l.b16 %v375
    %v1376 = vunpack.c.h.b16 %v375
    %v1377 = vunpack.c.l.b16 %v376
    %v1378 = vunpack.c.h.b16 %v376
    %v1379 = vunpack.c.l.b16 %v377
    %v1380 = vunpack.c.h.b16 %v377
    %v1381 = vunpack.c.l.b16 %v378
    %v1382 = vunpack.c.h.b16 %v378
    %v1383 = vunpack.c.l.b16 %v379
    %v1384 = vunpack.c.h.b16 %v379
    %v1385 = vunpack.c.l.b16 %v380
    %v1386 = vunpack.c.h.b16 %v380
    %v1387 = vunpack.c.l.b16 %v381
    %v1388 = vunpack.c.h.b16 %v381
    %v1389 = vunpack.c.l.b16 %v382
    %v1390 = vunpack.c.h.b16 %v382
    %v1391 = vunpack.c.l.b16 %v383
    %v1392 = vunpack.c.h.b16 %v383
    %v1393 = vunpack.c.l.b16 %v384
    %v1394 = vunpack.c.h.b16 %v384
    %v1395 = vunpack.c.l.b16 %v385
    %v1396 = vunpack.c.h.b16 %v385
    %v1397 = vunpack.c.l.b16 %v386
    %v1398 = vunpack.c.h.b16 %v386
    %v1399 = vunpack.c.l.b16 %v387
    %v1400 = vunpack.c.h.b16 %v387
    %v1401 = vunpack.c.l.b16 %v388
    %v1402 = vunpack.c.h.b16 %v388
    %v1403 = vunpack.c.l.b16 %v389
    %v1404 = vunpack.c.h.b16 %v389
    %v1405 = vunpack.c.l.b16 %v390
    %v1406 = vunpack.c.h.b16 %v390
    %v1407 = vunpack.c.l.b16 %v391
    %v1408 = vunpack.c.h.b16 %v391
    %v1409 = vunpack.c.l.b16 %v392
    %v1410 = vunpack.c.h.b16 %v392
    %v1411 = vunpack.c.l.b16 %v393
    %v1412 = vunpack.c.h.b16 %v393
    %v1413 = vunpack.c.l.b16 %v394
    %v1414 = vunpack.c.h.b16 %v394
    %v1415 = vunpack.c.l.b16 %v395
    %v1416 = vunpack.c.h.b16 %v395
    %v1417 = vunpack.c.l.b16 %v396
    %v1418 = vunpack.c.h.b16 %v396
    %v1419 = vunpack.c.l.b16 %v397
    %v1420 = vunpack.c.h.b16 %v397
    %v1421 = vunpack.c.l.b16 %v398
    %v1422 = vunpack.c.h.b16 %v398
    %v1423 = vunpack.c.l.b16 %v399
    %v1424 = vunpack.c.h.b16 %v399
    %v1425 = vunpack.c.l.b16 %v400
    %v1426 = vunpack.c.h.b16 %v400
    %v1427 = vunpack.c.l.b16 %v401
    %v1428 = vunpack.c.h.b16 %v401
    %v1429 = vunpack.c.l.b16 %v402
    %v1430 = vunpack.c.h.b16 %v402
    %v1431 = vunpack.c.l.b16 %v403
    %v1432 = vunpack.c.h.b16 %v403
    %v1433 = vunpack.c.l.b16 %v404
    %v1434 = vunpack.c.h.b16 %v404
    %v1435 = vunpack.c.l.b16 %v405
    %v1436 = vunpack.c.h.b16 %v405
    %v1437 = vunpack.c.l.b16 %v406
    %v1438 = vunpack.c.h.b16 %v406
    %v1439 = vunpack.c.l.b16 %v407
    %v1440 = vunpack.c.h.b16 %v407
    %v1441 = vunpack.c.l.b16 %v408
    %v1442 = vunpack.c.h.b16 %v408
    %v1443 = vunpack.c.l.b16 %v409
    %v1444 = vunpack.c.h.b16 %v409
    %v1445 = vunpack.c.l.b16 %v410
    %v1446 = vunpack.c.h.b16 %v410
    %v1447 = vunpack.c.l.b16 %v411
    %v1448 = vunpack.c.h.b16 %v411
    %v1449 = vunpack.c.l.b16 %v412
    %v1450 = vunpack.c.h.b16 %v412
    %v1451 = vunpack.c.l.b16 %v413
    %v1452 = vunpack.c.h.b16 %v413
    %v1453 = vunpack.c.l.b16 %v414
    %v1454 = vunpack.c.h.b16 %v414
    %v1455 = vunpack.c.l.b16 %v415
    %v1456 = vunpack.c.h.b16 %v415
    %v1457 = vunpack.c.l.b16 %v416
    %v1458 = vunpack.c.h.b16 %v416
    %v1459 = vunpack.c.l.b16 %v417
    %v1460 = vunpack.c.h.b16 %v417
    %v1461 = vunpack.c.l.b16 %v418
    %v1462 = vunpack.c.h.b16 %v418
    %v1463 = vunpack.c.l.b16 %v419
    %v1464 = vunpack.c.h.b16 %v419
    %v1465 = vunpack.c.l.b16 %v420
    %v1466 = vunpack.c.h.b16 %v420
    %v1467 = vunpack.c.l.b16 %v421
    %v1468 = vunpack.c.h.b16 %v421
    %v1469 = vunpack.c.l.b16 %v422
    %v1470 = vunpack.c.h.b16 %v422
    %v1471 = vunpack.c.l.b16 %v423
    %v1472 = vunpack.c.h.b16 %v423
    %v1473 = vunpack.c.l.b16 %v424
    %v1474 = vunpack.c.h.b16 %v424
    %v1475 = vunpack.c.l.b16 %v425
    %v1476 = vunpack.c.h.b16 %v425
    %v1477 = vunpack.c.l.b16 %v426
    %v1478 = vunpack.c.h.b16 %v426
    %v1479 = vunpack.c.l.b16 %v427
    %v1480 = vunpack.c.h.b16 %v427
    %v1481 = vunpack.c.l.b16 %v428
    %v1482 = vunpack.c.h.b16 %v428
    %v1483 = vunpack.c.l.b16 %v429
    %v1484 = vunpack.c.h.b16 %v429
    %v1485 = vunpack.c.l.b16 %v430
    %v1486 = vunpack.c.h.b16 %v430
    %v1487 = vunpack.c.l.b16 %v431
    %v1488 = vunpack.c.h.b16 %v431
    %v1489 = vunpack.c.l.b16 %v432
    %v1490 = vunpack.c.h.b16 %v432
    %v1491 = vunpack.c.l.b16 %v433
    %v1492 = vunpack.c.h.b16 %v433
    %v1493 = vunpack.c.l.b16 %v434
    %v1494 = vunpack.c.h.b16 %v434
    %v1495 = vunpack.c.l.b16 %v435
    %v1496 = vunpack.c.h.b16 %v435
    %v1497 = vunpack.c.l.b16 %v436
    %v1498 = vunpack.c.h.b16 %v436
    %v1499 = vunpack.c.l.b16 %v437
    %v1500 = vunpack.c.h.b16 %v437
    %v1501 = vunpack.c.l.b16 %v438
    %v1502 = vunpack.c.h.b16 %v438
    %v1503 = vunpack.c.l.b16 %v439
    %v1504 = vunpack.c.h.b16 %v439
    %v1505 = vunpack.c.l.b16 %v440
    %v1506 = vunpack.c.h.b16 %v440
    %v1507 = vunpack.c.l.b16 %v441
    %v1508 = vunpack.c.h.b16 %v441
    %v1509 = vunpack.c.l.b16 %v442
    %v1510 = vunpack.c.h.b16 %v442
    %v1511 = vunpack.c.l.b16 %v443
    %v1512 = vunpack.c.h.b16 %v443
    %v1513 = vunpack.c.l.b16 %v444
    %v1514 = vunpack.c.h.b16 %v444
    %v1515 = vunpack.c.l.b16 %v445
    %v1516 = vunpack.c.h.b16 %v445
    %v1517 = vunpack.c.l.b16 %v446
    %v1518 = vunpack.c.h.b16 %v446
    %v1519 = vunpack.c.l.b16 %v447
    %v1520 = vunpack.c.h.b16 %v447
    %v1521 = vunpack.c.l.b16 %v448
    %v1522 = vunpack.c.h.b16 %v448
    %v1523 = vunpack.c.l.b16 %v449
    %v1524 = vunpack.c.h.b16 %v449
    %v1525 = vunpack.c.l.b16 %v450
    %v1526 = vunpack.c.h.b16 %v450
    %v1527 = vunpack.c.l.b16 %v451
    %v1528 = vunpack.c.h.b16 %v451
    %v1529 = vunpack.c.l.b16 %v452
    %v1530 = vunpack.c.h.b16 %v452
    %v1531 = vunpack.c.l.b16 %v453
    %v1532 = vunpack.c.h.b16 %v453
    %v1533 = vunpack.c.l.b16 %v454
    %v1534 = vunpack.c.h.b16 %v454
    %v1535 = vunpack.c.l.b16 %v455
    %v1536 = vunpack.c.h.b16 %v455
    %v1537 = vunpack.c.l.b16 %v456
    %v1538 = vunpack.c.h.b16 %v456
    %v1539 = vunpack.c.l.b16 %v457
    %v1540 = vunpack.c.h.b16 %v457
    %v1541 = vunpack.c.l.b16 %v458
    %v1542 = vunpack.c.h.b16 %v458
    %v1543 = vunpack.c.l.b16 %v459
    %v1544 = vunpack.c.h.b16 %v459
    %v1545 = vunpack.c.l.b16 %v460
    %v1546 = vunpack.c.h.b16 %v460
    %v1547 = vunpack.c.l.b16 %v461
    %v1548 = vunpack.c.h.b16 %v461
    %v1549 = vunpack.c.l.b16 %v462
    %v1550 = vunpack.c.h.b16 %v462
    %v1551 = vunpack.c.l.b16 %v463
    %v1552 = vunpack.c.h.b16 %v463
    %v1553 = vunpack.c.l.b16 %v464
    %v1554 = vunpack.c.h.b16 %v464
    %v1555 = vunpack.c.l.b16 %v465
    %v1556 = vunpack.c.h.b16 %v465
    %v1557 = vunpack.c.l.b16 %v466
    %v1558 = vunpack.c.h.b16 %v466
    %v1559 = vunpack.c.l.b16 %v467
    %v1560 = vunpack.c.h.b16 %v467
    %v1561 = vunpack.c.l.b16 %v468
    %v1562 = vunpack.c.h.b16 %v468
    %v1563 = vunpack.c.l.b16 %v469
    %v1564 = vunpack.c.h.b16 %v469
    %v1565 = vunpack.c.l.b16 %v470
    %v1566 = vunpack.c.h.b16 %v470
    %v1567 = vunpack.c.l.b16 %v471
    %v1568 = vunpack.c.h.b16 %v471
    %v1569 = vunpack.c.l.b16 %v472
    %v1570 = vunpack.c.h.b16 %v472
    %v1571 = vunpack.c.l.b16 %v473
    %v1572 = vunpack.c.h.b16 %v473
    %v1573 = vunpack.c.l.b16 %v474
    %v1574 = vunpack.c.h.b16 %v474
    %v1575 = vunpack.c.l.b16 %v475
    %v1576 = vunpack.c.h.b16 %v475
    %v1577 = vunpack.c.l.b16 %v476
    %v1578 = vunpack.c.h.b16 %v476
    %v1579 = vunpack.c.l.b16 %v477
    %v1580 = vunpack.c.h.b16 %v477
    %v1581 = vunpack.c.l.b16 %v478
    %v1582 = vunpack.c.h.b16 %v478
    %v1583 = vunpack.c.l.b16 %v479
    %v1584 = vunpack.c.h.b16 %v479
    %v1585 = vunpack.c.l.b16 %v480
    %v1586 = vunpack.c.h.b16 %v480
    %v1587 = vunpack.c.l.b16 %v481
    %v1588 = vunpack.c.h.b16 %v481
    %v1589 = vunpack.c.l.b16 %v482
    %v1590 = vunpack.c.h.b16 %v482
    %v1591 = vunpack.c.l.b16 %v483
    %v1592 = vunpack.c.h.b16 %v483
    %v1593 = vunpack.c.l.b16 %v484
    %v1594 = vunpack.c.h.b16 %v484
    %v1595 = vunpack.c.l.b16 %v485
    %v1596 = vunpack.c.h.b16 %v485
    %v1597 = vunpack.c.l.b16 %v486
    %v1598 = vunpack.c.h.b16 %v486
    %v1599 = vunpack.c.l.b16 %v487
    %v1600 = vunpack.c.h.b16 %v487
    %v1601 = vunpack.c.l.b16 %v488
    %v1602 = vunpack.c.h.b16 %v488
    %v1603 = vunpack.c.l.b16 %v489
    %v1604 = vunpack.c.h.b16 %v489
    %v1605 = vunpack.c.l.b16 %v490
    %v1606 = vunpack.c.h.b16 %v490
    %v1607 = vunpack.c.l.b16 %v491
    %v1608 = vunpack.c.h.b16 %v491
    %v1609 = vunpack.c.l.b16 %v492
    %v1610 = vunpack.c.h.b16 %v492
    %v1611 = vunpack.c.l.b16 %v493
    %v1612 = vunpack.c.h.b16 %v493
    %v1613 = vunpack.c.l.b16 %v494
    %v1614 = vunpack.c.h.b16 %v494
    %v1615 = vunpack.c.l.b16 %v495
    %v1616 = vunpack.c.h.b16 %v495
    %v1617 = vunpack.c.l.b16 %v496
    %v1618 = vunpack.c.h.b16 %v496
    %v1619 = vunpack.c.l.b16 %v497
    %v1620 = vunpack.c.h.b16 %v497
    %v1621 = vunpack.c.l.b16 %v498
    %v1622 = vunpack.c.h.b16 %v498
    %v1623 = vunpack.c.l.b16 %v499
    %v1624 = vunpack.c.h.b16 %v499
    %v1625 = vunpack.c.l.b16 %v500
    %v1626 = vunpack.c.h.b16 %v500
    %v1627 = vunpack.c.l.b16 %v501
    %v1628 = vunpack.c.h.b16 %v501
    %v1629 = vunpack.c.l.b16 %v502
    %v1630 = vunpack.c.h.b16 %v502
    %v1631 = vunpack.c.l.b16 %v503
    %v1632 = vunpack.c.h.b16 %v503
    %v1633 = vunpack.c.l.b16 %v504
    %v1634 = vunpack.c.h.b16 %v504
    %v1635 = vunpack.c.l.b16 %v505
    %v1636 = vunpack.c.h.b16 %v505
    %v1637 = vunpack.c.l.b16 %v506
    %v1638 = vunpack.c.h.b16 %v506
    %v1639 = vunpack.c.l.b16 %v507
    %v1640 = vunpack.c.h.b16 %v507
    %v1641 = vunpack.c.l.b16 %v508
    %v1642 = vunpack.c.h.b16 %v508
    %v1643 = vunpack.c.l.b16 %v509
    %v1644 = vunpack.c.h.b16 %v509
    %v1645 = vunpack.c.l.b16 %v510
    %v1646 = vunpack.c.h.b16 %v510
    %v1647 = vunpack.c.l.b16 %v511
    %v1648 = vunpack.c.h.b16 %v511
    %v1649 = vunpack.c.l.b16 %v512
    %v1650 = vunpack.c.h.b16 %v512
    %v1651 = vunpack.c.l.b16 %v513
    %v1652 = vunpack.c.h.b16 %v513
    %v1653 = vunpack.c.l.b16 %v514
    %v1654 = vunpack.c.h.b16 %v514
    %v1655 = vunpack.c.l.b16 %v515
    %v1656 = vunpack.c.h.b16 %v515
    %v1657 = vunpack.c.l.b16 %v516
    %v1658 = vunpack.c.h.b16 %v516
    %v1659 = vunpack.c.l.b16 %v517
    %v1660 = vunpack.c.h.b16 %v517
    %v1661 = vunpack.c.l.b16 %v518
    %v1662 = vunpack.c.h.b16 %v518
    %v1663 = vunpack.c.l.b16 %v519
    %v1664 = vunpack.c.h.b16 %v519
    %v1665 = vunpack.c.l.b16 %v520
    %v1666 = vunpack.c.h.b16 %v520
    %v1667 = vunpack.c.l.b16 %v521
    %v1668 = vunpack.c.h.b16 %v521
    %v1669 = vunpack.c.l.b16 %v522
    %v1670 = vunpack.c.h.b16 %v522
    %v1671 = vunpack.c.l.b16 %v523
    %v1672 = vunpack.c.h.b16 %v523
    %v1673 = vunpack.c.l.b16 %v524
    %v1674 = vunpack.c.h.b16 %v524
    %v1675 = vunpack.c.l.b16 %v525
    %v1676 = vunpack.c.h.b16 %v525
    %v1677 = vunpack.c.l.b16 %v526
    %v1678 = vunpack.c.h.b16 %v526
    %v1679 = vpack.c.b16 %v915, %v911
    %v1680 = vpack.c.b16 %v916, %v912
    %v1681 = vpack.c.b16 %v917, %v913
    %v1682 = vpack.c.b16 %v918, %v914
    %v1683 = vpack.c.b16 %v923, %v919
    %v1684 = vpack.c.b16 %v924, %v920
    %v1685 = vpack.c.b16 %v925, %v921
    %v1686 = vpack.c.b16 %v926, %v922
    %v1687 = vpack.c.b16 %v931, %v927
    %v1688 = vpack.c.b16 %v932, %v928
    %v1689 = vpack.c.b16 %v933, %v929
    %v1690 = vpack.c.b16 %v934, %v930
    %v1691 = vpack.c.b16 %v939, %v935
    %v1692 = vpack.c.b16 %v940, %v936
    %v1693 = vpack.c.b16 %v941, %v937
    %v1694 = vpack.c.b16 %v942, %v938
    %v1695 = vpack.c.b16 %v947, %v943
    %v1696 = vpack.c.b16 %v948, %v944
    %v1697 = vpack.c.b16 %v949, %v945
    %v1698 = vpack.c.b16 %v950, %v946
    %v1699 = vpack.c.b16 %v955, %v951
    %v1700 = vpack.c.b16 %v956, %v952
    %v1701 = vpack.c.b16 %v957, %v953
    %v1702 = vpack.c.b16 %v958, %v954
    %v1703 = vpack.c.b16 %v963, %v959
    %v1704 = vpack.c.b16 %v964, %v960
    %v1705 = vpack.c.b16 %v965, %v961
    %v1706 = vpack.c.b16 %v966, %v962
    %v1707 = vpack.c.b16 %v971, %v967
    %v1708 = vpack.c.b16 %v972, %v968
    %v1709 = vpack.c.b16 %v973, %v969
    %v1710 = vpack.c.b16 %v974, %v970
    %v1711 = vpack.c.b16 %v979, %v975
    %v1712 = vpack.c.b16 %v980, %v976
    %v1713 = vpack.c.b16 %v981, %v977
    %v1714 = vpack.c.b16 %v982, %v978
    %v1715 = vpack.c.b16 %v987, %v983
    %v1716 = vpack.c.b16 %v988, %v984
    %v1717 = vpack.c.b16 %v989, %v985
    %v1718 = vpack.c.b16 %v990, %v986
    %v1719 = vpack.c.b16 %v995, %v991
    %v1720 = vpack.c.b16 %v996, %v992
    %v1721 = vpack.c.b16 %v997, %v993
    %v1722 = vpack.c.b16 %v998, %v994
    %v1723 = vpack.c.b16 %v1003, %v999
    %v1724 = vpack.c.b16 %v1004, %v1000
    %v1725 = vpack.c.b16 %v1005, %v1001
    %v1726 = vpack.c.b16 %v1006, %v1002
    %v1727 = vpack.c.b16 %v1011, %v1007
    %v1728 = vpack.c.b16 %v1012, %v1008
    %v1729 = vpack.c.b16 %v1013, %v1009
    %v1730 = vpack.c.b16 %v1014, %v1010
    %v1731 = vpack.c.b16 %v1019, %v1015
    %v1732 = vpack.c.b16 %v1020, %v1016
    %v1733 = vpack.c.b16 %v1021, %v1017
    %v1734 = vpack.c.b16 %v1022, %v1018
    %v1735 = vpack.c.b16 %v1027, %v1023
    %v1736 = vpack.c.b16 %v1028, %v1024
    %v1737 = vpack.c.b16 %v1029, %v1025
    %v1738 = vpack.c.b16 %v1030, %v1026
    %v1739 = vpack.c.b16 %v1035, %v1031
    %v1740 = vpack.c.b16 %v1036, %v1032
    %v1741 = vpack.c.b16 %v1037, %v1033
    %v1742 = vpack.c.b16 %v1038, %v1034
    %v1743 = vpack.c.b16 %v1043, %v1039
    %v1744 = vpack.c.b16 %v1044, %v1040
    %v1745 = vpack.c.b16 %v1045, %v1041
    %v1746 = vpack.c.b16 %v1046, %v1042
    %v1747 = vpack.c.b16 %v1051, %v1047
    %v1748 = vpack.c.b16 %v1052, %v1048
    %v1749 = vpack.c.b16 %v1053, %v1049
    %v1750 = vpack.c.b16 %v1054, %v1050
    %v1751 = vpack.c.b16 %v1059, %v1055
    %v1752 = vpack.c.b16 %v1060, %v1056
    %v1753 = vpack.c.b16 %v1061, %v1057
    %v1754 = vpack.c.b16 %v1062, %v1058
    %v1755 = vpack.c.b16 %v1067, %v1063
    %v1756 = vpack.c.b16 %v1068, %v1064
    %v1757 = vpack.c.b16 %v1069, %v1065
    %v1758 = vpack.c.b16 %v1070, %v1066
    %v1759 = vpack.c.b16 %v1075, %v1071
    %v1760 = vpack.c.b16 %v1076, %v1072
    %v1761 = vpack.c.b16 %v1077, %v1073
    %v1762 = vpack.c.b16 %v1078, %v1074
    %v1763 = vpack.c.b16 %v1083, %v1079
    %v1764 = vpack.c.b16 %v1084, %v1080
    %v1765 = vpack.c.b16 %v1085, %v1081
    %v1766 = vpack.c.b16 %v1086, %v1082
    %v1767 = vpack.c.b16 %v1091, %v1087
    %v1768 = vpack.c.b16 %v1092, %v1088
    %v1769 = vpack.c.b16 %v1093, %v1089
    %v1770 = vpack.c.b16 %v1094, %v1090
    %v1771 = vpack.c.b16 %v1099, %v1095
    %v1772 = vpack.c.b16 %v1100, %v1096
    %v1773 = vpack.c.b16 %v1101, %v1097
    %v1774 = vpack.c.b16 %v1102, %v1098
    %v1775 = vpack.c.b16 %v1107, %v1103
    %v1776 = vpack.c.b16 %v1108, %v1104
    %v1777 = vpack.c.b16 %v1109, %v1105
    %v1778 = vpack.c.b16 %v1110, %v1106
    %v1779 = vpack.c.b16 %v1115, %v1111
    %v1780 = vpack.c.b16 %v1116, %v1112
    %v1781 = vpack.c.b16 %v1117, %v1113
    %v1782 = vpack.c.b16 %v1118, %v1114
    %v1783 = vpack.c.b16 %v1123, %v1119
    %v1784 = vpack.c.b16 %v1124, %v1120
    %v1785 = vpack.c.b16 %v1125, %v1121
    %v1786 = vpack.c.b16 %v1126, %v1122
    %v1787 = vpack.c.b16 %v1131, %v1127
    %v1788 = vpack.c.b16 %v1132, %v1128
    %v1789 = vpack.c.b16 %v1133, %v1129
    %v1790 = vpack.c.b16 %v1134, %v1130
    %v1791 = vpack.c.b16 %v1139, %v1135
    %v1792 = vpack.c.b16 %v1140, %v1136
    %v1793 = vpack.c.b16 %v1141, %v1137
    %v1794 = vpack.c.b16 %v1142, %v1138
    %v1795 = vpack.c.b16 %v1147, %v1143
    %v1796 = vpack.c.b16 %v1148, %v1144
    %v1797 = vpack.c.b16 %v1149, %v1145
    %v1798 = vpack.c.b16 %v1150, %v1146
    %v1799 = vpack.c.b16 %v1155, %v1151
    %v1800 = vpack.c.b16 %v1156, %v1152
    %v1801 = vpack.c.b16 %v1157, %v1153
    %v1802 = vpack.c.b16 %v1158, %v1154
    %v1803 = vpack.c.b16 %v1163, %v1159
    %v1804 = vpack.c.b16 %v1164, %v1160
    %v1805 = vpack.c.b16 %v1165, %v1161
    %v1806 = vpack.c.b16 %v1166, %v1162
    %v1807 = vpack.c.b16 %v1171, %v1167
    %v1808 = vpack.c.b16 %v1172, %v1168
    %v1809 = vpack.c.b16 %v1173, %v1169
    %v1810 = vpack.c.b16 %v1174, %v1170
    %v1811 = vpack.c.b16 %v1179, %v1175
    %v1812 = vpack.c.b16 %v1180, %v1176
    %v1813 = vpack.c.b16 %v1181, %v1177
    %v1814 = vpack.c.b16 %v1182, %v1178
    %v1815 = vpack.c.b16 %v1187, %v1183
    %v1816 = vpack.c.b16 %v1188, %v1184
    %v1817 = vpack.c.b16 %v1189, %v1185
    %v1818 = vpack.c.b16 %v1190, %v1186
    %v1819 = vpack.c.b16 %v1195, %v1191
    %v1820 = vpack.c.b16 %v1196, %v1192
    %v1821 = vpack.c.b16 %v1197, %v1193
    %v1822 = vpack.c.b16 %v1198, %v1194
    %v1823 = vpack.c.b16 %v1203, %v1199
    %v1824 = vpack.c.b16 %v1204, %v1200
    %v1825 = vpack.c.b16 %v1205, %v1201
    %v1826 = vpack.c.b16 %v1206, %v1202
    %v1827 = vpack.c.b16 %v1211, %v1207
    %v1828 = vpack.c.b16 %v1212, %v1208
    %v1829 = vpack.c.b16 %v1213, %v1209
    %v1830 = vpack.c.b16 %v1214, %v1210
    %v1831 = vpack.c.b16 %v1219, %v1215
    %v1832 = vpack.c.b16 %v1220, %v1216
    %v1833 = vpack.c.b16 %v1221, %v1217
    %v1834 = vpack.c.b16 %v1222, %v1218
    %v1835 = vpack.c.b16 %v1227, %v1223
    %v1836 = vpack.c.b16 %v1228, %v1224
    %v1837 = vpack.c.b16 %v1229, %v1225
    %v1838 = vpack.c.b16 %v1230, %v1226
    %v1839 = vpack.c.b16 %v1235, %v1231
    %v1840 = vpack.c.b16 %v1236, %v1232
    %v1841 = vpack.c.b16 %v1237, %v1233
    %v1842 = vpack.c.b16 %v1238, %v1234
    %v1843 = vpack.c.b16 %v1243, %v1239
    %v1844 = vpack.c.b16 %v1244, %v1240
    %v1845 = vpack.c.b16 %v1245, %v1241
    %v1846 = vpack.c.b16 %v1246, %v1242
    %v1847 = vpack.c.b16 %v1251, %v1247
    %v1848 = vpack.c.b16 %v1252, %v1248
    %v1849 = vpack.c.b16 %v1253, %v1249
    %v1850 = vpack.c.b16 %v1254, %v1250
    %v1851 = vpack.c.b16 %v1259, %v1255
    %v1852 = vpack.c.b16 %v1260, %v1256
    %v1853 = vpack.c.b16 %v1261, %v1257
    %v1854 = vpack.c.b16 %v1262, %v1258
    %v1855 = vpack.c.b16 %v1267, %v1263
    %v1856 = vpack.c.b16 %v1268, %v1264
    %v1857 = vpack.c.b16 %v1269, %v1265
    %v1858 = vpack.c.b16 %v1270, %v1266
    %v1859 = vpack.c.b16 %v1275, %v1271
    %v1860 = vpack.c.b16 %v1276, %v1272
    %v1861 = vpack.c.b16 %v1277, %v1273
    %v1862 = vpack.c.b16 %v1278, %v1274
    %v1863 = vpack.c.b16 %v1283, %v1279
    %v1864 = vpack.c.b16 %v1284, %v1280
    %v1865 = vpack.c.b16 %v1285, %v1281
    %v1866 = vpack.c.b16 %v1286, %v1282
    %v1867 = vpack.c.b16 %v1291, %v1287
    %v1868 = vpack.c.b16 %v1292, %v1288
    %v1869 = vpack.c.b16 %v1293, %v1289
    %v1870 = vpack.c.b16 %v1294, %v1290
    %v1871 = vpack.c.b16 %v1299, %v1295
    %v1872 = vpack.c.b16 %v1300, %v1296
    %v1873 = vpack.c.b16 %v1301, %v1297
    %v1874 = vpack.c.b16 %v1302, %v1298
    %v1875 = vpack.c.b16 %v1307, %v1303
    %v1876 = vpack.c.b16 %v1308, %v1304
    %v1877 = vpack.c.b16 %v1309, %v1305
    %v1878 = vpack.c.b16 %v1310, %v1306
    %v1879 = vpack.c.b16 %v1315, %v1311
    %v1880 = vpack.c.b16 %v1316, %v1312
    %v1881 = vpack.c.b16 %v1317, %v1313
    %v1882 = vpack.c.b16 %v1318, %v1314
    %v1883 = vpack.c.b16 %v1323, %v1319
    %v1884 = vpack.c.b16 %v1324, %v1320
    %v1885 = vpack.c.b16 %v1325, %v1321
    %v1886 = vpack.c.b16 %v1326, %v1322
    %v1887 = vpack.c.b16 %v1331, %v1327
    %v1888 = vpack.c.b16 %v1332, %v1328
    %v1889 = vpack.c.b16 %v1333, %v1329
    %v1890 = vpack.c.b16 %v1334, %v1330
    %v1891 = vpack.c.b16 %v1339, %v1335
    %v1892 = vpack.c.b16 %v1340, %v1336
    %v1893 = vpack.c.b16 %v1341, %v1337
    %v1894 = vpack.c.b16 %v1342, %v1338
    %v1895 = vpack.c.b16 %v1347, %v1343
    %v1896 = vpack.c.b16 %v1348, %v1344
    %v1897 = vpack.c.b16 %v1349, %v1345
    %v1898 = vpack.c.b16 %v1350, %v1346
    %v1899 = vpack.c.b16 %v1355, %v1351
    %v1900 = vpack.c.b16 %v1356, %v1352
    %v1901 = vpack.c.b16 %v1357, %v1353
    %v1902 = vpack.c.b16 %v1358, %v1354
    %v1903 = vpack.c.b16 %v1363, %v1359
    %v1904 = vpack.c.b16 %v1364, %v1360
    %v1905 = vpack.c.b16 %v1365, %v1361
    %v1906 = vpack.c.b16 %v1366, %v1362
    %v1907 = vpack.c.b16 %v1371, %v1367
    %v1908 = vpack.c.b16 %v1372, %v1368
    %v1909 = vpack.c.b16 %v1373, %v1369
    %v1910 = vpack.c.b16 %v1374, %v1370
    %v1911 = vpack.c.b16 %v1379, %v1375
    %v1912 = vpack.c.b16 %v1380, %v1376
    %v1913 = vpack.c.b16 %v1381, %v1377
    %v1914 = vpack.c.b16 %v1382, %v1378
    %v1915 = vpack.c.b16 %v1387, %v1383
    %v1916 = vpack.c.b16 %v1388, %v1384
    %v1917 = vpack.c.b16 %v1389, %v1385
    %v1918 = vpack.c.b16 %v1390, %v1386
    %v1919 = vpack.c.b16 %v1395, %v1391
    %v1920 = vpack.c.b16 %v1396, %v1392
    %v1921 = vpack.c.b16 %v1397, %v1393
    %v1922 = vpack.c.b16 %v1398, %v1394
    %v1923 = vpack.c.b16 %v1403, %v1399
    %v1924 = vpack.c.b16 %v1404, %v1400
    %v1925 = vpack.c.b16 %v1405, %v1401
    %v1926 = vpack.c.b16 %v1406, %v1402
    %v1927 = vpack.c.b16 %v1411, %v1407
    %v1928 = vpack.c.b16 %v1412, %v1408
    %v1929 = vpack.c.b16 %v1413, %v1409
    %v1930 = vpack.c.b16 %v1414, %v1410
    %v1931 = vpack.c.b16 %v1419, %v1415
    %v1932 = vpack.c.b16 %v1420, %v1416
    %v1933 = vpack.c.b16 %v1421, %v1417
    %v1934 = vpack.c.b16 %v1422, %v1418
    %v1935 = vpack.c.b16 %v1427, %v1423
    %v1936 = vpack.c.b16 %v1428, %v1424
    %v1937 = vpack.c.b16 %v1429, %v1425
    %v1938 = vpack.c.b16 %v1430, %v1426
    %v1939 = vpack.c.b16 %v1435, %v1431
    %v1940 = vpack.c.b16 %v1436, %v1432
    %v1941 = vpack.c.b16 %v1437, %v1433
    %v1942 = vpack.c.b16 %v1438, %v1434
    %v1943 = vpack.c.b16 %v1443, %v1439
    %v1944 = vpack.c.b16 %v1444, %v1440
    %v1945 = vpack.c.b16 %v1445, %v1441
    %v1946 = vpack.c.b16 %v1446, %v1442
    %v1947 = vpack.c.b16 %v1451, %v1447
    %v1948 = vpack.c.b16 %v1452, %v1448
    %v1949 = vpack.c.b16 %v1453, %v1449
    %v1950 = vpack.c.b16 %v1454, %v1450
    %v1951 = vpack.c.b16 %v1459, %v1455
    %v1952 = vpack.c.b16 %v1460, %v1456
    %v1953 = vpack.c.b16 %v1461, %v1457
    %v1954 = vpack.c.b16 %v1462, %v1458
    %v1955 = vpack.c.b16 %v1467, %v1463
    %v1956 = vpack.c.b16 %v1468, %v1464
    %v1957 = vpack.c.b16 %v1469, %v1465
    %v1958 = vpack.c.b16 %v1470, %v1466
    %v1959 = vpack.c.b16 %v1475, %v1471
    %v1960 = vpack.c.b16 %v1476, %v1472
    %v1961 = vpack.c.b16 %v1477, %v1473
    %v1962 = vpack.c.b16 %v1478, %v1474
    %v1963 = vpack.c.b16 %v1483, %v1479
    %v1964 = vpack.c.b16 %v1484, %v1480
    %v1965 = vpack.c.b16 %v1485, %v1481
    %v1966 = vpack.c.b16 %v1486, %v1482
    %v1967 = vpack.c.b16 %v1491, %v1487
    %v1968 = vpack.c.b16 %v1492, %v1488
    %v1969 = vpack.c.b16 %v1493, %v1489
    %v1970 = vpack.c.b16 %v1494, %v1490
    %v1971 = vpack.c.b16 %v1499, %v1495
    %v1972 = vpack.c.b16 %v1500, %v1496
    %v1973 = vpack.c.b16 %v1501, %v1497
    %v1974 = vpack.c.b16 %v1502, %v1498
    %v1975 = vpack.c.b16 %v1507, %v1503
    %v1976 = vpack.c.b16 %v1508, %v1504
    %v1977 = vpack.c.b16 %v1509, %v1505
    %v1978 = vpack.c.b16 %v1510, %v1506
    %v1979 = vpack.c.b16 %v1515, %v1511
    %v1980 = vpack.c.b16 %v1516, %v1512
    %v1981 = vpack.c.b16 %v1517, %v1513
    %v1982 = vpack.c.b16 %v1518, %v1514
    %v1983 = vpack.c.b16 %v1523, %v1519
    %v1984 = vpack.c.b16 %v1524, %v1520
    %v1985 = vpack.c.b16 %v1525, %v1521
    %v1986 = vpack.c.b16 %v1526, %v1522
    %v1987 = vpack.c.b16 %v1531, %v1527
    %v1988 = vpack.c.b16 %v1532, %v1528
    %v1989 = vpack.c.b16 %v1533, %v1529
    %v1990 = vpack.c.b16 %v1534, %v1530
    %v1991 = vpack.c.b16 %v1539, %v1535
    %v1992 = vpack.c.b16 %v1540, %v1536
    %v1993 = vpack.c.b16 %v1541, %v1537
    %v1994 = vpack.c.b16 %v1542, %v1538
    %v1995 = vpack.c.b16 %v1547, %v1543
    %v1996 = vpack.c.b16 %v1548, %v1544
    %v1997 = vpack.c.b16 %v1549, %v1545
    %v1998 = vpack.c.b16 %v1550, %v1546
    %v1999 = vpack.c.b16 %v1555, %v1551
    %v2000 = vpack.c.b16 %v1556, %v1552
    %v2001 = vpack.c.b16 %v1557, %v1553
    %v2002 = vpack.c.b16 %v1558, %v1554
    %v2003 = vpack.c.b16 %v1563, %v1559
    %v2004 = vpack.c.b16 %v1564, %v1560
    %v2005 = vpack.c.b16 %v1565, %v1561
    %v2006 = vpack.c.b16 %v1566, %v1562
    %v2007 = vpack.c.b16 %v1571, %v1567
    %v2008 = vpack.c.b16 %v1572, %v1568
    %v2009 = vpack.c.b16 %v1573, %v1569
    %v2010 = vpack.c.b16 %v1574, %v1570
    %v2011 = vpack.c.b16 %v1579, %v1575
    %v2012 = vpack.c.b16 %v1580, %v1576
    %v2013 = vpack.c.b16 %v1581, %v1577
    %v2014 = vpack.c.b16 %v1582, %v1578
    %v2015 = vpack.c.b16 %v1587, %v1583
    %v2016 = vpack.c.b16 %v1588, %v1584
    %v2017 = vpack.c.b16 %v1589, %v1585
    %v2018 = vpack.c.b16 %v1590, %v1586
    %v2019 = vpack.c.b16 %v1595, %v1591
    %v2020 = vpack.c.b16 %v1596, %v1592
    %v2021 = vpack.c.b16 %v1597, %v1593
    %v2022 = vpack.c.b16 %v1598, %v1594
    %v2023 = vpack.c.b16 %v1603, %v1599
    %v2024 = vpack.c.b16 %v1604, %v1600
    %v2025 = vpack.c.b16 %v1605, %v1601
    %v2026 = vpack.c.b16 %v1606, %v1602
    %v2027 = vpack.c.b16 %v1611, %v1607
    %v2028 = vpack.c.b16 %v1612, %v1608
    %v2029 = vpack.c.b16 %v1613, %v1609
    %v2030 = vpack.c.b16 %v1614, %v1610
    %v2031 = vpack.c.b16 %v1619, %v1615
    %v2032 = vpack.c.b16 %v1620, %v1616
    %v2033 = vpack.c.b16 %v1621, %v1617
    %v2034 = vpack.c.b16 %v1622, %v1618
    %v2035 = vpack.c.b16 %v1627, %v1623
    %v2036 = vpack.c.b16 %v1628, %v1624
    %v2037 = vpack.c.b16 %v1629, %v1625
    %v2038 = vpack.c.b16 %v1630, %v1626
    %v2039 = vpack.c.b16 %v1635, %v1631
    %v2040 = vpack.c.b16 %v1636, %v1632
    %v2041 = vpack.c.b16 %v1637, %v1633
    %v2042 = vpack.c.b16 %v1638, %v1634
    %v2043 = vpack.c.b16 %v1643, %v1639
    %v2044 = vpack.c.b16 %v1644, %v1640
    %v2045 = vpack.c.b16 %v1645, %v1641
    %v2046 = vpack.c.b16 %v1646, %v1642
    %v2047 = vpack.c.b16 %v1651, %v1647
    %v2048 = vpack.c.b16 %v1652, %v1648
    %v2049 = vpack.c.b16 %v1653, %v1649
    %v2050 = vpack.c.b16 %v1654, %v1650
    %v2051 = vpack.c.b16 %v1659, %v1655
    %v2052 = vpack.c.b16 %v1660, %v1656
    %v2053 = vpack.c.b16 %v1661, %v1657
    %v2054 = vpack.c.b16 %v1662, %v1658
    %v2055 = vpack.c.b16 %v1667, %v1663
    %v2056 = vpack.c.b16 %v1668, %v1664
    %v2057 = vpack.c.b16 %v1669, %v1665
    %v2058 = vpack.c.b16 %v1670, %v1666
    %v2059 = vpack.c.b16 %v1675, %v1671
    %v2060 = vpack.c.b16 %v1676, %v1672
    %v2061 = vpack.c.b16 %v1677, %v1673
    %v2062 = vpack.c.b16 %v1678, %v1674
    %2447 = vmatprep.subr.bf16.mxu0 %v1680
    %2448 = vmatpush1.bf16.msra.mxu0 %v1679
    %2449 = vmatprep.subr.bf16.mxu0 %v1684
    %2450 = vmatpush1.bf16.msra.mxu0 %v1683
    %2451 = vmatprep.subr.bf16.mxu0 %v1688
    %2452 = vmatpush1.bf16.msra.mxu0 %v1687
    %2453 = vmatprep.subr.bf16.mxu0 %v1692
    %2454 = vmatpush1.bf16.msra.mxu0 %v1691
    %2455 = vmatprep.subr.bf16.mxu0 %v1696
    %2456 = vmatpush1.bf16.msra.mxu0 %v1695
    %2457 = vmatprep.subr.bf16.mxu0 %v1700
    %2458 = vmatpush1.bf16.msra.mxu0 %v1699
    %2459 = vmatprep.subr.bf16.mxu0 %v1704
    %2460 = vmatpush1.bf16.msra.mxu0 %v1703
    %2461 = vmatprep.subr.bf16.mxu0 %v1708
    %2462 = vmatpush1.bf16.msra.mxu0 %v1707
    %2463 = vmatprep.subr.bf16.mxu0 %v1712
    %2464 = vmatpush1.bf16.msra.mxu0 %v1711
    %2465 = vmatprep.subr.bf16.mxu0 %v1716
    %2466 = vmatpush1.bf16.msra.mxu0 %v1715
    %2467 = vmatprep.subr.bf16.mxu0 %v1720
    %2468 = vmatpush1.bf16.msra.mxu0 %v1719
    %2469 = vmatprep.subr.bf16.mxu0 %v1724
    %2470 = vmatpush1.bf16.msra.mxu0 %v1723
    %2471 = vmatprep.subr.bf16.mxu0 %v1728
    %2472 = vmatpush1.bf16.msra.mxu0 %v1727
    %2473 = vmatprep.subr.bf16.mxu0 %v1732
    %2474 = vmatpush1.bf16.msra.mxu0 %v1731
    %2475 = vmatprep.subr.bf16.mxu0 %v1736
    %2476 = vmatpush1.bf16.msra.mxu0 %v1735
    %2477 = vmatprep.subr.bf16.mxu0 %v1740
    %2478 = vmatpush1.bf16.msra.mxu0 %v1739
    %2479 = vmatprep.mubr.bf16.mxu0 %v132
    %2480 = vmatmul.mubr.bf16.gmra.mrb[0].mxu0 %v131
    %v2481 = vpop.f32.mrb[0].mxu0
    %v2482 = vadd.f32 0.0, %v2481
    %v2483 = vpop.f32.mrb[0].mxu0
    %v2484 = vadd.f32 0.0, %v2483
    %v2485 = vpop.f32.mrb[0].mxu0
    %v2486 = vadd.f32 0.0, %v2485
    %v2487 = vpop.f32.mrb[0].mxu0
    %v2488 = vadd.f32 0.0, %v2487
    %2489 = vdwg.mxu0
    %2490 = vmatprep.subr.bf16.mxu0 %v1744
    %2491 = vmatpush1.bf16.msra.mxu0 %v1743
    %2492 = vmatprep.subr.bf16.mxu0 %v1748
    %2493 = vmatpush1.bf16.msra.mxu0 %v1747
    %2494 = vmatprep.subr.bf16.mxu0 %v1752
    %2495 = vmatpush1.bf16.msra.mxu0 %v1751
    %2496 = vmatprep.subr.bf16.mxu0 %v1756
    %2497 = vmatpush1.bf16.msra.mxu0 %v1755
    %2498 = vmatprep.subr.bf16.mxu0 %v1760
    %2499 = vmatpush1.bf16.msra.mxu0 %v1759
    %2500 = vmatprep.subr.bf16.mxu0 %v1764
    %2501 = vmatpush1.bf16.msra.mxu0 %v1763
    %2502 = vmatprep.subr.bf16.mxu0 %v1768
    %2503 = vmatpush1.bf16.msra.mxu0 %v1767
    %2504 = vmatprep.subr.bf16.mxu0 %v1772
    %2505 = vmatpush1.bf16.msra.mxu0 %v1771
    %2506 = vmatprep.subr.bf16.mxu0 %v1776
    %2507 = vmatpush1.bf16.msra.mxu0 %v1775
    %2508 = vmatprep.subr.bf16.mxu0 %v1780
    %2509 = vmatpush1.bf16.msra.mxu0 %v1779
    %2510 = vmatprep.subr.bf16.mxu0 %v1784
    %2511 = vmatpush1.bf16.msra.mxu0 %v1783
    %2512 = vmatprep.subr.bf16.mxu0 %v1788
    %2513 = vmatpush1.bf16.msra.mxu0 %v1787
    %2514 = vmatprep.subr.bf16.mxu0 %v1792
    %2515 = vmatpush1.bf16.msra.mxu0 %v1791
    %2516 = vmatprep.subr.bf16.mxu0 %v1796
    %2517 = vmatpush1.bf16.msra.mxu0 %v1795
    %2518 = vmatprep.subr.bf16.mxu0 %v1800
    %2519 = vmatpush1.bf16.msra.mxu0 %v1799
    %2520 = vmatprep.subr.bf16.mxu0 %v1804
    %2521 = vmatpush1.bf16.msra.mxu0 %v1803
    %2522 = vmatprep.mubr.bf16.mxu0 %v134
    %2523 = vmatmul.mubr.bf16.gmra.mrb[0].mxu0 %v133
    %v2524 = vpop.f32.mrb[0].mxu0
    %v2525 = vadd.f32 %v2482, %v2524
    %v2526 = vpop.f32.mrb[0].mxu0
    %v2527 = vadd.f32 %v2484, %v2526
    %v2528 = vpop.f32.mrb[0].mxu0
    %v2529 = vadd.f32 %v2486, %v2528
    %v2530 = vpop.f32.mrb[0].mxu0
    %v2531 = vadd.f32 %v2488, %v2530
    %2532 = vdwg.mxu0
    %2533 = vmatprep.subr.bf16.mxu0 %v1808
    %2534 = vmatpush1.bf16.msra.mxu0 %v1807
    %2535 = vmatprep.subr.bf16.mxu0 %v1812
    %2536 = vmatpush1.bf16.msra.mxu0 %v1811
    %2537 = vmatprep.subr.bf16.mxu0 %v1816
    %2538 = vmatpush1.bf16.msra.mxu0 %v1815
    %2539 = vmatprep.subr.bf16.mxu0 %v1820
    %2540 = vmatpush1.bf16.msra.mxu0 %v1819
    %2541 = vmatprep.subr.bf16.mxu0 %v1824
    %2542 = vmatpush1.bf16.msra.mxu0 %v1823
    %2543 = vmatprep.subr.bf16.mxu0 %v1828
    %2544 = vmatpush1.bf16.msra.mxu0 %v1827
    %2545 = vmatprep.subr.bf16.mxu0 %v1832
    %2546 = vmatpush1.bf16.msra.mxu0 %v1831
    %2547 = vmatprep.subr.bf16.mxu0 %v1836
    %2548 = vmatpush1.bf16.msra.mxu0 %v1835
    %2549 = vmatprep.subr.bf16.mxu0 %v1840
    %2550 = vmatpush1.bf16.msra.mxu0 %v1839
    %2551 = vmatprep.subr.bf16.mxu0 %v1844
    %2552 = vmatpush1.bf16.msra.mxu0 %v1843
    %2553 = vmatprep.subr.bf16.mxu0 %v1848
    %2554 = vmatpush1.bf16.msra.mxu0 %v1847
    %2555 = vmatprep.subr.bf16.mxu0 %v1852
    %2556 = vmatpush1.bf16.msra.mxu0 %v1851
    %2557 = vmatprep.subr.bf16.mxu0 %v1856
    %2558 = vmatpush1.bf16.msra.mxu0 %v1855
    %2559 = vmatprep.subr.bf16.mxu0 %v1860
    %2560 = vmatpush1.bf16.msra.mxu0 %v1859
    %2561 = vmatprep.subr.bf16.mxu0 %v1864
    %2562 = vmatpush1.bf16.msra.mxu0 %v1863
    %2563 = vmatprep.subr.bf16.mxu0 %v1868
    %2564 = vmatpush1.bf16.msra.mxu0 %v1867
    %2565 = vmatprep.mubr.bf16.mxu0 %v136
    %2566 = vmatmul.mubr.bf16.gmra.mrb[0].mxu0 %v135
    %v2567 = vpop.f32.mrb[0].mxu0
    %v2568 = vadd.f32 %v2525, %v2567
    %v2569 = vpop.f32.mrb[0].mxu0
    %v2570 = vadd.f32 %v2527, %v2569
    %v2571 = vpop.f32.mrb[0].mxu0
    %v2572 = vadd.f32 %v2529, %v2571
    %v2573 = vpop.f32.mrb[0].mxu0
    %v2574 = vadd.f32 %v2531, %v2573
    %2575 = vdwg.mxu0
    %2576 = vmatprep.subr.bf16.mxu0 %v1872
    %2577 = vmatpush1.bf16.msra.mxu0 %v1871
    %2578 = vmatprep.subr.bf16.mxu0 %v1876
    %2579 = vmatpush1.bf16.msra.mxu0 %v1875
    %2580 = vmatprep.subr.bf16.mxu0 %v1880
    %2581 = vmatpush1.bf16.msra.mxu0 %v1879
    %2582 = vmatprep.subr.bf16.mxu0 %v1884
    %2583 = vmatpush1.bf16.msra.mxu0 %v1883
    %2584 = vmatprep.subr.bf16.mxu0 %v1888
    %2585 = vmatpush1.bf16.msra.mxu0 %v1887
    %2586 = vmatprep.subr.bf16.mxu0 %v1892
    %2587 = vmatpush1.bf16.msra.mxu0 %v1891
    %2588 = vmatprep.subr.bf16.mxu0 %v1896
    %2589 = vmatpush1.bf16.msra.mxu0 %v1895
    %2590 = vmatprep.subr.bf16.mxu0 %v1900
    %2591 = vmatpush1.bf16.msra.mxu0 %v1899
    %2592 = vmatprep.subr.bf16.mxu0 %v1904
    %2593 = vmatpush1.bf16.msra.mxu0 %v1903
    %2594 = vmatprep.subr.bf16.mxu0 %v1908
    %2595 = vmatpush1.bf16.msra.mxu0 %v1907
    %2596 = vmatprep.subr.bf16.mxu0 %v1912
    %2597 = vmatpush1.bf16.msra.mxu0 %v1911
    %2598 = vmatprep.subr.bf16.mxu0 %v1916
    %2599 = vmatpush1.bf16.msra.mxu0 %v1915
    %2600 = vmatprep.subr.bf16.mxu0 %v1920
    %2601 = vmatpush1.bf16.msra.mxu0 %v1919
    %2602 = vmatprep.subr.bf16.mxu0 %v1924
    %2603 = vmatpush1.bf16.msra.mxu0 %v1923
    %2604 = vmatprep.subr.bf16.mxu0 %v1928
    %2605 = vmatpush1.bf16.msra.mxu0 %v1927
    %2606 = vmatprep.subr.bf16.mxu0 %v1932
    %2607 = vmatpush1.bf16.msra.mxu0 %v1931
    %2608 = vmatprep.mubr.bf16.mxu0 %v138
    %2609 = vmatmul.mubr.bf16.gmra.mrb[0].mxu0 %v137
    %v2610 = vpop.f32.mrb[0].mxu0
    %v2611 = vadd.f32 %v2568, %v2610
    %v2612 = vpop.f32.mrb[0].mxu0
    %v2613 = vadd.f32 %v2570, %v2612
    %v2614 = vpop.f32.mrb[0].mxu0
    %v2615 = vadd.f32 %v2572, %v2614
    %v2616 = vpop.f32.mrb[0].mxu0
    %v2617 = vadd.f32 %v2574, %v2616
    %2618 = vdwg.mxu0
    %2619 = vmatprep.subr.bf16.mxu0 %v1936
    %2620 = vmatpush1.bf16.msra.mxu0 %v1935
    %2621 = vmatprep.subr.bf16.mxu0 %v1940
    %2622 = vmatpush1.bf16.msra.mxu0 %v1939
    %2623 = vmatprep.subr.bf16.mxu0 %v1944
    %2624 = vmatpush1.bf16.msra.mxu0 %v1943
    %2625 = vmatprep.subr.bf16.mxu0 %v1948
    %2626 = vmatpush1.bf16.msra.mxu0 %v1947
    %2627 = vmatprep.subr.bf16.mxu0 %v1952
    %2628 = vmatpush1.bf16.msra.mxu0 %v1951
    %2629 = vmatprep.subr.bf16.mxu0 %v1956
    %2630 = vmatpush1.bf16.msra.mxu0 %v1955
    %2631 = vmatprep.subr.bf16.mxu0 %v1960
    %2632 = vmatpush1.bf16.msra.mxu0 %v1959
    %2633 = vmatprep.subr.bf16.mxu0 %v1964
    %2634 = vmatpush1.bf16.msra.mxu0 %v1963
    %2635 = vmatprep.subr.bf16.mxu0 %v1968
    %2636 = vmatpush1.bf16.msra.mxu0 %v1967
    %2637 = vmatprep.subr.bf16.mxu0 %v1972
    %2638 = vmatpush1.bf16.msra.mxu0 %v1971
    %2639 = vmatprep.subr.bf16.mxu0 %v1976
    %2640 = vmatpush1.bf16.msra.mxu0 %v1975
    %2641 = vmatprep.subr.bf16.mxu0 %v1980
    %2642 = vmatpush1.bf16.msra.mxu0 %v1979
    %2643 = vmatprep.subr.bf16.mxu0 %v1984
    %2644 = vmatpush1.bf16.msra.mxu0 %v1983
    %2645 = vmatprep.subr.bf16.mxu0 %v1988
    %2646 = vmatpush1.bf16.msra.mxu0 %v1987
    %2647 = vmatprep.subr.bf16.mxu0 %v1992
    %2648 = vmatpush1.bf16.msra.mxu0 %v1991
    %2649 = vmatprep.subr.bf16.mxu0 %v1996
    %2650 = vmatpush1.bf16.msra.mxu0 %v1995
    %2651 = vmatprep.mubr.bf16.mxu0 %v140
    %2652 = vmatmul.mubr.bf16.gmra.mrb[0].mxu0 %v139
    %v2653 = vpop.f32.mrb[0].mxu0
    %v2654 = vadd.f32 %v2611, %v2653
    %v2655 = vpop.f32.mrb[0].mxu0
    %v2656 = vadd.f32 %v2613, %v2655
    %v2657 = vpop.f32.mrb[0].mxu0
    %v2658 = vadd.f32 %v2615, %v2657
    %v2659 = vpop.f32.mrb[0].mxu0
    %v2660 = vadd.f32 %v2617, %v2659
    %2661 = vdwg.mxu0
    %2662 = vmatprep.subr.bf16.mxu0 %v2000
    %2663 = vmatpush1.bf16.msra.mxu0 %v1999
    %2664 = vmatprep.subr.bf16.mxu0 %v2004
    %2665 = vmatpush1.bf16.msra.mxu0 %v2003
    %2666 = vmatprep.subr.bf16.mxu0 %v2008
    %2667 = vmatpush1.bf16.msra.mxu0 %v2007
    %2668 = vmatprep.subr.bf16.mxu0 %v2012
    %2669 = vmatpush1.bf16.msra.mxu0 %v2011
    %2670 = vmatprep.subr.bf16.mxu0 %v2016
    %2671 = vmatpush1.bf16.msra.mxu0 %v2015
    %2672 = vmatprep.subr.bf16.mxu0 %v2020
    %2673 = vmatpush1.bf16.msra.mxu0 %v2019
    %2674 = vmatprep.subr.bf16.mxu0 %v2024
    %2675 = vmatpush1.bf16.msra.mxu0 %v2023
    %2676 = vmatprep.subr.bf16.mxu0 %v2028
    %2677 = vmatpush1.bf16.msra.mxu0 %v2027
    %2678 = vmatprep.subr.bf16.mxu0 %v2032
    %2679 = vmatpush1.bf16.msra.mxu0 %v2031
    %2680 = vmatprep.subr.bf16.mxu0 %v2036
    %2681 = vmatpush1.bf16.msra.mxu0 %v2035
    %2682 = vmatprep.subr.bf16.mxu0 %v2040
    %2683 = vmatpush1.bf16.msra.mxu0 %v2039
    %2684 = vmatprep.subr.bf16.mxu0 %v2044
    %2685 = vmatpush1.bf16.msra.mxu0 %v2043
    %2686 = vmatprep.subr.bf16.mxu0 %v2048
    %2687 = vmatpush1.bf16.msra.mxu0 %v2047
    %2688 = vmatprep.subr.bf16.mxu0 %v2052
    %2689 = vmatpush1.bf16.msra.mxu0 %v2051
    %2690 = vmatprep.subr.bf16.mxu0 %v2056
    %2691 = vmatpush1.bf16.msra.mxu0 %v2055
    %2692 = vmatprep.subr.bf16.mxu0 %v2060
    %2693 = vmatpush1.bf16.msra.mxu0 %v2059
    %2694 = vmatprep.mubr.bf16.mxu0 %v142
    %2695 = vmatmul.mubr.bf16.gmra.mrb[0].mxu0 %v141
    %v2696 = vpop.f32.mrb[0].mxu0
    %v2697 = vadd.f32 %v2654, %v2696
    %v2698 = vpop.f32.mrb[0].mxu0
    %v2699 = vadd.f32 %v2656, %v2698
    %v2700 = vpop.f32.mrb[0].mxu0
    %v2701 = vadd.f32 %v2658, %v2700
    %v2702 = vpop.f32.mrb[0].mxu0
    %v2703 = vadd.f32 %v2660, %v2702
    %2704 = vdwg.mxu0
    %2705 = vmatprep.subr.bf16.mxu0 %v1682
    %2706 = vmatpush1.bf16.msra.mxu0 %v1681
    %2707 = vmatprep.subr.bf16.mxu0 %v1686
    %2708 = vmatpush1.bf16.msra.mxu0 %v1685
    %2709 = vmatprep.subr.bf16.mxu0 %v1690
    %2710 = vmatpush1.bf16.msra.mxu0 %v1689
    %2711 = vmatprep.subr.bf16.mxu0 %v1694
    %2712 = vmatpush1.bf16.msra.mxu0 %v1693
    %2713 = vmatprep.subr.bf16.mxu0 %v1698
    %2714 = vmatpush1.bf16.msra.mxu0 %v1697
    %2715 = vmatprep.subr.bf16.mxu0 %v1702
    %2716 = vmatpush1.bf16.msra.mxu0 %v1701
    %2717 = vmatprep.subr.bf16.mxu0 %v1706
    %2718 = vmatpush1.bf16.msra.mxu0 %v1705
    %2719 = vmatprep.subr.bf16.mxu0 %v1710
    %2720 = vmatpush1.bf16.msra.mxu0 %v1709
    %2721 = vmatprep.subr.bf16.mxu0 %v1714
    %2722 = vmatpush1.bf16.msra.mxu0 %v1713
    %2723 = vmatprep.subr.bf16.mxu0 %v1718
    %2724 = vmatpush1.bf16.msra.mxu0 %v1717
    %2725 = vmatprep.subr.bf16.mxu0 %v1722
    %2726 = vmatpush1.bf16.msra.mxu0 %v1721
    %2727 = vmatprep.subr.bf16.mxu0 %v1726
    %2728 = vmatpush1.bf16.msra.mxu0 %v1725
    %2729 = vmatprep.subr.bf16.mxu0 %v1730
    %2730 = vmatpush1.bf16.msra.mxu0 %v1729
    %2731 = vmatprep.subr.bf16.mxu0 %v1734
    %2732 = vmatpush1.bf16.msra.mxu0 %v1733
    %2733 = vmatprep.subr.bf16.mxu0 %v1738
    %2734 = vmatpush1.bf16.msra.mxu0 %v1737
    %2735 = vmatprep.subr.bf16.mxu0 %v1742
    %2736 = vmatpush1.bf16.msra.mxu0 %v1741
    %2737 = vmatprep.mubr.bf16.mxu0 %v132
    %2738 = vmatmul.mubr.bf16.gmra.mrb[0].mxu0 %v131
    %v2739 = vpop.f32.mrb[0].mxu0
    %v2740 = vadd.f32 0.0, %v2739
    %v2741 = vpop.f32.mrb[0].mxu0
    %v2742 = vadd.f32 0.0, %v2741
    %v2743 = vpop.f32.mrb[0].mxu0
    %v2744 = vadd.f32 0.0, %v2743
    %v2745 = vpop.f32.mrb[0].mxu0
    %v2746 = vadd.f32 0.0, %v2745
    %2747 = vdwg.mxu0
    %2748 = vmatprep.subr.bf16.mxu0 %v1746
    %2749 = vmatpush1.bf16.msra.mxu0 %v1745
    %2750 = vmatprep.subr.bf16.mxu0 %v1750
    %2751 = vmatpush1.bf16.msra.mxu0 %v1749
    %2752 = vmatprep.subr.bf16.mxu0 %v1754
    %2753 = vmatpush1.bf16.msra.mxu0 %v1753
    %2754 = vmatprep.subr.bf16.mxu0 %v1758
    %2755 = vmatpush1.bf16.msra.mxu0 %v1757
    %2756 = vmatprep.subr.bf16.mxu0 %v1762
    %2757 = vmatpush1.bf16.msra.mxu0 %v1761
    %2758 = vmatprep.subr.bf16.mxu0 %v1766
    %2759 = vmatpush1.bf16.msra.mxu0 %v1765
    %2760 = vmatprep.subr.bf16.mxu0 %v1770
    %2761 = vmatpush1.bf16.msra.mxu0 %v1769
    %2762 = vmatprep.subr.bf16.mxu0 %v1774
    %2763 = vmatpush1.bf16.msra.mxu0 %v1773
    %2764 = vmatprep.subr.bf16.mxu0 %v1778
    %2765 = vmatpush1.bf16.msra.mxu0 %v1777
    %2766 = vmatprep.subr.bf16.mxu0 %v1782
    %2767 = vmatpush1.bf16.msra.mxu0 %v1781
    %2768 = vmatprep.subr.bf16.mxu0 %v1786
    %2769 = vmatpush1.bf16.msra.mxu0 %v1785
    %2770 = vmatprep.subr.bf16.mxu0 %v1790
    %2771 = vmatpush1.bf16.msra.mxu0 %v1789
    %2772 = vmatprep.subr.bf16.mxu0 %v1794
    %2773 = vmatpush1.bf16.msra.mxu0 %v1793
    %2774 = vmatprep.subr.bf16.mxu0 %v1798
    %2775 = vmatpush1.bf16.msra.mxu0 %v1797
    %2776 = vmatprep.subr.bf16.mxu0 %v1802
    %2777 = vmatpush1.bf16.msra.mxu0 %v1801
    %2778 = vmatprep.subr.bf16.mxu0 %v1806
    %2779 = vmatpush1.bf16.msra.mxu0 %v1805
    %2780 = vmatprep.mubr.bf16.mxu0 %v134
    %2781 = vmatmul.mubr.bf16.gmra.mrb[0].mxu0 %v133
    %v2782 = vpop.f32.mrb[0].mxu0
    %v2783 = vadd.f32 %v2740, %v2782
    %v2784 = vpop.f32.mrb[0].mxu0
    %v2785 = vadd.f32 %v2742, %v2784
    %v2786 = vpop.f32.mrb[0].mxu0
    %v2787 = vadd.f32 %v2744, %v2786
    %v2788 = vpop.f32.mrb[0].mxu0
    %v2789 = vadd.f32 %v2746, %v2788
    %2790 = vdwg.mxu0
    %2791 = vmatprep.subr.bf16.mxu0 %v1810
    %2792 = vmatpush1.bf16.msra.mxu0 %v1809
    %2793 = vmatprep.subr.bf16.mxu0 %v1814
    %2794 = vmatpush1.bf16.msra.mxu0 %v1813
    %2795 = vmatprep.subr.bf16.mxu0 %v1818
    %2796 = vmatpush1.bf16.msra.mxu0 %v1817
    %2797 = vmatprep.subr.bf16.mxu0 %v1822
    %2798 = vmatpush1.bf16.msra.mxu0 %v1821
    %2799 = vmatprep.subr.bf16.mxu0 %v1826
    %2800 = vmatpush1.bf16.msra.mxu0 %v1825
    %2801 = vmatprep.subr.bf16.mxu0 %v1830
    %2802 = vmatpush1.bf16.msra.mxu0 %v1829
    %2803 = vmatprep.subr.bf16.mxu0 %v1834
    %2804 = vmatpush1.bf16.msra.mxu0 %v1833
    %2805 = vmatprep.subr.bf16.mxu0 %v1838
    %2806 = vmatpush1.bf16.msra.mxu0 %v1837
    %2807 = vmatprep.subr.bf16.mxu0 %v1842
    %2808 = vmatpush1.bf16.msra.mxu0 %v1841
    %2809 = vmatprep.subr.bf16.mxu0 %v1846
    %2810 = vmatpush1.bf16.msra.mxu0 %v1845
    %2811 = vmatprep.subr.bf16.mxu0 %v1850
    %2812 = vmatpush1.bf16.msra.mxu0 %v1849
    %2813 = vmatprep.subr.bf16.mxu0 %v1854
    %2814 = vmatpush1.bf16.msra.mxu0 %v1853
    %2815 = vmatprep.subr.bf16.mxu0 %v1858
    %2816 = vmatpush1.bf16.msra.mxu0 %v1857
    %2817 = vmatprep.subr.bf16.mxu0 %v1862
    %2818 = vmatpush1.bf16.msra.mxu0 %v1861
    %2819 = vmatprep.subr.bf16.mxu0 %v1866
    %2820 = vmatpush1.bf16.msra.mxu0 %v1865
    %2821 = vmatprep.subr.bf16.mxu0 %v1870
    %2822 = vmatpush1.bf16.msra.mxu0 %v1869
    %2823 = vmatprep.mubr.bf16.mxu0 %v136
    %2824 = vmatmul.mubr.bf16.gmra.mrb[0].mxu0 %v135
    %v2825 = vpop.f32.mrb[0].mxu0
    %v2826 = vadd.f32 %v2783, %v2825
    %v2827 = vpop.f32.mrb[0].mxu0
    %v2828 = vadd.f32 %v2785, %v2827
    %v2829 = vpop.f32.mrb[0].mxu0
    %v2830 = vadd.f32 %v2787, %v2829
    %v2831 = vpop.f32.mrb[0].mxu0
    %v2832 = vadd.f32 %v2789, %v2831
    %2833 = vdwg.mxu0
    %2834 = vmatprep.subr.bf16.mxu0 %v1874
    %2835 = vmatpush1.bf16.msra.mxu0 %v1873
    %2836 = vmatprep.subr.bf16.mxu0 %v1878
    %2837 = vmatpush1.bf16.msra.mxu0 %v1877
    %2838 = vmatprep.subr.bf16.mxu0 %v1882
    %2839 = vmatpush1.bf16.msra.mxu0 %v1881
    %2840 = vmatprep.subr.bf16.mxu0 %v1886
    %2841 = vmatpush1.bf16.msra.mxu0 %v1885
    %2842 = vmatprep.subr.bf16.mxu0 %v1890
    %2843 = vmatpush1.bf16.msra.mxu0 %v1889
    %2844 = vmatprep.subr.bf16.mxu0 %v1894
    %2845 = vmatpush1.bf16.msra.mxu0 %v1893
    %2846 = vmatprep.subr.bf16.mxu0 %v1898
    %2847 = vmatpush1.bf16.msra.mxu0 %v1897
    %2848 = vmatprep.subr.bf16.mxu0 %v1902
    %2849 = vmatpush1.bf16.msra.mxu0 %v1901
    %2850 = vmatprep.subr.bf16.mxu0 %v1906
    %2851 = vmatpush1.bf16.msra.mxu0 %v1905
    %2852 = vmatprep.subr.bf16.mxu0 %v1910
    %2853 = vmatpush1.bf16.msra.mxu0 %v1909
    %2854 = vmatprep.subr.bf16.mxu0 %v1914
    %2855 = vmatpush1.bf16.msra.mxu0 %v1913
    %2856 = vmatprep.subr.bf16.mxu0 %v1918
    %2857 = vmatpush1.bf16.msra.mxu0 %v1917
    %2858 = vmatprep.subr.bf16.mxu0 %v1922
    %2859 = vmatpush1.bf16.msra.mxu0 %v1921
    %2860 = vmatprep.subr.bf16.mxu0 %v1926
    %2861 = vmatpush1.bf16.msra.mxu0 %v1925
    %2862 = vmatprep.subr.bf16.mxu0 %v1930
    %2863 = vmatpush1.bf16.msra.mxu0 %v1929
    %2864 = vmatprep.subr.bf16.mxu0 %v1934
    %2865 = vmatpush1.bf16.msra.mxu0 %v1933
    %2866 = vmatprep.mubr.bf16.mxu0 %v138
    %2867 = vmatmul.mubr.bf16.gmra.mrb[0].mxu0 %v137
    %v2868 = vpop.f32.mrb[0].mxu0
    %v2869 = vadd.f32 %v2826, %v2868
    %v2870 = vpop.f32.mrb[0].mxu0
    %v2871 = vadd.f32 %v2828, %v2870
    %v2872 = vpop.f32.mrb[0].mxu0
    %v2873 = vadd.f32 %v2830, %v2872
    %v2874 = vpop.f32.mrb[0].mxu0
    %v2875 = vadd.f32 %v2832, %v2874
    %2876 = vdwg.mxu0
    %2877 = vmatprep.subr.bf16.mxu0 %v1938
    %2878 = vmatpush1.bf16.msra.mxu0 %v1937
    %2879 = vmatprep.subr.bf16.mxu0 %v1942
    %2880 = vmatpush1.bf16.msra.mxu0 %v1941
    %2881 = vmatprep.subr.bf16.mxu0 %v1946
    %2882 = vmatpush1.bf16.msra.mxu0 %v1945
    %2883 = vmatprep.subr.bf16.mxu0 %v1950
    %2884 = vmatpush1.bf16.msra.mxu0 %v1949
    %2885 = vmatprep.subr.bf16.mxu0 %v1954
    %2886 = vmatpush1.bf16.msra.mxu0 %v1953
    %2887 = vmatprep.subr.bf16.mxu0 %v1958
    %2888 = vmatpush1.bf16.msra.mxu0 %v1957
    %2889 = vmatprep.subr.bf16.mxu0 %v1962
    %2890 = vmatpush1.bf16.msra.mxu0 %v1961
    %2891 = vmatprep.subr.bf16.mxu0 %v1966
    %2892 = vmatpush1.bf16.msra.mxu0 %v1965
    %2893 = vmatprep.subr.bf16.mxu0 %v1970
    %2894 = vmatpush1.bf16.msra.mxu0 %v1969
    %2895 = vmatprep.subr.bf16.mxu0 %v1974
    %2896 = vmatpush1.bf16.msra.mxu0 %v1973
    %2897 = vmatprep.subr.bf16.mxu0 %v1978
    %2898 = vmatpush1.bf16.msra.mxu0 %v1977
    %2899 = vmatprep.subr.bf16.mxu0 %v1982
    %2900 = vmatpush1.bf16.msra.mxu0 %v1981
    %2901 = vmatprep.subr.bf16.mxu0 %v1986
    %2902 = vmatpush1.bf16.msra.mxu0 %v1985
    %2903 = vmatprep.subr.bf16.mxu0 %v1990
    %2904 = vmatpush1.bf16.msra.mxu0 %v1989
    %2905 = vmatprep.subr.bf16.mxu0 %v1994
    %2906 = vmatpush1.bf16.msra.mxu0 %v1993
    %2907 = vmatprep.subr.bf16.mxu0 %v1998
    %2908 = vmatpush1.bf16.msra.mxu0 %v1997
    %2909 = vmatprep.mubr.bf16.mxu0 %v140
    %2910 = vmatmul.mubr.bf16.gmra.mrb[0].mxu0 %v139
    %v2911 = vpop.f32.mrb[0].mxu0
    %v2912 = vadd.f32 %v2869, %v2911
    %v2913 = vpop.f32.mrb[0].mxu0
    %v2914 = vadd.f32 %v2871, %v2913
    %v2915 = vpop.f32.mrb[0].mxu0
    %v2916 = vadd.f32 %v2873, %v2915
    %v2917 = vpop.f32.mrb[0].mxu0
    %v2918 = vadd.f32 %v2875, %v2917
    %2919 = vdwg.mxu0
    %2920 = vmatprep.subr.bf16.mxu0 %v2002
    %2921 = vmatpush1.bf16.msra.mxu0 %v2001
    %2922 = vmatprep.subr.bf16.mxu0 %v2006
    %2923 = vmatpush1.bf16.msra.mxu0 %v2005
    %2924 = vmatprep.subr.bf16.mxu0 %v2010
    %2925 = vmatpush1.bf16.msra.mxu0 %v2009
    %2926 = vmatprep.subr.bf16.mxu0 %v2014
    %2927 = vmatpush1.bf16.msra.mxu0 %v2013
    %2928 = vmatprep.subr.bf16.mxu0 %v2018
    %2929 = vmatpush1.bf16.msra.mxu0 %v2017
    %2930 = vmatprep.subr.bf16.mxu0 %v2022
    %2931 = vmatpush1.bf16.msra.mxu0 %v2021
    %2932 = vmatprep.subr.bf16.mxu0 %v2026
    %2933 = vmatpush1.bf16.msra.mxu0 %v2025
    %2934 = vmatprep.subr.bf16.mxu0 %v2030
    %2935 = vmatpush1.bf16.msra.mxu0 %v2029
    %2936 = vmatprep.subr.bf16.mxu0 %v2034
    %2937 = vmatpush1.bf16.msra.mxu0 %v2033
    %2938 = vmatprep.subr.bf16.mxu0 %v2038
    %2939 = vmatpush1.bf16.msra.mxu0 %v2037
    %2940 = vmatprep.subr.bf16.mxu0 %v2042
    %2941 = vmatpush1.bf16.msra.mxu0 %v2041
    %2942 = vmatprep.subr.bf16.mxu0 %v2046
    %2943 = vmatpush1.bf16.msra.mxu0 %v2045
    %2944 = vmatprep.subr.bf16.mxu0 %v2050
    %2945 = vmatpush1.bf16.msra.mxu0 %v2049
    %2946 = vmatprep.subr.bf16.mxu0 %v2054
    %2947 = vmatpush1.bf16.msra.mxu0 %v2053
    %2948 = vmatprep.subr.bf16.mxu0 %v2058
    %2949 = vmatpush1.bf16.msra.mxu0 %v2057
    %2950 = vmatprep.subr.bf16.mxu0 %v2062
    %2951 = vmatpush1.bf16.msra.mxu0 %v2061
    %2952 = vmatprep.mubr.bf16.mxu0 %v142
    %2953 = vmatmul.mubr.bf16.gmra.mrb[0].mxu0 %v141
    %v2954 = vpop.f32.mrb[0].mxu0
    %v2955 = vadd.f32 %v2912, %v2954
    %v2956 = vpop.f32.mrb[0].mxu0
    %v2957 = vadd.f32 %v2914, %v2956
    %v2958 = vpop.f32.mrb[0].mxu0
    %v2959 = vadd.f32 %v2916, %v2958
    %v2960 = vpop.f32.mrb[0].mxu0
    %v2961 = vadd.f32 %v2918, %v2960
    %2962 = vdwg.mxu0
    %v2963 = vmax.f32 %v2697, 0.0
    %v2964 = vmax.f32 %v2699, 0.0
    %v2965 = vmax.f32 %v2955, 0.0
    %v2966 = vmax.f32 %v2957, 0.0
    %v2967 = vmax.f32 %v2701, 0.0
    %v2968 = vmax.f32 %v2703, 0.0
    %v2969 = vmax.f32 %v2959, 0.0
    %v2970 = vmax.f32 %v2961, 0.0
    %v2971 = vrot.slane %v2963, 7
    %v2972 = vrot.slane %v2964, 7
    %v2973 = vrot.slane %v2965, 7
    %v2974 = vrot.slane %v2966, 7
    %v2975 = vrot.slane %v2967, 7
    %v2976 = vrot.slane %v2968, 7
    %v2977 = vrot.slane %v2969, 7
    %v2978 = vrot.slane %v2970, 7
    %v2979 = vsel %vm89, %v2971, %v2975
    %v2980 = vsel %vm89, %v2972, %v2976
    %v2981 = vsel %vm89, %v2973, %v2977
    %v2982 = vsel %vm89, %v2974, %v2978
    %v2983 = vsel %vm89, %v2975, %v2971
    %v2984 = vsel %vm89, %v2976, %v2972
    %v2985 = vsel %vm89, %v2977, %v2973
    %v2986 = vsel %vm89, %v2978, %v2974
    %v2987 = vsel %vm77, 0.0, %v2983
    %v2988 = vsel %vm77, 0.0, %v2984
    %v2989 = vsel %vm77, 0.0, %v2985
    %v2990 = vsel %vm77, 0.0, %v2986
    %v2991 = vsel %vm78, 0.0, %v2979
    %v2992 = vsel %vm78, 0.0, %v2980
    %v2993 = vsel %vm78, 0.0, %v2981
    %v2994 = vsel %vm78, 0.0, %v2982
    %v2995 = vrot.slane %v2963, 1
    %v2996 = vrot.slane %v2964, 1
    %v2997 = vrot.slane %v2965, 1
    %v2998 = vrot.slane %v2966, 1
    %v2999 = vrot.slane %v2967, 1
    %v3000 = vrot.slane %v2968, 1
    %v3001 = vrot.slane %v2969, 1
    %v3002 = vrot.slane %v2970, 1
    %v3003 = vsel %vm114, %v2995, %v2999
    %v3004 = vsel %vm114, %v2996, %v3000
    %v3005 = vsel %vm114, %v2997, %v3001
    %v3006 = vsel %vm114, %v2998, %v3002
    %v3007 = vsel %vm114, %v2999, %v2995
    %v3008 = vsel %vm114, %v3000, %v2996
    %v3009 = vsel %vm114, %v3001, %v2997
    %v3010 = vsel %vm114, %v3002, %v2998
    %v3011 = vsel %vm79, 0.0, %v3003
    %v3012 = vsel %vm79, 0.0, %v3004
    %v3013 = vsel %vm79, 0.0, %v3005
    %v3014 = vsel %vm79, 0.0, %v3006
    %v3015 = vsel %vm80, 0.0, %v3007
    %v3016 = vsel %vm80, 0.0, %v3008
    %v3017 = vsel %vm80, 0.0, %v3009
    %v3018 = vsel %vm80, 0.0, %v3010
    %v3019 = vpack.c.bf16 %v2991, %v2987
    %v3020 = vpack.c.bf16 %v2992, %v2988
    %v3021 = vpack.c.bf16 %v2993, %v2989
    %v3022 = vpack.c.bf16 %v2994, %v2990
    %v3023 = vpack.c.bf16 %v2967, %v2963
    %v3024 = vpack.c.bf16 %v2968, %v2964
    %v3025 = vpack.c.bf16 %v2969, %v2965
    %v3026 = vpack.c.bf16 %v2970, %v2966
    %v3027 = vpack.c.bf16 %v3015, %v3011
    %v3028 = vpack.c.bf16 %v3016, %v3012
    %v3029 = vpack.c.bf16 %v3017, %v3013
    %v3030 = vpack.c.bf16 %v3018, %v3014
    %v3031 = vld [vmem:[#allocation4] sm:$0xff]
    %v3032 = vld [vmem:[#allocation4 + $0x8] sm:$0xff]
    %v3033 = vld [vmem:[#allocation4 + $0x10] sm:$0xff]
    %v3034 = vld [vmem:[#allocation4 + $0x18] sm:$0xff]
    %v3035 = vld [vmem:[#allocation4 + $0x20] sm:$0xff]
    %v3036 = vld [vmem:[#allocation4 + $0x28] sm:$0xff]
    %v3037 = vld [vmem:[#allocation4 + $0x30] sm:$0xff]
    %v3038 = vld [vmem:[#allocation4 + $0x38] sm:$0xff]
    %v3039 = vld [vmem:[#allocation4 + $0x40] sm:$0xff]
    %v3040 = vld [vmem:[#allocation4 + $0x48] sm:$0xff]
    %v3041 = vld [vmem:[#allocation4 + $0x50] sm:$0xff]
    %v3042 = vld [vmem:[#allocation4 + $0x58] sm:$0xff]
    %v3043 = vld [vmem:[#allocation4 + $0x60] sm:$0xff]
    %v3044 = vld [vmem:[#allocation4 + $0x68] sm:$0xff]
    %v3045 = vld [vmem:[#allocation4 + $0x70] sm:$0xff]
    %v3046 = vld [vmem:[#allocation4 + $0x78] sm:$0xff]
    %v3047 = vld [vmem:[#allocation4 + $0x80] sm:$0xff]
    %v3048 = vld [vmem:[#allocation4 + $0x88] sm:$0xff]
    %v3049 = vld [vmem:[#allocation4 + $0x90] sm:$0xff]
    %v3050 = vld [vmem:[#allocation4 + $0x98] sm:$0xff]
    %v3051 = vld [vmem:[#allocation4 + $0xa0] sm:$0xff]
    %v3052 = vld [vmem:[#allocation4 + $0xa8] sm:$0xff]
    %v3053 = vld [vmem:[#allocation4 + $0xb0] sm:$0xff]
    %v3054 = vld [vmem:[#allocation4 + $0xb8] sm:$0xff]
    %v3055 = vld [vmem:[#allocation4 + $0xc0] sm:$0xff]
    %v3056 = vld [vmem:[#allocation4 + $0xc8] sm:$0xff]
    %v3057 = vld [vmem:[#allocation4 + $0xd0] sm:$0xff]
    %v3058 = vld [vmem:[#allocation4 + $0xd8] sm:$0xff]
    %v3059 = vld [vmem:[#allocation4 + $0xe0] sm:$0xff]
    %v3060 = vld [vmem:[#allocation4 + $0xe8] sm:$0xff]
    %v3061 = vld [vmem:[#allocation4 + $0xf0] sm:$0xff]
    %v3062 = vld [vmem:[#allocation4 + $0xf8] sm:$0xff]
    %v3063 = vld [vmem:[#allocation4 + $0x100] sm:$0xff]
    %v3064 = vld [vmem:[#allocation4 + $0x108] sm:$0xff]
    %v3065 = vld [vmem:[#allocation4 + $0x110] sm:$0xff]
    %v3066 = vld [vmem:[#allocation4 + $0x118] sm:$0xff]
    %v3067 = vld [vmem:[#allocation4 + $0x120] sm:$0xff]
    %v3068 = vld [vmem:[#allocation4 + $0x128] sm:$0xff]
    %v3069 = vld [vmem:[#allocation4 + $0x130] sm:$0xff]
    %v3070 = vld [vmem:[#allocation4 + $0x138] sm:$0xff]
    %v3071 = vld [vmem:[#allocation4 + $0x140] sm:$0xff]
    %v3072 = vld [vmem:[#allocation4 + $0x148] sm:$0xff]
    %v3073 = vld [vmem:[#allocation4 + $0x150] sm:$0xff]
    %v3074 = vld [vmem:[#allocation4 + $0x158] sm:$0xff]
    %v3075 = vld [vmem:[#allocation4 + $0x160] sm:$0xff]
    %v3076 = vld [vmem:[#allocation4 + $0x168] sm:$0xff]
    %v3077 = vld [vmem:[#allocation4 + $0x170] sm:$0xff]
    %v3078 = vld [vmem:[#allocation4 + $0x178] sm:$0xff]
    %v3079 = vld [vmem:[#allocation4 + $0x180] sm:$0xff]
    %v3080 = vld [vmem:[#allocation4 + $0x188] sm:$0xff]
    %v3081 = vld [vmem:[#allocation4 + $0x190] sm:$0xff]
    %v3082 = vld [vmem:[#allocation4 + $0x198] sm:$0xff]
    %v3083 = vld [vmem:[#allocation4 + $0x1a0] sm:$0xff]
    %v3084 = vld [vmem:[#allocation4 + $0x1a8] sm:$0xff]
    %v3085 = vld [vmem:[#allocation4 + $0x1b0] sm:$0xff]
    %v3086 = vld [vmem:[#allocation4 + $0x1b8] sm:$0xff]
    %v3087 = vld [vmem:[#allocation4 + $0x1c0] sm:$0xff]
    %v3088 = vld [vmem:[#allocation4 + $0x1c8] sm:$0xff]
    %v3089 = vld [vmem:[#allocation4 + $0x1d0] sm:$0xff]
    %v3090 = vld [vmem:[#allocation4 + $0x1d8] sm:$0xff]
    %v3091 = vld [vmem:[#allocation4 + $0x1e0] sm:$0xff]
    %v3092 = vld [vmem:[#allocation4 + $0x1e8] sm:$0xff]
    %v3093 = vld [vmem:[#allocation4 + $0x1f0] sm:$0xff]
    %v3094 = vld [vmem:[#allocation4 + $0x1f8] sm:$0xff]
    %v3095 = vld [vmem:[#allocation4 + $0x200] sm:$0xff]
    %v3096 = vld [vmem:[#allocation4 + $0x208] sm:$0xff]
    %v3097 = vld [vmem:[#allocation4 + $0x210] sm:$0xff]
    %v3098 = vld [vmem:[#allocation4 + $0x218] sm:$0xff]
    %v3099 = vld [vmem:[#allocation4 + $0x220] sm:$0xff]
    %v3100 = vld [vmem:[#allocation4 + $0x228] sm:$0xff]
    %v3101 = vld [vmem:[#allocation4 + $0x230] sm:$0xff]
    %v3102 = vld [vmem:[#allocation4 + $0x238] sm:$0xff]
    %v3103 = vld [vmem:[#allocation4 + $0x240] sm:$0xff]
    %v3104 = vld [vmem:[#allocation4 + $0x248] sm:$0xff]
    %v3105 = vld [vmem:[#allocation4 + $0x250] sm:$0xff]
    %v3106 = vld [vmem:[#allocation4 + $0x258] sm:$0xff]
    %v3107 = vld [vmem:[#allocation4 + $0x260] sm:$0xff]
    %v3108 = vld [vmem:[#allocation4 + $0x268] sm:$0xff]
    %v3109 = vld [vmem:[#allocation4 + $0x270] sm:$0xff]
    %v3110 = vld [vmem:[#allocation4 + $0x278] sm:$0xff]
    %v3111 = vld [vmem:[#allocation4 + $0x280] sm:$0xff]
    %v3112 = vld [vmem:[#allocation4 + $0x288] sm:$0xff]
    %v3113 = vld [vmem:[#allocation4 + $0x290] sm:$0xff]
    %v3114 = vld [vmem:[#allocation4 + $0x298] sm:$0xff]
    %v3115 = vld [vmem:[#allocation4 + $0x2a0] sm:$0xff]
    %v3116 = vld [vmem:[#allocation4 + $0x2a8] sm:$0xff]
    %v3117 = vld [vmem:[#allocation4 + $0x2b0] sm:$0xff]
    %v3118 = vld [vmem:[#allocation4 + $0x2b8] sm:$0xff]
    %v3119 = vld [vmem:[#allocation4 + $0x2c0] sm:$0xff]
    %v3120 = vld [vmem:[#allocation4 + $0x2c8] sm:$0xff]
    %v3121 = vld [vmem:[#allocation4 + $0x2d0] sm:$0xff]
    %v3122 = vld [vmem:[#allocation4 + $0x2d8] sm:$0xff]
    %v3123 = vld [vmem:[#allocation4 + $0x2e0] sm:$0xff]
    %v3124 = vld [vmem:[#allocation4 + $0x2e8] sm:$0xff]
    %v3125 = vld [vmem:[#allocation4 + $0x2f0] sm:$0xff]
    %v3126 = vld [vmem:[#allocation4 + $0x2f8] sm:$0xff]
    %v3127 = vld [vmem:[#allocation4 + $0x300] sm:$0xff]
    %v3128 = vld [vmem:[#allocation4 + $0x308] sm:$0xff]
    %v3129 = vld [vmem:[#allocation4 + $0x310] sm:$0xff]
    %v3130 = vld [vmem:[#allocation4 + $0x318] sm:$0xff]
    %v3131 = vld [vmem:[#allocation4 + $0x320] sm:$0xff]
    %v3132 = vld [vmem:[#allocation4 + $0x328] sm:$0xff]
    %v3133 = vld [vmem:[#allocation4 + $0x330] sm:$0xff]
    %v3134 = vld [vmem:[#allocation4 + $0x338] sm:$0xff]
    %v3135 = vld [vmem:[#allocation4 + $0x340] sm:$0xff]
    %v3136 = vld [vmem:[#allocation4 + $0x348] sm:$0xff]
    %v3137 = vld [vmem:[#allocation4 + $0x350] sm:$0xff]
    %v3138 = vld [vmem:[#allocation4 + $0x358] sm:$0xff]
    %v3139 = vld [vmem:[#allocation4 + $0x360] sm:$0xff]
    %v3140 = vld [vmem:[#allocation4 + $0x368] sm:$0xff]
    %v3141 = vld [vmem:[#allocation4 + $0x370] sm:$0xff]
    %v3142 = vld [vmem:[#allocation4 + $0x378] sm:$0xff]
    %v3143 = vld [vmem:[#allocation4 + $0x380] sm:$0xff]
    %v3144 = vld [vmem:[#allocation4 + $0x388] sm:$0xff]
    %v3145 = vld [vmem:[#allocation4 + $0x390] sm:$0xff]
    %v3146 = vld [vmem:[#allocation4 + $0x398] sm:$0xff]
    %v3147 = vld [vmem:[#allocation4 + $0x3a0] sm:$0xff]
    %v3148 = vld [vmem:[#allocation4 + $0x3a8] sm:$0xff]
    %v3149 = vld [vmem:[#allocation4 + $0x3b0] sm:$0xff]
    %v3150 = vld [vmem:[#allocation4 + $0x3b8] sm:$0xff]
    %v3151 = vld [vmem:[#allocation4 + $0x3c0] sm:$0xff]
    %v3152 = vld [vmem:[#allocation4 + $0x3c8] sm:$0xff]
    %v3153 = vld [vmem:[#allocation4 + $0x3d0] sm:$0xff]
    %v3154 = vld [vmem:[#allocation4 + $0x3d8] sm:$0xff]
    %v3155 = vld [vmem:[#allocation4 + $0x3e0] sm:$0xff]
    %v3156 = vld [vmem:[#allocation4 + $0x3e8] sm:$0xff]
    %v3157 = vld [vmem:[#allocation4 + $0x3f0] sm:$0xff]
    %v3158 = vld [vmem:[#allocation4 + $0x3f8] sm:$0xff]
    %v3159 = vld [vmem:[#allocation4 + $0x400] sm:$0xff]
    %v3160 = vld [vmem:[#allocation4 + $0x408] sm:$0xff]
    %v3161 = vld [vmem:[#allocation4 + $0x410] sm:$0xff]
    %v3162 = vld [vmem:[#allocation4 + $0x418] sm:$0xff]
    %v3163 = vld [vmem:[#allocation4 + $0x420] sm:$0xff]
    %v3164 = vld [vmem:[#allocation4 + $0x428] sm:$0xff]
    %v3165 = vld [vmem:[#allocation4 + $0x430] sm:$0xff]
    %v3166 = vld [vmem:[#allocation4 + $0x438] sm:$0xff]
    %v3167 = vld [vmem:[#allocation4 + $0x440] sm:$0xff]
    %v3168 = vld [vmem:[#allocation4 + $0x448] sm:$0xff]
    %v3169 = vld [vmem:[#allocation4 + $0x450] sm:$0xff]
    %v3170 = vld [vmem:[#allocation4 + $0x458] sm:$0xff]
    %v3171 = vld [vmem:[#allocation4 + $0x460] sm:$0xff]
    %v3172 = vld [vmem:[#allocation4 + $0x468] sm:$0xff]
    %v3173 = vld [vmem:[#allocation4 + $0x470] sm:$0xff]
    %v3174 = vld [vmem:[#allocation4 + $0x478] sm:$0xff]
    %v3175 = vld [vmem:[#allocation4 + $0x480] sm:$0xff]
    %v3176 = vld [vmem:[#allocation4 + $0x488] sm:$0xff]
    %v3177 = vld [vmem:[#allocation4 + $0x490] sm:$0xff]
    %v3178 = vld [vmem:[#allocation4 + $0x498] sm:$0xff]
    %v3179 = vld [vmem:[#allocation4 + $0x4a0] sm:$0xff]
    %v3180 = vld [vmem:[#allocation4 + $0x4a8] sm:$0xff]
    %v3181 = vld [vmem:[#allocation4 + $0x4b0] sm:$0xff]
    %v3182 = vld [vmem:[#allocation4 + $0x4b8] sm:$0xff]
    %v3183 = vld [vmem:[#allocation4 + $0x4c0] sm:$0xff]
    %v3184 = vld [vmem:[#allocation4 + $0x4c8] sm:$0xff]
    %v3185 = vld [vmem:[#allocation4 + $0x4d0] sm:$0xff]
    %v3186 = vld [vmem:[#allocation4 + $0x4d8] sm:$0xff]
    %v3187 = vld [vmem:[#allocation4 + $0x4e0] sm:$0xff]
    %v3188 = vld [vmem:[#allocation4 + $0x4e8] sm:$0xff]
    %v3189 = vld [vmem:[#allocation4 + $0x4f0] sm:$0xff]
    %v3190 = vld [vmem:[#allocation4 + $0x4f8] sm:$0xff]
    %v3191 = vld [vmem:[#allocation4 + $0x500] sm:$0xff]
    %v3192 = vld [vmem:[#allocation4 + $0x508] sm:$0xff]
    %v3193 = vld [vmem:[#allocation4 + $0x510] sm:$0xff]
    %v3194 = vld [vmem:[#allocation4 + $0x518] sm:$0xff]
    %v3195 = vld [vmem:[#allocation4 + $0x520] sm:$0xff]
    %v3196 = vld [vmem:[#allocation4 + $0x528] sm:$0xff]
    %v3197 = vld [vmem:[#allocation4 + $0x530] sm:$0xff]
    %v3198 = vld [vmem:[#allocation4 + $0x538] sm:$0xff]
    %v3199 = vld [vmem:[#allocation4 + $0x540] sm:$0xff]
    %v3200 = vld [vmem:[#allocation4 + $0x548] sm:$0xff]
    %v3201 = vld [vmem:[#allocation4 + $0x550] sm:$0xff]
    %v3202 = vld [vmem:[#allocation4 + $0x558] sm:$0xff]
    %v3203 = vld [vmem:[#allocation4 + $0x560] sm:$0xff]
    %v3204 = vld [vmem:[#allocation4 + $0x568] sm:$0xff]
    %v3205 = vld [vmem:[#allocation4 + $0x570] sm:$0xff]
    %v3206 = vld [vmem:[#allocation4 + $0x578] sm:$0xff]
    %v3207 = vld [vmem:[#allocation4 + $0x580] sm:$0xff]
    %v3208 = vld [vmem:[#allocation4 + $0x588] sm:$0xff]
    %v3209 = vld [vmem:[#allocation4 + $0x590] sm:$0xff]
    %v3210 = vld [vmem:[#allocation4 + $0x598] sm:$0xff]
    %v3211 = vld [vmem:[#allocation4 + $0x5a0] sm:$0xff]
    %v3212 = vld [vmem:[#allocation4 + $0x5a8] sm:$0xff]
    %v3213 = vld [vmem:[#allocation4 + $0x5b0] sm:$0xff]
    %v3214 = vld [vmem:[#allocation4 + $0x5b8] sm:$0xff]
    %v3215 = vld [vmem:[#allocation4 + $0x5c0] sm:$0xff]
    %v3216 = vld [vmem:[#allocation4 + $0x5c8] sm:$0xff]
    %v3217 = vld [vmem:[#allocation4 + $0x5d0] sm:$0xff]
    %v3218 = vld [vmem:[#allocation4 + $0x5d8] sm:$0xff]
    %v3219 = vld [vmem:[#allocation4 + $0x5e0] sm:$0xff]
    %v3220 = vld [vmem:[#allocation4 + $0x5e8] sm:$0xff]
    %v3221 = vld [vmem:[#allocation4 + $0x5f0] sm:$0xff]
    %v3222 = vld [vmem:[#allocation4 + $0x5f8] sm:$0xff]
    %v3223 = vld [vmem:[#allocation4 + $0x600] sm:$0xff]
    %v3224 = vld [vmem:[#allocation4 + $0x608] sm:$0xff]
    %v3225 = vld [vmem:[#allocation4 + $0x610] sm:$0xff]
    %v3226 = vld [vmem:[#allocation4 + $0x618] sm:$0xff]
    %v3227 = vld [vmem:[#allocation4 + $0x620] sm:$0xff]
    %v3228 = vld [vmem:[#allocation4 + $0x628] sm:$0xff]
    %v3229 = vld [vmem:[#allocation4 + $0x630] sm:$0xff]
    %v3230 = vld [vmem:[#allocation4 + $0x638] sm:$0xff]
    %v3231 = vld [vmem:[#allocation4 + $0x640] sm:$0xff]
    %v3232 = vld [vmem:[#allocation4 + $0x648] sm:$0xff]
    %v3233 = vld [vmem:[#allocation4 + $0x650] sm:$0xff]
    %v3234 = vld [vmem:[#allocation4 + $0x658] sm:$0xff]
    %v3235 = vld [vmem:[#allocation4 + $0x660] sm:$0xff]
    %v3236 = vld [vmem:[#allocation4 + $0x668] sm:$0xff]
    %v3237 = vld [vmem:[#allocation4 + $0x670] sm:$0xff]
    %v3238 = vld [vmem:[#allocation4 + $0x678] sm:$0xff]
    %v3239 = vld [vmem:[#allocation4 + $0x680] sm:$0xff]
    %v3240 = vld [vmem:[#allocation4 + $0x688] sm:$0xff]
    %v3241 = vld [vmem:[#allocation4 + $0x690] sm:$0xff]
    %v3242 = vld [vmem:[#allocation4 + $0x698] sm:$0xff]
    %v3243 = vld [vmem:[#allocation4 + $0x6a0] sm:$0xff]
    %v3244 = vld [vmem:[#allocation4 + $0x6a8] sm:$0xff]
    %v3245 = vld [vmem:[#allocation4 + $0x6b0] sm:$0xff]
    %v3246 = vld [vmem:[#allocation4 + $0x6b8] sm:$0xff]
    %v3247 = vld [vmem:[#allocation4 + $0x6c0] sm:$0xff]
    %v3248 = vld [vmem:[#allocation4 + $0x6c8] sm:$0xff]
    %v3249 = vld [vmem:[#allocation4 + $0x6d0] sm:$0xff]
    %v3250 = vld [vmem:[#allocation4 + $0x6d8] sm:$0xff]
    %v3251 = vld [vmem:[#allocation4 + $0x6e0] sm:$0xff]
    %v3252 = vld [vmem:[#allocation4 + $0x6e8] sm:$0xff]
    %v3253 = vld [vmem:[#allocation4 + $0x6f0] sm:$0xff]
    %v3254 = vld [vmem:[#allocation4 + $0x6f8] sm:$0xff]
    %v3255 = vld [vmem:[#allocation4 + $0x700] sm:$0xff]
    %v3256 = vld [vmem:[#allocation4 + $0x708] sm:$0xff]
    %v3257 = vld [vmem:[#allocation4 + $0x710] sm:$0xff]
    %v3258 = vld [vmem:[#allocation4 + $0x718] sm:$0xff]
    %v3259 = vld [vmem:[#allocation4 + $0x720] sm:$0xff]
    %v3260 = vld [vmem:[#allocation4 + $0x728] sm:$0xff]
    %v3261 = vld [vmem:[#allocation4 + $0x730] sm:$0xff]
    %v3262 = vld [vmem:[#allocation4 + $0x738] sm:$0xff]
    %v3263 = vld [vmem:[#allocation4 + $0x740] sm:$0xff]
    %v3264 = vld [vmem:[#allocation4 + $0x748] sm:$0xff]
    %v3265 = vld [vmem:[#allocation4 + $0x750] sm:$0xff]
    %v3266 = vld [vmem:[#allocation4 + $0x758] sm:$0xff]
    %v3267 = vld [vmem:[#allocation4 + $0x760] sm:$0xff]
    %v3268 = vld [vmem:[#allocation4 + $0x768] sm:$0xff]
    %v3269 = vld [vmem:[#allocation4 + $0x770] sm:$0xff]
    %v3270 = vld [vmem:[#allocation4 + $0x778] sm:$0xff]
    %v3271 = vld [vmem:[#allocation4 + $0x780] sm:$0xff]
    %v3272 = vld [vmem:[#allocation4 + $0x788] sm:$0xff]
    %v3273 = vld [vmem:[#allocation4 + $0x790] sm:$0xff]
    %v3274 = vld [vmem:[#allocation4 + $0x798] sm:$0xff]
    %v3275 = vld [vmem:[#allocation4 + $0x7a0] sm:$0xff]
    %v3276 = vld [vmem:[#allocation4 + $0x7a8] sm:$0xff]
    %v3277 = vld [vmem:[#allocation4 + $0x7b0] sm:$0xff]
    %v3278 = vld [vmem:[#allocation4 + $0x7b8] sm:$0xff]
    %v3279 = vld [vmem:[#allocation4 + $0x7c0] sm:$0xff]
    %v3280 = vld [vmem:[#allocation4 + $0x7c8] sm:$0xff]
    %v3281 = vld [vmem:[#allocation4 + $0x7d0] sm:$0xff]
    %v3282 = vld [vmem:[#allocation4 + $0x7d8] sm:$0xff]
    %v3283 = vld [vmem:[#allocation4 + $0x7e0] sm:$0xff]
    %v3284 = vld [vmem:[#allocation4 + $0x7e8] sm:$0xff]
    %v3285 = vld [vmem:[#allocation4 + $0x7f0] sm:$0xff]
    %v3286 = vld [vmem:[#allocation4 + $0x7f8] sm:$0xff]
    %v3287 = vld [vmem:[#allocation4 + $0x800] sm:$0xff]
    %v3288 = vld [vmem:[#allocation4 + $0x808] sm:$0xff]
    %v3289 = vld [vmem:[#allocation4 + $0x810] sm:$0xff]
    %v3290 = vld [vmem:[#allocation4 + $0x818] sm:$0xff]
    %v3291 = vld [vmem:[#allocation4 + $0x820] sm:$0xff]
    %v3292 = vld [vmem:[#allocation4 + $0x828] sm:$0xff]
    %v3293 = vld [vmem:[#allocation4 + $0x830] sm:$0xff]
    %v3294 = vld [vmem:[#allocation4 + $0x838] sm:$0xff]
    %v3295 = vld [vmem:[#allocation4 + $0x840] sm:$0xff]
    %v3296 = vld [vmem:[#allocation4 + $0x848] sm:$0xff]
    %v3297 = vld [vmem:[#allocation4 + $0x850] sm:$0xff]
    %v3298 = vld [vmem:[#allocation4 + $0x858] sm:$0xff]
    %v3299 = vld [vmem:[#allocation4 + $0x860] sm:$0xff]
    %v3300 = vld [vmem:[#allocation4 + $0x868] sm:$0xff]
    %v3301 = vld [vmem:[#allocation4 + $0x870] sm:$0xff]
    %v3302 = vld [vmem:[#allocation4 + $0x878] sm:$0xff]
    %v3303 = vld [vmem:[#allocation4 + $0x880] sm:$0xff]
    %v3304 = vld [vmem:[#allocation4 + $0x888] sm:$0xff]
    %v3305 = vld [vmem:[#allocation4 + $0x890] sm:$0xff]
    %v3306 = vld [vmem:[#allocation4 + $0x898] sm:$0xff]
    %v3307 = vld [vmem:[#allocation4 + $0x8a0] sm:$0xff]
    %v3308 = vld [vmem:[#allocation4 + $0x8a8] sm:$0xff]
    %v3309 = vld [vmem:[#allocation4 + $0x8b0] sm:$0xff]
    %v3310 = vld [vmem:[#allocation4 + $0x8b8] sm:$0xff]
    %v3311 = vld [vmem:[#allocation4 + $0x8c0] sm:$0xff]
    %v3312 = vld [vmem:[#allocation4 + $0x8c8] sm:$0xff]
    %v3313 = vld [vmem:[#allocation4 + $0x8d0] sm:$0xff]
    %v3314 = vld [vmem:[#allocation4 + $0x8d8] sm:$0xff]
    %v3315 = vld [vmem:[#allocation4 + $0x8e0] sm:$0xff]
    %v3316 = vld [vmem:[#allocation4 + $0x8e8] sm:$0xff]
    %v3317 = vld [vmem:[#allocation4 + $0x8f0] sm:$0xff]
    %v3318 = vld [vmem:[#allocation4 + $0x8f8] sm:$0xff]
    %v3319 = vld [vmem:[#allocation4 + $0x900] sm:$0xff]
    %v3320 = vld [vmem:[#allocation4 + $0x908] sm:$0xff]
    %v3321 = vld [vmem:[#allocation4 + $0x910] sm:$0xff]
    %v3322 = vld [vmem:[#allocation4 + $0x918] sm:$0xff]
    %v3323 = vld [vmem:[#allocation4 + $0x920] sm:$0xff]
    %v3324 = vld [vmem:[#allocation4 + $0x928] sm:$0xff]
    %v3325 = vld [vmem:[#allocation4 + $0x930] sm:$0xff]
    %v3326 = vld [vmem:[#allocation4 + $0x938] sm:$0xff]
    %v3327 = vld [vmem:[#allocation4 + $0x940] sm:$0xff]
    %v3328 = vld [vmem:[#allocation4 + $0x948] sm:$0xff]
    %v3329 = vld [vmem:[#allocation4 + $0x950] sm:$0xff]
    %v3330 = vld [vmem:[#allocation4 + $0x958] sm:$0xff]
    %v3331 = vld [vmem:[#allocation4 + $0x960] sm:$0xff]
    %v3332 = vld [vmem:[#allocation4 + $0x968] sm:$0xff]
    %v3333 = vld [vmem:[#allocation4 + $0x970] sm:$0xff]
    %v3334 = vld [vmem:[#allocation4 + $0x978] sm:$0xff]
    %v3335 = vld [vmem:[#allocation4 + $0x980] sm:$0xff]
    %v3336 = vld [vmem:[#allocation4 + $0x988] sm:$0xff]
    %v3337 = vld [vmem:[#allocation4 + $0x990] sm:$0xff]
    %v3338 = vld [vmem:[#allocation4 + $0x998] sm:$0xff]
    %v3339 = vld [vmem:[#allocation4 + $0x9a0] sm:$0xff]
    %v3340 = vld [vmem:[#allocation4 + $0x9a8] sm:$0xff]
    %v3341 = vld [vmem:[#allocation4 + $0x9b0] sm:$0xff]
    %v3342 = vld [vmem:[#allocation4 + $0x9b8] sm:$0xff]
    %v3343 = vld [vmem:[#allocation4 + $0x9c0] sm:$0xff]
    %v3344 = vld [vmem:[#allocation4 + $0x9c8] sm:$0xff]
    %v3345 = vld [vmem:[#allocation4 + $0x9d0] sm:$0xff]
    %v3346 = vld [vmem:[#allocation4 + $0x9d8] sm:$0xff]
    %v3347 = vld [vmem:[#allocation4 + $0x9e0] sm:$0xff]
    %v3348 = vld [vmem:[#allocation4 + $0x9e8] sm:$0xff]
    %v3349 = vld [vmem:[#allocation4 + $0x9f0] sm:$0xff]
    %v3350 = vld [vmem:[#allocation4 + $0x9f8] sm:$0xff]
    %v3351 = vld [vmem:[#allocation4 + $0xa00] sm:$0xff]
    %v3352 = vld [vmem:[#allocation4 + $0xa08] sm:$0xff]
    %v3353 = vld [vmem:[#allocation4 + $0xa10] sm:$0xff]
    %v3354 = vld [vmem:[#allocation4 + $0xa18] sm:$0xff]
    %v3355 = vld [vmem:[#allocation4 + $0xa20] sm:$0xff]
    %v3356 = vld [vmem:[#allocation4 + $0xa28] sm:$0xff]
    %v3357 = vld [vmem:[#allocation4 + $0xa30] sm:$0xff]
    %v3358 = vld [vmem:[#allocation4 + $0xa38] sm:$0xff]
    %v3359 = vld [vmem:[#allocation4 + $0xa40] sm:$0xff]
    %v3360 = vld [vmem:[#allocation4 + $0xa48] sm:$0xff]
    %v3361 = vld [vmem:[#allocation4 + $0xa50] sm:$0xff]
    %v3362 = vld [vmem:[#allocation4 + $0xa58] sm:$0xff]
    %v3363 = vld [vmem:[#allocation4 + $0xa60] sm:$0xff]
    %v3364 = vld [vmem:[#allocation4 + $0xa68] sm:$0xff]
    %v3365 = vld [vmem:[#allocation4 + $0xa70] sm:$0xff]
    %v3366 = vld [vmem:[#allocation4 + $0xa78] sm:$0xff]
    %v3367 = vld [vmem:[#allocation4 + $0xa80] sm:$0xff]
    %v3368 = vld [vmem:[#allocation4 + $0xa88] sm:$0xff]
    %v3369 = vld [vmem:[#allocation4 + $0xa90] sm:$0xff]
    %v3370 = vld [vmem:[#allocation4 + $0xa98] sm:$0xff]
    %v3371 = vld [vmem:[#allocation4 + $0xaa0] sm:$0xff]
    %v3372 = vld [vmem:[#allocation4 + $0xaa8] sm:$0xff]
    %v3373 = vld [vmem:[#allocation4 + $0xab0] sm:$0xff]
    %v3374 = vld [vmem:[#allocation4 + $0xab8] sm:$0xff]
    %v3375 = vld [vmem:[#allocation4 + $0xac0] sm:$0xff]
    %v3376 = vld [vmem:[#allocation4 + $0xac8] sm:$0xff]
    %v3377 = vld [vmem:[#allocation4 + $0xad0] sm:$0xff]
    %v3378 = vld [vmem:[#allocation4 + $0xad8] sm:$0xff]
    %v3379 = vld [vmem:[#allocation4 + $0xae0] sm:$0xff]
    %v3380 = vld [vmem:[#allocation4 + $0xae8] sm:$0xff]
    %v3381 = vld [vmem:[#allocation4 + $0xaf0] sm:$0xff]
    %v3382 = vld [vmem:[#allocation4 + $0xaf8] sm:$0xff]
    %v3383 = vld [vmem:[#allocation4 + $0xb00] sm:$0xff]
    %v3384 = vld [vmem:[#allocation4 + $0xb08] sm:$0xff]
    %v3385 = vld [vmem:[#allocation4 + $0xb10] sm:$0xff]
    %v3386 = vld [vmem:[#allocation4 + $0xb18] sm:$0xff]
    %v3387 = vld [vmem:[#allocation4 + $0xb20] sm:$0xff]
    %v3388 = vld [vmem:[#allocation4 + $0xb28] sm:$0xff]
    %v3389 = vld [vmem:[#allocation4 + $0xb30] sm:$0xff]
    %v3390 = vld [vmem:[#allocation4 + $0xb38] sm:$0xff]
    %v3391 = vld [vmem:[#allocation4 + $0xb40] sm:$0xff]
    %v3392 = vld [vmem:[#allocation4 + $0xb48] sm:$0xff]
    %v3393 = vld [vmem:[#allocation4 + $0xb50] sm:$0xff]
    %v3394 = vld [vmem:[#allocation4 + $0xb58] sm:$0xff]
    %v3395 = vld [vmem:[#allocation4 + $0xb60] sm:$0xff]
    %v3396 = vld [vmem:[#allocation4 + $0xb68] sm:$0xff]
    %v3397 = vld [vmem:[#allocation4 + $0xb70] sm:$0xff]
    %v3398 = vld [vmem:[#allocation4 + $0xb78] sm:$0xff]
    %v3399 = vld [vmem:[#allocation4 + $0xb80] sm:$0xff]
    %v3400 = vld [vmem:[#allocation4 + $0xb88] sm:$0xff]
    %v3401 = vld [vmem:[#allocation4 + $0xb90] sm:$0xff]
    %v3402 = vld [vmem:[#allocation4 + $0xb98] sm:$0xff]
    %v3403 = vld [vmem:[#allocation4 + $0xba0] sm:$0xff]
    %v3404 = vld [vmem:[#allocation4 + $0xba8] sm:$0xff]
    %v3405 = vld [vmem:[#allocation4 + $0xbb0] sm:$0xff]
    %v3406 = vld [vmem:[#allocation4 + $0xbb8] sm:$0xff]
    %v3407 = vld [vmem:[#allocation4 + $0xbc0] sm:$0xff]
    %v3408 = vld [vmem:[#allocation4 + $0xbc8] sm:$0xff]
    %v3409 = vld [vmem:[#allocation4 + $0xbd0] sm:$0xff]
    %v3410 = vld [vmem:[#allocation4 + $0xbd8] sm:$0xff]
    %v3411 = vld [vmem:[#allocation4 + $0xbe0] sm:$0xff]
    %v3412 = vld [vmem:[#allocation4 + $0xbe8] sm:$0xff]
    %v3413 = vld [vmem:[#allocation4 + $0xbf0] sm:$0xff]
    %v3414 = vld [vmem:[#allocation4 + $0xbf8] sm:$0xff]
    %v3799 = vunpack.c.l.b16 %v3031
    %v3800 = vunpack.c.h.b16 %v3031
    %v3801 = vunpack.c.l.b16 %v3032
    %v3802 = vunpack.c.h.b16 %v3032
    %v3803 = vunpack.c.l.b16 %v3033
    %v3804 = vunpack.c.h.b16 %v3033
    %v3805 = vunpack.c.l.b16 %v3034
    %v3806 = vunpack.c.h.b16 %v3034
    %v3807 = vunpack.c.l.b16 %v3035
    %v3808 = vunpack.c.h.b16 %v3035
    %v3809 = vunpack.c.l.b16 %v3036
    %v3810 = vunpack.c.h.b16 %v3036
    %v3811 = vunpack.c.l.b16 %v3037
    %v3812 = vunpack.c.h.b16 %v3037
    %v3813 = vunpack.c.l.b16 %v3038
    %v3814 = vunpack.c.h.b16 %v3038
    %v3815 = vunpack.c.l.b16 %v3039
    %v3816 = vunpack.c.h.b16 %v3039
    %v3817 = vunpack.c.l.b16 %v3040
    %v3818 = vunpack.c.h.b16 %v3040
    %v3819 = vunpack.c.l.b16 %v3041
    %v3820 = vunpack.c.h.b16 %v3041
    %v3821 = vunpack.c.l.b16 %v3042
    %v3822 = vunpack.c.h.b16 %v3042
    %v3823 = vunpack.c.l.b16 %v3043
    %v3824 = vunpack.c.h.b16 %v3043
    %v3825 = vunpack.c.l.b16 %v3044
    %v3826 = vunpack.c.h.b16 %v3044
    %v3827 = vunpack.c.l.b16 %v3045
    %v3828 = vunpack.c.h.b16 %v3045
    %v3829 = vunpack.c.l.b16 %v3046
    %v3830 = vunpack.c.h.b16 %v3046
    %v3831 = vunpack.c.l.b16 %v3047
    %v3832 = vunpack.c.h.b16 %v3047
    %v3833 = vunpack.c.l.b16 %v3048
    %v3834 = vunpack.c.h.b16 %v3048
    %v3835 = vunpack.c.l.b16 %v3049
    %v3836 = vunpack.c.h.b16 %v3049
    %v3837 = vunpack.c.l.b16 %v3050
    %v3838 = vunpack.c.h.b16 %v3050
    %v3839 = vunpack.c.l.b16 %v3051
    %v3840 = vunpack.c.h.b16 %v3051
    %v3841 = vunpack.c.l.b16 %v3052
    %v3842 = vunpack.c.h.b16 %v3052
    %v3843 = vunpack.c.l.b16 %v3053
    %v3844 = vunpack.c.h.b16 %v3053
    %v3845 = vunpack.c.l.b16 %v3054
    %v3846 = vunpack.c.h.b16 %v3054
    %v3847 = vunpack.c.l.b16 %v3055
    %v3848 = vunpack.c.h.b16 %v3055
    %v3849 = vunpack.c.l.b16 %v3056
    %v3850 = vunpack.c.h.b16 %v3056
    %v3851 = vunpack.c.l.b16 %v3057
    %v3852 = vunpack.c.h.b16 %v3057
    %v3853 = vunpack.c.l.b16 %v3058
    %v3854 = vunpack.c.h.b16 %v3058
    %v3855 = vunpack.c.l.b16 %v3059
    %v3856 = vunpack.c.h.b16 %v3059
    %v3857 = vunpack.c.l.b16 %v3060
    %v3858 = vunpack.c.h.b16 %v3060
    %v3859 = vunpack.c.l.b16 %v3061
    %v3860 = vunpack.c.h.b16 %v3061
    %v3861 = vunpack.c.l.b16 %v3062
    %v3862 = vunpack.c.h.b16 %v3062
    %v3863 = vunpack.c.l.b16 %v3063
    %v3864 = vunpack.c.h.b16 %v3063
    %v3865 = vunpack.c.l.b16 %v3064
    %v3866 = vunpack.c.h.b16 %v3064
    %v3867 = vunpack.c.l.b16 %v3065
    %v3868 = vunpack.c.h.b16 %v3065
    %v3869 = vunpack.c.l.b16 %v3066
    %v3870 = vunpack.c.h.b16 %v3066
    %v3871 = vunpack.c.l.b16 %v3067
    %v3872 = vunpack.c.h.b16 %v3067
    %v3873 = vunpack.c.l.b16 %v3068
    %v3874 = vunpack.c.h.b16 %v3068
    %v3875 = vunpack.c.l.b16 %v3069
    %v3876 = vunpack.c.h.b16 %v3069
    %v3877 = vunpack.c.l.b16 %v3070
    %v3878 = vunpack.c.h.b16 %v3070
    %v3879 = vunpack.c.l.b16 %v3071
    %v3880 = vunpack.c.h.b16 %v3071
    %v3881 = vunpack.c.l.b16 %v3072
    %v3882 = vunpack.c.h.b16 %v3072
    %v3883 = vunpack.c.l.b16 %v3073
    %v3884 = vunpack.c.h.b16 %v3073
    %v3885 = vunpack.c.l.b16 %v3074
    %v3886 = vunpack.c.h.b16 %v3074
    %v3887 = vunpack.c.l.b16 %v3075
    %v3888 = vunpack.c.h.b16 %v3075
    %v3889 = vunpack.c.l.b16 %v3076
    %v3890 = vunpack.c.h.b16 %v3076
    %v3891 = vunpack.c.l.b16 %v3077
    %v3892 = vunpack.c.h.b16 %v3077
    %v3893 = vunpack.c.l.b16 %v3078
    %v3894 = vunpack.c.h.b16 %v3078
    %v3895 = vunpack.c.l.b16 %v3079
    %v3896 = vunpack.c.h.b16 %v3079
    %v3897 = vunpack.c.l.b16 %v3080
    %v3898 = vunpack.c.h.b16 %v3080
    %v3899 = vunpack.c.l.b16 %v3081
    %v3900 = vunpack.c.h.b16 %v3081
    %v3901 = vunpack.c.l.b16 %v3082
    %v3902 = vunpack.c.h.b16 %v3082
    %v3903 = vunpack.c.l.b16 %v3083
    %v3904 = vunpack.c.h.b16 %v3083
    %v3905 = vunpack.c.l.b16 %v3084
    %v3906 = vunpack.c.h.b16 %v3084
    %v3907 = vunpack.c.l.b16 %v3085
    %v3908 = vunpack.c.h.b16 %v3085
    %v3909 = vunpack.c.l.b16 %v3086
    %v3910 = vunpack.c.h.b16 %v3086
    %v3911 = vunpack.c.l.b16 %v3087
    %v3912 = vunpack.c.h.b16 %v3087
    %v3913 = vunpack.c.l.b16 %v3088
    %v3914 = vunpack.c.h.b16 %v3088
    %v3915 = vunpack.c.l.b16 %v3089
    %v3916 = vunpack.c.h.b16 %v3089
    %v3917 = vunpack.c.l.b16 %v3090
    %v3918 = vunpack.c.h.b16 %v3090
    %v3919 = vunpack.c.l.b16 %v3091
    %v3920 = vunpack.c.h.b16 %v3091
    %v3921 = vunpack.c.l.b16 %v3092
    %v3922 = vunpack.c.h.b16 %v3092
    %v3923 = vunpack.c.l.b16 %v3093
    %v3924 = vunpack.c.h.b16 %v3093
    %v3925 = vunpack.c.l.b16 %v3094
    %v3926 = vunpack.c.h.b16 %v3094
    %v3927 = vunpack.c.l.b16 %v3095
    %v3928 = vunpack.c.h.b16 %v3095
    %v3929 = vunpack.c.l.b16 %v3096
    %v3930 = vunpack.c.h.b16 %v3096
    %v3931 = vunpack.c.l.b16 %v3097
    %v3932 = vunpack.c.h.b16 %v3097
    %v3933 = vunpack.c.l.b16 %v3098
    %v3934 = vunpack.c.h.b16 %v3098
    %v3935 = vunpack.c.l.b16 %v3099
    %v3936 = vunpack.c.h.b16 %v3099
    %v3937 = vunpack.c.l.b16 %v3100
    %v3938 = vunpack.c.h.b16 %v3100
    %v3939 = vunpack.c.l.b16 %v3101
    %v3940 = vunpack.c.h.b16 %v3101
    %v3941 = vunpack.c.l.b16 %v3102
    %v3942 = vunpack.c.h.b16 %v3102
    %v3943 = vunpack.c.l.b16 %v3103
    %v3944 = vunpack.c.h.b16 %v3103
    %v3945 = vunpack.c.l.b16 %v3104
    %v3946 = vunpack.c.h.b16 %v3104
    %v3947 = vunpack.c.l.b16 %v3105
    %v3948 = vunpack.c.h.b16 %v3105
    %v3949 = vunpack.c.l.b16 %v3106
    %v3950 = vunpack.c.h.b16 %v3106
    %v3951 = vunpack.c.l.b16 %v3107
    %v3952 = vunpack.c.h.b16 %v3107
    %v3953 = vunpack.c.l.b16 %v3108
    %v3954 = vunpack.c.h.b16 %v3108
    %v3955 = vunpack.c.l.b16 %v3109
    %v3956 = vunpack.c.h.b16 %v3109
    %v3957 = vunpack.c.l.b16 %v3110
    %v3958 = vunpack.c.h.b16 %v3110
    %v3959 = vunpack.c.l.b16 %v3111
    %v3960 = vunpack.c.h.b16 %v3111
    %v3961 = vunpack.c.l.b16 %v3112
    %v3962 = vunpack.c.h.b16 %v3112
    %v3963 = vunpack.c.l.b16 %v3113
    %v3964 = vunpack.c.h.b16 %v3113
    %v3965 = vunpack.c.l.b16 %v3114
    %v3966 = vunpack.c.h.b16 %v3114
    %v3967 = vunpack.c.l.b16 %v3115
    %v3968 = vunpack.c.h.b16 %v3115
    %v3969 = vunpack.c.l.b16 %v3116
    %v3970 = vunpack.c.h.b16 %v3116
    %v3971 = vunpack.c.l.b16 %v3117
    %v3972 = vunpack.c.h.b16 %v3117
    %v3973 = vunpack.c.l.b16 %v3118
    %v3974 = vunpack.c.h.b16 %v3118
    %v3975 = vunpack.c.l.b16 %v3119
    %v3976 = vunpack.c.h.b16 %v3119
    %v3977 = vunpack.c.l.b16 %v3120
    %v3978 = vunpack.c.h.b16 %v3120
    %v3979 = vunpack.c.l.b16 %v3121
    %v3980 = vunpack.c.h.b16 %v3121
    %v3981 = vunpack.c.l.b16 %v3122
    %v3982 = vunpack.c.h.b16 %v3122
    %v3983 = vunpack.c.l.b16 %v3123
    %v3984 = vunpack.c.h.b16 %v3123
    %v3985 = vunpack.c.l.b16 %v3124
    %v3986 = vunpack.c.h.b16 %v3124
    %v3987 = vunpack.c.l.b16 %v3125
    %v3988 = vunpack.c.h.b16 %v3125
    %v3989 = vunpack.c.l.b16 %v3126
    %v3990 = vunpack.c.h.b16 %v3126
    %v3991 = vunpack.c.l.b16 %v3127
    %v3992 = vunpack.c.h.b16 %v3127
    %v3993 = vunpack.c.l.b16 %v3128
    %v3994 = vunpack.c.h.b16 %v3128
    %v3995 = vunpack.c.l.b16 %v3129
    %v3996 = vunpack.c.h.b16 %v3129
    %v3997 = vunpack.c.l.b16 %v3130
    %v3998 = vunpack.c.h.b16 %v3130
    %v3999 = vunpack.c.l.b16 %v3131
    %v4000 = vunpack.c.h.b16 %v3131
    %v4001 = vunpack.c.l.b16 %v3132
    %v4002 = vunpack.c.h.b16 %v3132
    %v4003 = vunpack.c.l.b16 %v3133
    %v4004 = vunpack.c.h.b16 %v3133
    %v4005 = vunpack.c.l.b16 %v3134
    %v4006 = vunpack.c.h.b16 %v3134
    %v4007 = vunpack.c.l.b16 %v3135
    %v4008 = vunpack.c.h.b16 %v3135
    %v4009 = vunpack.c.l.b16 %v3136
    %v4010 = vunpack.c.h.b16 %v3136
    %v4011 = vunpack.c.l.b16 %v3137
    %v4012 = vunpack.c.h.b16 %v3137
    %v4013 = vunpack.c.l.b16 %v3138
    %v4014 = vunpack.c.h.b16 %v3138
    %v4015 = vunpack.c.l.b16 %v3139
    %v4016 = vunpack.c.h.b16 %v3139
    %v4017 = vunpack.c.l.b16 %v3140
    %v4018 = vunpack.c.h.b16 %v3140
    %v4019 = vunpack.c.l.b16 %v3141
    %v4020 = vunpack.c.h.b16 %v3141
    %v4021 = vunpack.c.l.b16 %v3142
    %v4022 = vunpack.c.h.b16 %v3142
    %v4023 = vunpack.c.l.b16 %v3143
    %v4024 = vunpack.c.h.b16 %v3143
    %v4025 = vunpack.c.l.b16 %v3144
    %v4026 = vunpack.c.h.b16 %v3144
    %v4027 = vunpack.c.l.b16 %v3145
    %v4028 = vunpack.c.h.b16 %v3145
    %v4029 = vunpack.c.l.b16 %v3146
    %v4030 = vunpack.c.h.b16 %v3146
    %v4031 = vunpack.c.l.b16 %v3147
    %v4032 = vunpack.c.h.b16 %v3147
    %v4033 = vunpack.c.l.b16 %v3148
    %v4034 = vunpack.c.h.b16 %v3148
    %v4035 = vunpack.c.l.b16 %v3149
    %v4036 = vunpack.c.h.b16 %v3149
    %v4037 = vunpack.c.l.b16 %v3150
    %v4038 = vunpack.c.h.b16 %v3150
    %v4039 = vunpack.c.l.b16 %v3151
    %v4040 = vunpack.c.h.b16 %v3151
    %v4041 = vunpack.c.l.b16 %v3152
    %v4042 = vunpack.c.h.b16 %v3152
    %v4043 = vunpack.c.l.b16 %v3153
    %v4044 = vunpack.c.h.b16 %v3153
    %v4045 = vunpack.c.l.b16 %v3154
    %v4046 = vunpack.c.h.b16 %v3154
    %v4047 = vunpack.c.l.b16 %v3155
    %v4048 = vunpack.c.h.b16 %v3155
    %v4049 = vunpack.c.l.b16 %v3156
    %v4050 = vunpack.c.h.b16 %v3156
    %v4051 = vunpack.c.l.b16 %v3157
    %v4052 = vunpack.c.h.b16 %v3157
    %v4053 = vunpack.c.l.b16 %v3158
    %v4054 = vunpack.c.h.b16 %v3158
    %v4055 = vunpack.c.l.b16 %v3159
    %v4056 = vunpack.c.h.b16 %v3159
    %v4057 = vunpack.c.l.b16 %v3160
    %v4058 = vunpack.c.h.b16 %v3160
    %v4059 = vunpack.c.l.b16 %v3161
    %v4060 = vunpack.c.h.b16 %v3161
    %v4061 = vunpack.c.l.b16 %v3162
    %v4062 = vunpack.c.h.b16 %v3162
    %v4063 = vunpack.c.l.b16 %v3163
    %v4064 = vunpack.c.h.b16 %v3163
    %v4065 = vunpack.c.l.b16 %v3164
    %v4066 = vunpack.c.h.b16 %v3164
    %v4067 = vunpack.c.l.b16 %v3165
    %v4068 = vunpack.c.h.b16 %v3165
    %v4069 = vunpack.c.l.b16 %v3166
    %v4070 = vunpack.c.h.b16 %v3166
    %v4071 = vunpack.c.l.b16 %v3167
    %v4072 = vunpack.c.h.b16 %v3167
    %v4073 = vunpack.c.l.b16 %v3168
    %v4074 = vunpack.c.h.b16 %v3168
    %v4075 = vunpack.c.l.b16 %v3169
    %v4076 = vunpack.c.h.b16 %v3169
    %v4077 = vunpack.c.l.b16 %v3170
    %v4078 = vunpack.c.h.b16 %v3170
    %v4079 = vunpack.c.l.b16 %v3171
    %v4080 = vunpack.c.h.b16 %v3171
    %v4081 = vunpack.c.l.b16 %v3172
    %v4082 = vunpack.c.h.b16 %v3172
    %v4083 = vunpack.c.l.b16 %v3173
    %v4084 = vunpack.c.h.b16 %v3173
    %v4085 = vunpack.c.l.b16 %v3174
    %v4086 = vunpack.c.h.b16 %v3174
    %v4087 = vunpack.c.l.b16 %v3175
    %v4088 = vunpack.c.h.b16 %v3175
    %v4089 = vunpack.c.l.b16 %v3176
    %v4090 = vunpack.c.h.b16 %v3176
    %v4091 = vunpack.c.l.b16 %v3177
    %v4092 = vunpack.c.h.b16 %v3177
    %v4093 = vunpack.c.l.b16 %v3178
    %v4094 = vunpack.c.h.b16 %v3178
    %v4095 = vunpack.c.l.b16 %v3179
    %v4096 = vunpack.c.h.b16 %v3179
    %v4097 = vunpack.c.l.b16 %v3180
    %v4098 = vunpack.c.h.b16 %v3180
    %v4099 = vunpack.c.l.b16 %v3181
    %v4100 = vunpack.c.h.b16 %v3181
    %v4101 = vunpack.c.l.b16 %v3182
    %v4102 = vunpack.c.h.b16 %v3182
    %v4103 = vunpack.c.l.b16 %v3183
    %v4104 = vunpack.c.h.b16 %v3183
    %v4105 = vunpack.c.l.b16 %v3184
    %v4106 = vunpack.c.h.b16 %v3184
    %v4107 = vunpack.c.l.b16 %v3185
    %v4108 = vunpack.c.h.b16 %v3185
    %v4109 = vunpack.c.l.b16 %v3186
    %v4110 = vunpack.c.h.b16 %v3186
    %v4111 = vunpack.c.l.b16 %v3187
    %v4112 = vunpack.c.h.b16 %v3187
    %v4113 = vunpack.c.l.b16 %v3188
    %v4114 = vunpack.c.h.b16 %v3188
    %v4115 = vunpack.c.l.b16 %v3189
    %v4116 = vunpack.c.h.b16 %v3189
    %v4117 = vunpack.c.l.b16 %v3190
    %v4118 = vunpack.c.h.b16 %v3190
    %v4119 = vunpack.c.l.b16 %v3191
    %v4120 = vunpack.c.h.b16 %v3191
    %v4121 = vunpack.c.l.b16 %v3192
    %v4122 = vunpack.c.h.b16 %v3192
    %v4123 = vunpack.c.l.b16 %v3193
    %v4124 = vunpack.c.h.b16 %v3193
    %v4125 = vunpack.c.l.b16 %v3194
    %v4126 = vunpack.c.h.b16 %v3194
    %v4127 = vunpack.c.l.b16 %v3195
    %v4128 = vunpack.c.h.b16 %v3195
    %v4129 = vunpack.c.l.b16 %v3196
    %v4130 = vunpack.c.h.b16 %v3196
    %v4131 = vunpack.c.l.b16 %v3197
    %v4132 = vunpack.c.h.b16 %v3197
    %v4133 = vunpack.c.l.b16 %v3198
    %v4134 = vunpack.c.h.b16 %v3198
    %v4135 = vunpack.c.l.b16 %v3199
    %v4136 = vunpack.c.h.b16 %v3199
    %v4137 = vunpack.c.l.b16 %v3200
    %v4138 = vunpack.c.h.b16 %v3200
    %v4139 = vunpack.c.l.b16 %v3201
    %v4140 = vunpack.c.h.b16 %v3201
    %v4141 = vunpack.c.l.b16 %v3202
    %v4142 = vunpack.c.h.b16 %v3202
    %v4143 = vunpack.c.l.b16 %v3203
    %v4144 = vunpack.c.h.b16 %v3203
    %v4145 = vunpack.c.l.b16 %v3204
    %v4146 = vunpack.c.h.b16 %v3204
    %v4147 = vunpack.c.l.b16 %v3205
    %v4148 = vunpack.c.h.b16 %v3205
    %v4149 = vunpack.c.l.b16 %v3206
    %v4150 = vunpack.c.h.b16 %v3206
    %v4151 = vunpack.c.l.b16 %v3207
    %v4152 = vunpack.c.h.b16 %v3207
    %v4153 = vunpack.c.l.b16 %v3208
    %v4154 = vunpack.c.h.b16 %v3208
    %v4155 = vunpack.c.l.b16 %v3209
    %v4156 = vunpack.c.h.b16 %v3209
    %v4157 = vunpack.c.l.b16 %v3210
    %v4158 = vunpack.c.h.b16 %v3210
    %v4159 = vunpack.c.l.b16 %v3211
    %v4160 = vunpack.c.h.b16 %v3211
    %v4161 = vunpack.c.l.b16 %v3212
    %v4162 = vunpack.c.h.b16 %v3212
    %v4163 = vunpack.c.l.b16 %v3213
    %v4164 = vunpack.c.h.b16 %v3213
    %v4165 = vunpack.c.l.b16 %v3214
    %v4166 = vunpack.c.h.b16 %v3214
    %v4167 = vunpack.c.l.b16 %v3215
    %v4168 = vunpack.c.h.b16 %v3215
    %v4169 = vunpack.c.l.b16 %v3216
    %v4170 = vunpack.c.h.b16 %v3216
    %v4171 = vunpack.c.l.b16 %v3217
    %v4172 = vunpack.c.h.b16 %v3217
    %v4173 = vunpack.c.l.b16 %v3218
    %v4174 = vunpack.c.h.b16 %v3218
    %v4175 = vunpack.c.l.b16 %v3219
    %v4176 = vunpack.c.h.b16 %v3219
    %v4177 = vunpack.c.l.b16 %v3220
    %v4178 = vunpack.c.h.b16 %v3220
    %v4179 = vunpack.c.l.b16 %v3221
    %v4180 = vunpack.c.h.b16 %v3221
    %v4181 = vunpack.c.l.b16 %v3222
    %v4182 = vunpack.c.h.b16 %v3222
    %v4183 = vunpack.c.l.b16 %v3223
    %v4184 = vunpack.c.h.b16 %v3223
    %v4185 = vunpack.c.l.b16 %v3224
    %v4186 = vunpack.c.h.b16 %v3224
    %v4187 = vunpack.c.l.b16 %v3225
    %v4188 = vunpack.c.h.b16 %v3225
    %v4189 = vunpack.c.l.b16 %v3226
    %v4190 = vunpack.c.h.b16 %v3226
    %v4191 = vunpack.c.l.b16 %v3227
    %v4192 = vunpack.c.h.b16 %v3227
    %v4193 = vunpack.c.l.b16 %v3228
    %v4194 = vunpack.c.h.b16 %v3228
    %v4195 = vunpack.c.l.b16 %v3229
    %v4196 = vunpack.c.h.b16 %v3229
    %v4197 = vunpack.c.l.b16 %v3230
    %v4198 = vunpack.c.h.b16 %v3230
    %v4199 = vunpack.c.l.b16 %v3231
    %v4200 = vunpack.c.h.b16 %v3231
    %v4201 = vunpack.c.l.b16 %v3232
    %v4202 = vunpack.c.h.b16 %v3232
    %v4203 = vunpack.c.l.b16 %v3233
    %v4204 = vunpack.c.h.b16 %v3233
    %v4205 = vunpack.c.l.b16 %v3234
    %v4206 = vunpack.c.h.b16 %v3234
    %v4207 = vunpack.c.l.b16 %v3235
    %v4208 = vunpack.c.h.b16 %v3235
    %v4209 = vunpack.c.l.b16 %v3236
    %v4210 = vunpack.c.h.b16 %v3236
    %v4211 = vunpack.c.l.b16 %v3237
    %v4212 = vunpack.c.h.b16 %v3237
    %v4213 = vunpack.c.l.b16 %v3238
    %v4214 = vunpack.c.h.b16 %v3238
    %v4215 = vunpack.c.l.b16 %v3239
    %v4216 = vunpack.c.h.b16 %v3239
    %v4217 = vunpack.c.l.b16 %v3240
    %v4218 = vunpack.c.h.b16 %v3240
    %v4219 = vunpack.c.l.b16 %v3241
    %v4220 = vunpack.c.h.b16 %v3241
    %v4221 = vunpack.c.l.b16 %v3242
    %v4222 = vunpack.c.h.b16 %v3242
    %v4223 = vunpack.c.l.b16 %v3243
    %v4224 = vunpack.c.h.b16 %v3243
    %v4225 = vunpack.c.l.b16 %v3244
    %v4226 = vunpack.c.h.b16 %v3244
    %v4227 = vunpack.c.l.b16 %v3245
    %v4228 = vunpack.c.h.b16 %v3245
    %v4229 = vunpack.c.l.b16 %v3246
    %v4230 = vunpack.c.h.b16 %v3246
    %v4231 = vunpack.c.l.b16 %v3247
    %v4232 = vunpack.c.h.b16 %v3247
    %v4233 = vunpack.c.l.b16 %v3248
    %v4234 = vunpack.c.h.b16 %v3248
    %v4235 = vunpack.c.l.b16 %v3249
    %v4236 = vunpack.c.h.b16 %v3249
    %v4237 = vunpack.c.l.b16 %v3250
    %v4238 = vunpack.c.h.b16 %v3250
    %v4239 = vunpack.c.l.b16 %v3251
    %v4240 = vunpack.c.h.b16 %v3251
    %v4241 = vunpack.c.l.b16 %v3252
    %v4242 = vunpack.c.h.b16 %v3252
    %v4243 = vunpack.c.l.b16 %v3253
    %v4244 = vunpack.c.h.b16 %v3253
    %v4245 = vunpack.c.l.b16 %v3254
    %v4246 = vunpack.c.h.b16 %v3254
    %v4247 = vunpack.c.l.b16 %v3255
    %v4248 = vunpack.c.h.b16 %v3255
    %v4249 = vunpack.c.l.b16 %v3256
    %v4250 = vunpack.c.h.b16 %v3256
    %v4251 = vunpack.c.l.b16 %v3257
    %v4252 = vunpack.c.h.b16 %v3257
    %v4253 = vunpack.c.l.b16 %v3258
    %v4254 = vunpack.c.h.b16 %v3258
    %v4255 = vunpack.c.l.b16 %v3259
    %v4256 = vunpack.c.h.b16 %v3259
    %v4257 = vunpack.c.l.b16 %v3260
    %v4258 = vunpack.c.h.b16 %v3260
    %v4259 = vunpack.c.l.b16 %v3261
    %v4260 = vunpack.c.h.b16 %v3261
    %v4261 = vunpack.c.l.b16 %v3262
    %v4262 = vunpack.c.h.b16 %v3262
    %v4263 = vunpack.c.l.b16 %v3263
    %v4264 = vunpack.c.h.b16 %v3263
    %v4265 = vunpack.c.l.b16 %v3264
    %v4266 = vunpack.c.h.b16 %v3264
    %v4267 = vunpack.c.l.b16 %v3265
    %v4268 = vunpack.c.h.b16 %v3265
    %v4269 = vunpack.c.l.b16 %v3266
    %v4270 = vunpack.c.h.b16 %v3266
    %v4271 = vunpack.c.l.b16 %v3267
    %v4272 = vunpack.c.h.b16 %v3267
    %v4273 = vunpack.c.l.b16 %v3268
    %v4274 = vunpack.c.h.b16 %v3268
    %v4275 = vunpack.c.l.b16 %v3269
    %v4276 = vunpack.c.h.b16 %v3269
    %v4277 = vunpack.c.l.b16 %v3270
    %v4278 = vunpack.c.h.b16 %v3270
    %v4279 = vunpack.c.l.b16 %v3271
    %v4280 = vunpack.c.h.b16 %v3271
    %v4281 = vunpack.c.l.b16 %v3272
    %v4282 = vunpack.c.h.b16 %v3272
    %v4283 = vunpack.c.l.b16 %v3273
    %v4284 = vunpack.c.h.b16 %v3273
    %v4285 = vunpack.c.l.b16 %v3274
    %v4286 = vunpack.c.h.b16 %v3274
    %v4287 = vunpack.c.l.b16 %v3275
    %v4288 = vunpack.c.h.b16 %v3275
    %v4289 = vunpack.c.l.b16 %v3276
    %v4290 = vunpack.c.h.b16 %v3276
    %v4291 = vunpack.c.l.b16 %v3277
    %v4292 = vunpack.c.h.b16 %v3277
    %v4293 = vunpack.c.l.b16 %v3278
    %v4294 = vunpack.c.h.b16 %v3278
    %v4295 = vunpack.c.l.b16 %v3279
    %v4296 = vunpack.c.h.b16 %v3279
    %v4297 = vunpack.c.l.b16 %v3280
    %v4298 = vunpack.c.h.b16 %v3280
    %v4299 = vunpack.c.l.b16 %v3281
    %v4300 = vunpack.c.h.b16 %v3281
    %v4301 = vunpack.c.l.b16 %v3282
    %v4302 = vunpack.c.h.b16 %v3282
    %v4303 = vunpack.c.l.b16 %v3283
    %v4304 = vunpack.c.h.b16 %v3283
    %v4305 = vunpack.c.l.b16 %v3284
    %v4306 = vunpack.c.h.b16 %v3284
    %v4307 = vunpack.c.l.b16 %v3285
    %v4308 = vunpack.c.h.b16 %v3285
    %v4309 = vunpack.c.l.b16 %v3286
    %v4310 = vunpack.c.h.b16 %v3286
    %v4311 = vunpack.c.l.b16 %v3287
    %v4312 = vunpack.c.h.b16 %v3287
    %v4313 = vunpack.c.l.b16 %v3288
    %v4314 = vunpack.c.h.b16 %v3288
    %v4315 = vunpack.c.l.b16 %v3289
    %v4316 = vunpack.c.h.b16 %v3289
    %v4317 = vunpack.c.l.b16 %v3290
    %v4318 = vunpack.c.h.b16 %v3290
    %v4319 = vunpack.c.l.b16 %v3291
    %v4320 = vunpack.c.h.b16 %v3291
    %v4321 = vunpack.c.l.b16 %v3292
    %v4322 = vunpack.c.h.b16 %v3292
    %v4323 = vunpack.c.l.b16 %v3293
    %v4324 = vunpack.c.h.b16 %v3293
    %v4325 = vunpack.c.l.b16 %v3294
    %v4326 = vunpack.c.h.b16 %v3294
    %v4327 = vunpack.c.l.b16 %v3295
    %v4328 = vunpack.c.h.b16 %v3295
    %v4329 = vunpack.c.l.b16 %v3296
    %v4330 = vunpack.c.h.b16 %v3296
    %v4331 = vunpack.c.l.b16 %v3297
    %v4332 = vunpack.c.h.b16 %v3297
    %v4333 = vunpack.c.l.b16 %v3298
    %v4334 = vunpack.c.h.b16 %v3298
    %v4335 = vunpack.c.l.b16 %v3299
    %v4336 = vunpack.c.h.b16 %v3299
    %v4337 = vunpack.c.l.b16 %v3300
    %v4338 = vunpack.c.h.b16 %v3300
    %v4339 = vunpack.c.l.b16 %v3301
    %v4340 = vunpack.c.h.b16 %v3301
    %v4341 = vunpack.c.l.b16 %v3302
    %v4342 = vunpack.c.h.b16 %v3302
    %v4343 = vunpack.c.l.b16 %v3303
    %v4344 = vunpack.c.h.b16 %v3303
    %v4345 = vunpack.c.l.b16 %v3304
    %v4346 = vunpack.c.h.b16 %v3304
    %v4347 = vunpack.c.l.b16 %v3305
    %v4348 = vunpack.c.h.b16 %v3305
    %v4349 = vunpack.c.l.b16 %v3306
    %v4350 = vunpack.c.h.b16 %v3306
    %v4351 = vunpack.c.l.b16 %v3307
    %v4352 = vunpack.c.h.b16 %v3307
    %v4353 = vunpack.c.l.b16 %v3308
    %v4354 = vunpack.c.h.b16 %v3308
    %v4355 = vunpack.c.l.b16 %v3309
    %v4356 = vunpack.c.h.b16 %v3309
    %v4357 = vunpack.c.l.b16 %v3310
    %v4358 = vunpack.c.h.b16 %v3310
    %v4359 = vunpack.c.l.b16 %v3311
    %v4360 = vunpack.c.h.b16 %v3311
    %v4361 = vunpack.c.l.b16 %v3312
    %v4362 = vunpack.c.h.b16 %v3312
    %v4363 = vunpack.c.l.b16 %v3313
    %v4364 = vunpack.c.h.b16 %v3313
    %v4365 = vunpack.c.l.b16 %v3314
    %v4366 = vunpack.c.h.b16 %v3314
    %v4367 = vunpack.c.l.b16 %v3315
    %v4368 = vunpack.c.h.b16 %v3315
    %v4369 = vunpack.c.l.b16 %v3316
    %v4370 = vunpack.c.h.b16 %v3316
    %v4371 = vunpack.c.l.b16 %v3317
    %v4372 = vunpack.c.h.b16 %v3317
    %v4373 = vunpack.c.l.b16 %v3318
    %v4374 = vunpack.c.h.b16 %v3318
    %v4375 = vunpack.c.l.b16 %v3319
    %v4376 = vunpack.c.h.b16 %v3319
    %v4377 = vunpack.c.l.b16 %v3320
    %v4378 = vunpack.c.h.b16 %v3320
    %v4379 = vunpack.c.l.b16 %v3321
    %v4380 = vunpack.c.h.b16 %v3321
    %v4381 = vunpack.c.l.b16 %v3322
    %v4382 = vunpack.c.h.b16 %v3322
    %v4383 = vunpack.c.l.b16 %v3323
    %v4384 = vunpack.c.h.b16 %v3323
    %v4385 = vunpack.c.l.b16 %v3324
    %v4386 = vunpack.c.h.b16 %v3324
    %v4387 = vunpack.c.l.b16 %v3325
    %v4388 = vunpack.c.h.b16 %v3325
    %v4389 = vunpack.c.l.b16 %v3326
    %v4390 = vunpack.c.h.b16 %v3326
    %v4391 = vunpack.c.l.b16 %v3327
    %v4392 = vunpack.c.h.b16 %v3327
    %v4393 = vunpack.c.l.b16 %v3328
    %v4394 = vunpack.c.h.b16 %v3328
    %v4395 = vunpack.c.l.b16 %v3329
    %v4396 = vunpack.c.h.b16 %v3329
    %v4397 = vunpack.c.l.b16 %v3330
    %v4398 = vunpack.c.h.b16 %v3330
    %v4399 = vunpack.c.l.b16 %v3331
    %v4400 = vunpack.c.h.b16 %v3331
    %v4401 = vunpack.c.l.b16 %v3332
    %v4402 = vunpack.c.h.b16 %v3332
    %v4403 = vunpack.c.l.b16 %v3333
    %v4404 = vunpack.c.h.b16 %v3333
    %v4405 = vunpack.c.l.b16 %v3334
    %v4406 = vunpack.c.h.b16 %v3334
    %v4407 = vunpack.c.l.b16 %v3335
    %v4408 = vunpack.c.h.b16 %v3335
    %v4409 = vunpack.c.l.b16 %v3336
    %v4410 = vunpack.c.h.b16 %v3336
    %v4411 = vunpack.c.l.b16 %v3337
    %v4412 = vunpack.c.h.b16 %v3337
    %v4413 = vunpack.c.l.b16 %v3338
    %v4414 = vunpack.c.h.b16 %v3338
    %v4415 = vunpack.c.l.b16 %v3339
    %v4416 = vunpack.c.h.b16 %v3339
    %v4417 = vunpack.c.l.b16 %v3340
    %v4418 = vunpack.c.h.b16 %v3340
    %v4419 = vunpack.c.l.b16 %v3341
    %v4420 = vunpack.c.h.b16 %v3341
    %v4421 = vunpack.c.l.b16 %v3342
    %v4422 = vunpack.c.h.b16 %v3342
    %v4423 = vunpack.c.l.b16 %v3343
    %v4424 = vunpack.c.h.b16 %v3343
    %v4425 = vunpack.c.l.b16 %v3344
    %v4426 = vunpack.c.h.b16 %v3344
    %v4427 = vunpack.c.l.b16 %v3345
    %v4428 = vunpack.c.h.b16 %v3345
    %v4429 = vunpack.c.l.b16 %v3346
    %v4430 = vunpack.c.h.b16 %v3346
    %v4431 = vunpack.c.l.b16 %v3347
    %v4432 = vunpack.c.h.b16 %v3347
    %v4433 = vunpack.c.l.b16 %v3348
    %v4434 = vunpack.c.h.b16 %v3348
    %v4435 = vunpack.c.l.b16 %v3349
    %v4436 = vunpack.c.h.b16 %v3349
    %v4437 = vunpack.c.l.b16 %v3350
    %v4438 = vunpack.c.h.b16 %v3350
    %v4439 = vunpack.c.l.b16 %v3351
    %v4440 = vunpack.c.h.b16 %v3351
    %v4441 = vunpack.c.l.b16 %v3352
    %v4442 = vunpack.c.h.b16 %v3352
    %v4443 = vunpack.c.l.b16 %v3353
    %v4444 = vunpack.c.h.b16 %v3353
    %v4445 = vunpack.c.l.b16 %v3354
    %v4446 = vunpack.c.h.b16 %v3354
    %v4447 = vunpack.c.l.b16 %v3355
    %v4448 = vunpack.c.h.b16 %v3355
    %v4449 = vunpack.c.l.b16 %v3356
    %v4450 = vunpack.c.h.b16 %v3356
    %v4451 = vunpack.c.l.b16 %v3357
    %v4452 = vunpack.c.h.b16 %v3357
    %v4453 = vunpack.c.l.b16 %v3358
    %v4454 = vunpack.c.h.b16 %v3358
    %v4455 = vunpack.c.l.b16 %v3359
    %v4456 = vunpack.c.h.b16 %v3359
    %v4457 = vunpack.c.l.b16 %v3360
    %v4458 = vunpack.c.h.b16 %v3360
    %v4459 = vunpack.c.l.b16 %v3361
    %v4460 = vunpack.c.h.b16 %v3361
    %v4461 = vunpack.c.l.b16 %v3362
    %v4462 = vunpack.c.h.b16 %v3362
    %v4463 = vunpack.c.l.b16 %v3363
    %v4464 = vunpack.c.h.b16 %v3363
    %v4465 = vunpack.c.l.b16 %v3364
    %v4466 = vunpack.c.h.b16 %v3364
    %v4467 = vunpack.c.l.b16 %v3365
    %v4468 = vunpack.c.h.b16 %v3365
    %v4469 = vunpack.c.l.b16 %v3366
    %v4470 = vunpack.c.h.b16 %v3366
    %v4471 = vunpack.c.l.b16 %v3367
    %v4472 = vunpack.c.h.b16 %v3367
    %v4473 = vunpack.c.l.b16 %v3368
    %v4474 = vunpack.c.h.b16 %v3368
    %v4475 = vunpack.c.l.b16 %v3369
    %v4476 = vunpack.c.h.b16 %v3369
    %v4477 = vunpack.c.l.b16 %v3370
    %v4478 = vunpack.c.h.b16 %v3370
    %v4479 = vunpack.c.l.b16 %v3371
    %v4480 = vunpack.c.h.b16 %v3371
    %v4481 = vunpack.c.l.b16 %v3372
    %v4482 = vunpack.c.h.b16 %v3372
    %v4483 = vunpack.c.l.b16 %v3373
    %v4484 = vunpack.c.h.b16 %v3373
    %v4485 = vunpack.c.l.b16 %v3374
    %v4486 = vunpack.c.h.b16 %v3374
    %v4487 = vunpack.c.l.b16 %v3375
    %v4488 = vunpack.c.h.b16 %v3375
    %v4489 = vunpack.c.l.b16 %v3376
    %v4490 = vunpack.c.h.b16 %v3376
    %v4491 = vunpack.c.l.b16 %v3377
    %v4492 = vunpack.c.h.b16 %v3377
    %v4493 = vunpack.c.l.b16 %v3378
    %v4494 = vunpack.c.h.b16 %v3378
    %v4495 = vunpack.c.l.b16 %v3379
    %v4496 = vunpack.c.h.b16 %v3379
    %v4497 = vunpack.c.l.b16 %v3380
    %v4498 = vunpack.c.h.b16 %v3380
    %v4499 = vunpack.c.l.b16 %v3381
    %v4500 = vunpack.c.h.b16 %v3381
    %v4501 = vunpack.c.l.b16 %v3382
    %v4502 = vunpack.c.h.b16 %v3382
    %v4503 = vunpack.c.l.b16 %v3383
    %v4504 = vunpack.c.h.b16 %v3383
    %v4505 = vunpack.c.l.b16 %v3384
    %v4506 = vunpack.c.h.b16 %v3384
    %v4507 = vunpack.c.l.b16 %v3385
    %v4508 = vunpack.c.h.b16 %v3385
    %v4509 = vunpack.c.l.b16 %v3386
    %v4510 = vunpack.c.h.b16 %v3386
    %v4511 = vunpack.c.l.b16 %v3387
    %v4512 = vunpack.c.h.b16 %v3387
    %v4513 = vunpack.c.l.b16 %v3388
    %v4514 = vunpack.c.h.b16 %v3388
    %v4515 = vunpack.c.l.b16 %v3389
    %v4516 = vunpack.c.h.b16 %v3389
    %v4517 = vunpack.c.l.b16 %v3390
    %v4518 = vunpack.c.h.b16 %v3390
    %v4519 = vunpack.c.l.b16 %v3391
    %v4520 = vunpack.c.h.b16 %v3391
    %v4521 = vunpack.c.l.b16 %v3392
    %v4522 = vunpack.c.h.b16 %v3392
    %v4523 = vunpack.c.l.b16 %v3393
    %v4524 = vunpack.c.h.b16 %v3393
    %v4525 = vunpack.c.l.b16 %v3394
    %v4526 = vunpack.c.h.b16 %v3394
    %v4527 = vunpack.c.l.b16 %v3395
    %v4528 = vunpack.c.h.b16 %v3395
    %v4529 = vunpack.c.l.b16 %v3396
    %v4530 = vunpack.c.h.b16 %v3396
    %v4531 = vunpack.c.l.b16 %v3397
    %v4532 = vunpack.c.h.b16 %v3397
    %v4533 = vunpack.c.l.b16 %v3398
    %v4534 = vunpack.c.h.b16 %v3398
    %v4535 = vunpack.c.l.b16 %v3399
    %v4536 = vunpack.c.h.b16 %v3399
    %v4537 = vunpack.c.l.b16 %v3400
    %v4538 = vunpack.c.h.b16 %v3400
    %v4539 = vunpack.c.l.b16 %v3401
    %v4540 = vunpack.c.h.b16 %v3401
    %v4541 = vunpack.c.l.b16 %v3402
    %v4542 = vunpack.c.h.b16 %v3402
    %v4543 = vunpack.c.l.b16 %v3403
    %v4544 = vunpack.c.h.b16 %v3403
    %v4545 = vunpack.c.l.b16 %v3404
    %v4546 = vunpack.c.h.b16 %v3404
    %v4547 = vunpack.c.l.b16 %v3405
    %v4548 = vunpack.c.h.b16 %v3405
    %v4549 = vunpack.c.l.b16 %v3406
    %v4550 = vunpack.c.h.b16 %v3406
    %v4551 = vunpack.c.l.b16 %v3407
    %v4552 = vunpack.c.h.b16 %v3407
    %v4553 = vunpack.c.l.b16 %v3408
    %v4554 = vunpack.c.h.b16 %v3408
    %v4555 = vunpack.c.l.b16 %v3409
    %v4556 = vunpack.c.h.b16 %v3409
    %v4557 = vunpack.c.l.b16 %v3410
    %v4558 = vunpack.c.h.b16 %v3410
    %v4559 = vunpack.c.l.b16 %v3411
    %v4560 = vunpack.c.h.b16 %v3411
    %v4561 = vunpack.c.l.b16 %v3412
    %v4562 = vunpack.c.h.b16 %v3412
    %v4563 = vunpack.c.l.b16 %v3413
    %v4564 = vunpack.c.h.b16 %v3413
    %v4565 = vunpack.c.l.b16 %v3414
    %v4566 = vunpack.c.h.b16 %v3414
    %v4567 = vpack.c.b16 %v3803, %v3799
    %v4568 = vpack.c.b16 %v3804, %v3800
    %v4569 = vpack.c.b16 %v3805, %v3801
    %v4570 = vpack.c.b16 %v3806, %v3802
    %v4571 = vpack.c.b16 %v3811, %v3807
    %v4572 = vpack.c.b16 %v3812, %v3808
    %v4573 = vpack.c.b16 %v3813, %v3809
    %v4574 = vpack.c.b16 %v3814, %v3810
    %v4575 = vpack.c.b16 %v3819, %v3815
    %v4576 = vpack.c.b16 %v3820, %v3816
    %v4577 = vpack.c.b16 %v3821, %v3817
    %v4578 = vpack.c.b16 %v3822, %v3818
    %v4579 = vpack.c.b16 %v3827, %v3823
    %v4580 = vpack.c.b16 %v3828, %v3824
    %v4581 = vpack.c.b16 %v3829, %v3825
    %v4582 = vpack.c.b16 %v3830, %v3826
    %v4583 = vpack.c.b16 %v3835, %v3831
    %v4584 = vpack.c.b16 %v3836, %v3832
    %v4585 = vpack.c.b16 %v3837, %v3833
    %v4586 = vpack.c.b16 %v3838, %v3834
    %v4587 = vpack.c.b16 %v3843, %v3839
    %v4588 = vpack.c.b16 %v3844, %v3840
    %v4589 = vpack.c.b16 %v3845, %v3841
    %v4590 = vpack.c.b16 %v3846, %v3842
    %v4591 = vpack.c.b16 %v3851, %v3847
    %v4592 = vpack.c.b16 %v3852, %v3848
    %v4593 = vpack.c.b16 %v3853, %v3849
    %v4594 = vpack.c.b16 %v3854, %v3850
    %v4595 = vpack.c.b16 %v3859, %v3855
    %v4596 = vpack.c.b16 %v3860, %v3856
    %v4597 = vpack.c.b16 %v3861, %v3857
    %v4598 = vpack.c.b16 %v3862, %v3858
    %v4599 = vpack.c.b16 %v3867, %v3863
    %v4600 = vpack.c.b16 %v3868, %v3864
    %v4601 = vpack.c.b16 %v3869, %v3865
    %v4602 = vpack.c.b16 %v3870, %v3866
    %v4603 = vpack.c.b16 %v3875, %v3871
    %v4604 = vpack.c.b16 %v3876, %v3872
    %v4605 = vpack.c.b16 %v3877, %v3873
    %v4606 = vpack.c.b16 %v3878, %v3874
    %v4607 = vpack.c.b16 %v3883, %v3879
    %v4608 = vpack.c.b16 %v3884, %v3880
    %v4609 = vpack.c.b16 %v3885, %v3881
    %v4610 = vpack.c.b16 %v3886, %v3882
    %v4611 = vpack.c.b16 %v3891, %v3887
    %v4612 = vpack.c.b16 %v3892, %v3888
    %v4613 = vpack.c.b16 %v3893, %v3889
    %v4614 = vpack.c.b16 %v3894, %v3890
    %v4615 = vpack.c.b16 %v3899, %v3895
    %v4616 = vpack.c.b16 %v3900, %v3896
    %v4617 = vpack.c.b16 %v3901, %v3897
    %v4618 = vpack.c.b16 %v3902, %v3898
    %v4619 = vpack.c.b16 %v3907, %v3903
    %v4620 = vpack.c.b16 %v3908, %v3904
    %v4621 = vpack.c.b16 %v3909, %v3905
    %v4622 = vpack.c.b16 %v3910, %v3906
    %v4623 = vpack.c.b16 %v3915, %v3911
    %v4624 = vpack.c.b16 %v3916, %v3912
    %v4625 = vpack.c.b16 %v3917, %v3913
    %v4626 = vpack.c.b16 %v3918, %v3914
    %v4627 = vpack.c.b16 %v3923, %v3919
    %v4628 = vpack.c.b16 %v3924, %v3920
    %v4629 = vpack.c.b16 %v3925, %v3921
    %v4630 = vpack.c.b16 %v3926, %v3922
    %v4631 = vpack.c.b16 %v3931, %v3927
    %v4632 = vpack.c.b16 %v3932, %v3928
    %v4633 = vpack.c.b16 %v3933, %v3929
    %v4634 = vpack.c.b16 %v3934, %v3930
    %v4635 = vpack.c.b16 %v3939, %v3935
    %v4636 = vpack.c.b16 %v3940, %v3936
    %v4637 = vpack.c.b16 %v3941, %v3937
    %v4638 = vpack.c.b16 %v3942, %v3938
    %v4639 = vpack.c.b16 %v3947, %v3943
    %v4640 = vpack.c.b16 %v3948, %v3944
    %v4641 = vpack.c.b16 %v3949, %v3945
    %v4642 = vpack.c.b16 %v3950, %v3946
    %v4643 = vpack.c.b16 %v3955, %v3951
    %v4644 = vpack.c.b16 %v3956, %v3952
    %v4645 = vpack.c.b16 %v3957, %v3953
    %v4646 = vpack.c.b16 %v3958, %v3954
    %v4647 = vpack.c.b16 %v3963, %v3959
    %v4648 = vpack.c.b16 %v3964, %v3960
    %v4649 = vpack.c.b16 %v3965, %v3961
    %v4650 = vpack.c.b16 %v3966, %v3962
    %v4651 = vpack.c.b16 %v3971, %v3967
    %v4652 = vpack.c.b16 %v3972, %v3968
    %v4653 = vpack.c.b16 %v3973, %v3969
    %v4654 = vpack.c.b16 %v3974, %v3970
    %v4655 = vpack.c.b16 %v3979, %v3975
    %v4656 = vpack.c.b16 %v3980, %v3976
    %v4657 = vpack.c.b16 %v3981, %v3977
    %v4658 = vpack.c.b16 %v3982, %v3978
    %v4659 = vpack.c.b16 %v3987, %v3983
    %v4660 = vpack.c.b16 %v3988, %v3984
    %v4661 = vpack.c.b16 %v3989, %v3985
    %v4662 = vpack.c.b16 %v3990, %v3986
    %v4663 = vpack.c.b16 %v3995, %v3991
    %v4664 = vpack.c.b16 %v3996, %v3992
    %v4665 = vpack.c.b16 %v3997, %v3993
    %v4666 = vpack.c.b16 %v3998, %v3994
    %v4667 = vpack.c.b16 %v4003, %v3999
    %v4668 = vpack.c.b16 %v4004, %v4000
    %v4669 = vpack.c.b16 %v4005, %v4001
    %v4670 = vpack.c.b16 %v4006, %v4002
    %v4671 = vpack.c.b16 %v4011, %v4007
    %v4672 = vpack.c.b16 %v4012, %v4008
    %v4673 = vpack.c.b16 %v4013, %v4009
    %v4674 = vpack.c.b16 %v4014, %v4010
    %v4675 = vpack.c.b16 %v4019, %v4015
    %v4676 = vpack.c.b16 %v4020, %v4016
    %v4677 = vpack.c.b16 %v4021, %v4017
    %v4678 = vpack.c.b16 %v4022, %v4018
    %v4679 = vpack.c.b16 %v4027, %v4023
    %v4680 = vpack.c.b16 %v4028, %v4024
    %v4681 = vpack.c.b16 %v4029, %v4025
    %v4682 = vpack.c.b16 %v4030, %v4026
    %v4683 = vpack.c.b16 %v4035, %v4031
    %v4684 = vpack.c.b16 %v4036, %v4032
    %v4685 = vpack.c.b16 %v4037, %v4033
    %v4686 = vpack.c.b16 %v4038, %v4034
    %v4687 = vpack.c.b16 %v4043, %v4039
    %v4688 = vpack.c.b16 %v4044, %v4040
    %v4689 = vpack.c.b16 %v4045, %v4041
    %v4690 = vpack.c.b16 %v4046, %v4042
    %v4691 = vpack.c.b16 %v4051, %v4047
    %v4692 = vpack.c.b16 %v4052, %v4048
    %v4693 = vpack.c.b16 %v4053, %v4049
    %v4694 = vpack.c.b16 %v4054, %v4050
    %v4695 = vpack.c.b16 %v4059, %v4055
    %v4696 = vpack.c.b16 %v4060, %v4056
    %v4697 = vpack.c.b16 %v4061, %v4057
    %v4698 = vpack.c.b16 %v4062, %v4058
    %v4699 = vpack.c.b16 %v4067, %v4063
    %v4700 = vpack.c.b16 %v4068, %v4064
    %v4701 = vpack.c.b16 %v4069, %v4065
    %v4702 = vpack.c.b16 %v4070, %v4066
    %v4703 = vpack.c.b16 %v4075, %v4071
    %v4704 = vpack.c.b16 %v4076, %v4072
    %v4705 = vpack.c.b16 %v4077, %v4073
    %v4706 = vpack.c.b16 %v4078, %v4074
    %v4707 = vpack.c.b16 %v4083, %v4079
    %v4708 = vpack.c.b16 %v4084, %v4080
    %v4709 = vpack.c.b16 %v4085, %v4081
    %v4710 = vpack.c.b16 %v4086, %v4082
    %v4711 = vpack.c.b16 %v4091, %v4087
    %v4712 = vpack.c.b16 %v4092, %v4088
    %v4713 = vpack.c.b16 %v4093, %v4089
    %v4714 = vpack.c.b16 %v4094, %v4090
    %v4715 = vpack.c.b16 %v4099, %v4095
    %v4716 = vpack.c.b16 %v4100, %v4096
    %v4717 = vpack.c.b16 %v4101, %v4097
    %v4718 = vpack.c.b16 %v4102, %v4098
    %v4719 = vpack.c.b16 %v4107, %v4103
    %v4720 = vpack.c.b16 %v4108, %v4104
    %v4721 = vpack.c.b16 %v4109, %v4105
    %v4722 = vpack.c.b16 %v4110, %v4106
    %v4723 = vpack.c.b16 %v4115, %v4111
    %v4724 = vpack.c.b16 %v4116, %v4112
    %v4725 = vpack.c.b16 %v4117, %v4113
    %v4726 = vpack.c.b16 %v4118, %v4114
    %v4727 = vpack.c.b16 %v4123, %v4119
    %v4728 = vpack.c.b16 %v4124, %v4120
    %v4729 = vpack.c.b16 %v4125, %v4121
    %v4730 = vpack.c.b16 %v4126, %v4122
    %v4731 = vpack.c.b16 %v4131, %v4127
    %v4732 = vpack.c.b16 %v4132, %v4128
    %v4733 = vpack.c.b16 %v4133, %v4129
    %v4734 = vpack.c.b16 %v4134, %v4130
    %v4735 = vpack.c.b16 %v4139, %v4135
    %v4736 = vpack.c.b16 %v4140, %v4136
    %v4737 = vpack.c.b16 %v4141, %v4137
    %v4738 = vpack.c.b16 %v4142, %v4138
    %v4739 = vpack.c.b16 %v4147, %v4143
    %v4740 = vpack.c.b16 %v4148, %v4144
    %v4741 = vpack.c.b16 %v4149, %v4145
    %v4742 = vpack.c.b16 %v4150, %v4146
    %v4743 = vpack.c.b16 %v4155, %v4151
    %v4744 = vpack.c.b16 %v4156, %v4152
    %v4745 = vpack.c.b16 %v4157, %v4153
    %v4746 = vpack.c.b16 %v4158, %v4154
    %v4747 = vpack.c.b16 %v4163, %v4159
    %v4748 = vpack.c.b16 %v4164, %v4160
    %v4749 = vpack.c.b16 %v4165, %v4161
    %v4750 = vpack.c.b16 %v4166, %v4162
    %v4751 = vpack.c.b16 %v4171, %v4167
    %v4752 = vpack.c.b16 %v4172, %v4168
    %v4753 = vpack.c.b16 %v4173, %v4169
    %v4754 = vpack.c.b16 %v4174, %v4170
    %v4755 = vpack.c.b16 %v4179, %v4175
    %v4756 = vpack.c.b16 %v4180, %v4176
    %v4757 = vpack.c.b16 %v4181, %v4177
    %v4758 = vpack.c.b16 %v4182, %v4178
    %v4759 = vpack.c.b16 %v4187, %v4183
    %v4760 = vpack.c.b16 %v4188, %v4184
    %v4761 = vpack.c.b16 %v4189, %v4185
    %v4762 = vpack.c.b16 %v4190, %v4186
    %v4763 = vpack.c.b16 %v4195, %v4191
    %v4764 = vpack.c.b16 %v4196, %v4192
    %v4765 = vpack.c.b16 %v4197, %v4193
    %v4766 = vpack.c.b16 %v4198, %v4194
    %v4767 = vpack.c.b16 %v4203, %v4199
    %v4768 = vpack.c.b16 %v4204, %v4200
    %v4769 = vpack.c.b16 %v4205, %v4201
    %v4770 = vpack.c.b16 %v4206, %v4202
    %v4771 = vpack.c.b16 %v4211, %v4207
    %v4772 = vpack.c.b16 %v4212, %v4208
    %v4773 = vpack.c.b16 %v4213, %v4209
    %v4774 = vpack.c.b16 %v4214, %v4210
    %v4775 = vpack.c.b16 %v4219, %v4215
    %v4776 = vpack.c.b16 %v4220, %v4216
    %v4777 = vpack.c.b16 %v4221, %v4217
    %v4778 = vpack.c.b16 %v4222, %v4218
    %v4779 = vpack.c.b16 %v4227, %v4223
    %v4780 = vpack.c.b16 %v4228, %v4224
    %v4781 = vpack.c.b16 %v4229, %v4225
    %v4782 = vpack.c.b16 %v4230, %v4226
    %v4783 = vpack.c.b16 %v4235, %v4231
    %v4784 = vpack.c.b16 %v4236, %v4232
    %v4785 = vpack.c.b16 %v4237, %v4233
    %v4786 = vpack.c.b16 %v4238, %v4234
    %v4787 = vpack.c.b16 %v4243, %v4239
    %v4788 = vpack.c.b16 %v4244, %v4240
    %v4789 = vpack.c.b16 %v4245, %v4241
    %v4790 = vpack.c.b16 %v4246, %v4242
    %v4791 = vpack.c.b16 %v4251, %v4247
    %v4792 = vpack.c.b16 %v4252, %v4248
    %v4793 = vpack.c.b16 %v4253, %v4249
    %v4794 = vpack.c.b16 %v4254, %v4250
    %v4795 = vpack.c.b16 %v4259, %v4255
    %v4796 = vpack.c.b16 %v4260, %v4256
    %v4797 = vpack.c.b16 %v4261, %v4257
    %v4798 = vpack.c.b16 %v4262, %v4258
    %v4799 = vpack.c.b16 %v4267, %v4263
    %v4800 = vpack.c.b16 %v4268, %v4264
    %v4801 = vpack.c.b16 %v4269, %v4265
    %v4802 = vpack.c.b16 %v4270, %v4266
    %v4803 = vpack.c.b16 %v4275, %v4271
    %v4804 = vpack.c.b16 %v4276, %v4272
    %v4805 = vpack.c.b16 %v4277, %v4273
    %v4806 = vpack.c.b16 %v4278, %v4274
    %v4807 = vpack.c.b16 %v4283, %v4279
    %v4808 = vpack.c.b16 %v4284, %v4280
    %v4809 = vpack.c.b16 %v4285, %v4281
    %v4810 = vpack.c.b16 %v4286, %v4282
    %v4811 = vpack.c.b16 %v4291, %v4287
    %v4812 = vpack.c.b16 %v4292, %v4288
    %v4813 = vpack.c.b16 %v4293, %v4289
    %v4814 = vpack.c.b16 %v4294, %v4290
    %v4815 = vpack.c.b16 %v4299, %v4295
    %v4816 = vpack.c.b16 %v4300, %v4296
    %v4817 = vpack.c.b16 %v4301, %v4297
    %v4818 = vpack.c.b16 %v4302, %v4298
    %v4819 = vpack.c.b16 %v4307, %v4303
    %v4820 = vpack.c.b16 %v4308, %v4304
    %v4821 = vpack.c.b16 %v4309, %v4305
    %v4822 = vpack.c.b16 %v4310, %v4306
    %v4823 = vpack.c.b16 %v4315, %v4311
    %v4824 = vpack.c.b16 %v4316, %v4312
    %v4825 = vpack.c.b16 %v4317, %v4313
    %v4826 = vpack.c.b16 %v4318, %v4314
    %v4827 = vpack.c.b16 %v4323, %v4319
    %v4828 = vpack.c.b16 %v4324, %v4320
    %v4829 = vpack.c.b16 %v4325, %v4321
    %v4830 = vpack.c.b16 %v4326, %v4322
    %v4831 = vpack.c.b16 %v4331, %v4327
    %v4832 = vpack.c.b16 %v4332, %v4328
    %v4833 = vpack.c.b16 %v4333, %v4329
    %v4834 = vpack.c.b16 %v4334, %v4330
    %v4835 = vpack.c.b16 %v4339, %v4335
    %v4836 = vpack.c.b16 %v4340, %v4336
    %v4837 = vpack.c.b16 %v4341, %v4337
    %v4838 = vpack.c.b16 %v4342, %v4338
    %v4839 = vpack.c.b16 %v4347, %v4343
    %v4840 = vpack.c.b16 %v4348, %v4344
    %v4841 = vpack.c.b16 %v4349, %v4345
    %v4842 = vpack.c.b16 %v4350, %v4346
    %v4843 = vpack.c.b16 %v4355, %v4351
    %v4844 = vpack.c.b16 %v4356, %v4352
    %v4845 = vpack.c.b16 %v4357, %v4353
    %v4846 = vpack.c.b16 %v4358, %v4354
    %v4847 = vpack.c.b16 %v4363, %v4359
    %v4848 = vpack.c.b16 %v4364, %v4360
    %v4849 = vpack.c.b16 %v4365, %v4361
    %v4850 = vpack.c.b16 %v4366, %v4362
    %v4851 = vpack.c.b16 %v4371, %v4367
    %v4852 = vpack.c.b16 %v4372, %v4368
    %v4853 = vpack.c.b16 %v4373, %v4369
    %v4854 = vpack.c.b16 %v4374, %v4370
    %v4855 = vpack.c.b16 %v4379, %v4375
    %v4856 = vpack.c.b16 %v4380, %v4376
    %v4857 = vpack.c.b16 %v4381, %v4377
    %v4858 = vpack.c.b16 %v4382, %v4378
    %v4859 = vpack.c.b16 %v4387, %v4383
    %v4860 = vpack.c.b16 %v4388, %v4384
    %v4861 = vpack.c.b16 %v4389, %v4385
    %v4862 = vpack.c.b16 %v4390, %v4386
    %v4863 = vpack.c.b16 %v4395, %v4391
    %v4864 = vpack.c.b16 %v4396, %v4392
    %v4865 = vpack.c.b16 %v4397, %v4393
    %v4866 = vpack.c.b16 %v4398, %v4394
    %v4867 = vpack.c.b16 %v4403, %v4399
    %v4868 = vpack.c.b16 %v4404, %v4400
    %v4869 = vpack.c.b16 %v4405, %v4401
    %v4870 = vpack.c.b16 %v4406, %v4402
    %v4871 = vpack.c.b16 %v4411, %v4407
    %v4872 = vpack.c.b16 %v4412, %v4408
    %v4873 = vpack.c.b16 %v4413, %v4409
    %v4874 = vpack.c.b16 %v4414, %v4410
    %v4875 = vpack.c.b16 %v4419, %v4415
    %v4876 = vpack.c.b16 %v4420, %v4416
    %v4877 = vpack.c.b16 %v4421, %v4417
    %v4878 = vpack.c.b16 %v4422, %v4418
    %v4879 = vpack.c.b16 %v4427, %v4423
    %v4880 = vpack.c.b16 %v4428, %v4424
    %v4881 = vpack.c.b16 %v4429, %v4425
    %v4882 = vpack.c.b16 %v4430, %v4426
    %v4883 = vpack.c.b16 %v4435, %v4431
    %v4884 = vpack.c.b16 %v4436, %v4432
    %v4885 = vpack.c.b16 %v4437, %v4433
    %v4886 = vpack.c.b16 %v4438, %v4434
    %v4887 = vpack.c.b16 %v4443, %v4439
    %v4888 = vpack.c.b16 %v4444, %v4440
    %v4889 = vpack.c.b16 %v4445, %v4441
    %v4890 = vpack.c.b16 %v4446, %v4442
    %v4891 = vpack.c.b16 %v4451, %v4447
    %v4892 = vpack.c.b16 %v4452, %v4448
    %v4893 = vpack.c.b16 %v4453, %v4449
    %v4894 = vpack.c.b16 %v4454, %v4450
    %v4895 = vpack.c.b16 %v4459, %v4455
    %v4896 = vpack.c.b16 %v4460, %v4456
    %v4897 = vpack.c.b16 %v4461, %v4457
    %v4898 = vpack.c.b16 %v4462, %v4458
    %v4899 = vpack.c.b16 %v4467, %v4463
    %v4900 = vpack.c.b16 %v4468, %v4464
    %v4901 = vpack.c.b16 %v4469, %v4465
    %v4902 = vpack.c.b16 %v4470, %v4466
    %v4903 = vpack.c.b16 %v4475, %v4471
    %v4904 = vpack.c.b16 %v4476, %v4472
    %v4905 = vpack.c.b16 %v4477, %v4473
    %v4906 = vpack.c.b16 %v4478, %v4474
    %v4907 = vpack.c.b16 %v4483, %v4479
    %v4908 = vpack.c.b16 %v4484, %v4480
    %v4909 = vpack.c.b16 %v4485, %v4481
    %v4910 = vpack.c.b16 %v4486, %v4482
    %v4911 = vpack.c.b16 %v4491, %v4487
    %v4912 = vpack.c.b16 %v4492, %v4488
    %v4913 = vpack.c.b16 %v4493, %v4489
    %v4914 = vpack.c.b16 %v4494, %v4490
    %v4915 = vpack.c.b16 %v4499, %v4495
    %v4916 = vpack.c.b16 %v4500, %v4496
    %v4917 = vpack.c.b16 %v4501, %v4497
    %v4918 = vpack.c.b16 %v4502, %v4498
    %v4919 = vpack.c.b16 %v4507, %v4503
    %v4920 = vpack.c.b16 %v4508, %v4504
    %v4921 = vpack.c.b16 %v4509, %v4505
    %v4922 = vpack.c.b16 %v4510, %v4506
    %v4923 = vpack.c.b16 %v4515, %v4511
    %v4924 = vpack.c.b16 %v4516, %v4512
    %v4925 = vpack.c.b16 %v4517, %v4513
    %v4926 = vpack.c.b16 %v4518, %v4514
    %v4927 = vpack.c.b16 %v4523, %v4519
    %v4928 = vpack.c.b16 %v4524, %v4520
    %v4929 = vpack.c.b16 %v4525, %v4521
    %v4930 = vpack.c.b16 %v4526, %v4522
    %v4931 = vpack.c.b16 %v4531, %v4527
    %v4932 = vpack.c.b16 %v4532, %v4528
    %v4933 = vpack.c.b16 %v4533, %v4529
    %v4934 = vpack.c.b16 %v4534, %v4530
    %v4935 = vpack.c.b16 %v4539, %v4535
    %v4936 = vpack.c.b16 %v4540, %v4536
    %v4937 = vpack.c.b16 %v4541, %v4537
    %v4938 = vpack.c.b16 %v4542, %v4538
    %v4939 = vpack.c.b16 %v4547, %v4543
    %v4940 = vpack.c.b16 %v4548, %v4544
    %v4941 = vpack.c.b16 %v4549, %v4545
    %v4942 = vpack.c.b16 %v4550, %v4546
    %v4943 = vpack.c.b16 %v4555, %v4551
    %v4944 = vpack.c.b16 %v4556, %v4552
    %v4945 = vpack.c.b16 %v4557, %v4553
    %v4946 = vpack.c.b16 %v4558, %v4554
    %v4947 = vpack.c.b16 %v4563, %v4559
    %v4948 = vpack.c.b16 %v4564, %v4560
    %v4949 = vpack.c.b16 %v4565, %v4561
    %v4950 = vpack.c.b16 %v4566, %v4562
    %5335 = vmatprep.subr.bf16.mxu0 %v4568
    %5336 = vmatpush1.bf16.msra.mxu0 %v4567
    %5337 = vmatprep.subr.bf16.mxu0 %v4572
    %5338 = vmatpush1.bf16.msra.mxu0 %v4571
    %5339 = vmatprep.subr.bf16.mxu0 %v4576
    %5340 = vmatpush1.bf16.msra.mxu0 %v4575
    %5341 = vmatprep.subr.bf16.mxu0 %v4580
    %5342 = vmatpush1.bf16.msra.mxu0 %v4579
    %5343 = vmatprep.subr.bf16.mxu0 %v4584
    %5344 = vmatpush1.bf16.msra.mxu0 %v4583
    %5345 = vmatprep.subr.bf16.mxu0 %v4588
    %5346 = vmatpush1.bf16.msra.mxu0 %v4587
    %5347 = vmatprep.subr.bf16.mxu0 %v4592
    %5348 = vmatpush1.bf16.msra.mxu0 %v4591
    %5349 = vmatprep.subr.bf16.mxu0 %v4596
    %5350 = vmatpush1.bf16.msra.mxu0 %v4595
    %5351 = vmatprep.subr.bf16.mxu0 %v4600
    %5352 = vmatpush1.bf16.msra.mxu0 %v4599
    %5353 = vmatprep.subr.bf16.mxu0 %v4604
    %5354 = vmatpush1.bf16.msra.mxu0 %v4603
    %5355 = vmatprep.subr.bf16.mxu0 %v4608
    %5356 = vmatpush1.bf16.msra.mxu0 %v4607
    %5357 = vmatprep.subr.bf16.mxu0 %v4612
    %5358 = vmatpush1.bf16.msra.mxu0 %v4611
    %5359 = vmatprep.subr.bf16.mxu0 %v4616
    %5360 = vmatpush1.bf16.msra.mxu0 %v4615
    %5361 = vmatprep.subr.bf16.mxu0 %v4620
    %5362 = vmatpush1.bf16.msra.mxu0 %v4619
    %5363 = vmatprep.subr.bf16.mxu0 %v4624
    %5364 = vmatpush1.bf16.msra.mxu0 %v4623
    %5365 = vmatprep.subr.bf16.mxu0 %v4628
    %5366 = vmatpush1.bf16.msra.mxu0 %v4627
    %5367 = vmatprep.mubr.bf16.mxu0 %v3020
    %5368 = vmatmul.mubr.bf16.gmra.mrb[0].mxu0 %v3019
    %v5369 = vpop.f32.mrb[0].mxu0
    %v5370 = vadd.f32 %v42, %v5369
    %v5371 = vpop.f32.mrb[0].mxu0
    %v5372 = vadd.f32 %v43, %v5371
    %v5373 = vpop.f32.mrb[0].mxu0
    %v5374 = vadd.f32 %v46, %v5373
    %v5375 = vpop.f32.mrb[0].mxu0
    %v5376 = vadd.f32 %v47, %v5375
    %5377 = vdwg.mxu0
    %5378 = vmatprep.subr.bf16.mxu0 %v4632
    %5379 = vmatpush1.bf16.msra.mxu0 %v4631
    %5380 = vmatprep.subr.bf16.mxu0 %v4636
    %5381 = vmatpush1.bf16.msra.mxu0 %v4635
    %5382 = vmatprep.subr.bf16.mxu0 %v4640
    %5383 = vmatpush1.bf16.msra.mxu0 %v4639
    %5384 = vmatprep.subr.bf16.mxu0 %v4644
    %5385 = vmatpush1.bf16.msra.mxu0 %v4643
    %5386 = vmatprep.subr.bf16.mxu0 %v4648
    %5387 = vmatpush1.bf16.msra.mxu0 %v4647
    %5388 = vmatprep.subr.bf16.mxu0 %v4652
    %5389 = vmatpush1.bf16.msra.mxu0 %v4651
    %5390 = vmatprep.subr.bf16.mxu0 %v4656
    %5391 = vmatpush1.bf16.msra.mxu0 %v4655
    %5392 = vmatprep.subr.bf16.mxu0 %v4660
    %5393 = vmatpush1.bf16.msra.mxu0 %v4659
    %5394 = vmatprep.subr.bf16.mxu0 %v4664
    %5395 = vmatpush1.bf16.msra.mxu0 %v4663
    %5396 = vmatprep.subr.bf16.mxu0 %v4668
    %5397 = vmatpush1.bf16.msra.mxu0 %v4667
    %5398 = vmatprep.subr.bf16.mxu0 %v4672
    %5399 = vmatpush1.bf16.msra.mxu0 %v4671
    %5400 = vmatprep.subr.bf16.mxu0 %v4676
    %5401 = vmatpush1.bf16.msra.mxu0 %v4675
    %5402 = vmatprep.subr.bf16.mxu0 %v4680
    %5403 = vmatpush1.bf16.msra.mxu0 %v4679
    %5404 = vmatprep.subr.bf16.mxu0 %v4684
    %5405 = vmatpush1.bf16.msra.mxu0 %v4683
    %5406 = vmatprep.subr.bf16.mxu0 %v4688
    %5407 = vmatpush1.bf16.msra.mxu0 %v4687
    %5408 = vmatprep.subr.bf16.mxu0 %v4692
    %5409 = vmatpush1.bf16.msra.mxu0 %v4691
    %5410 = vmatprep.mubr.bf16.mxu0 %v3022
    %5411 = vmatmul.mubr.bf16.gmra.mrb[0].mxu0 %v3021
    %v5412 = vpop.f32.mrb[0].mxu0
    %v5413 = vadd.f32 %v5370, %v5412
    %v5414 = vpop.f32.mrb[0].mxu0
    %v5415 = vadd.f32 %v5372, %v5414
    %v5416 = vpop.f32.mrb[0].mxu0
    %v5417 = vadd.f32 %v5374, %v5416
    %v5418 = vpop.f32.mrb[0].mxu0
    %v5419 = vadd.f32 %v5376, %v5418
    %5420 = vdwg.mxu0
    %5421 = vmatprep.subr.bf16.mxu0 %v4696
    %5422 = vmatpush1.bf16.msra.mxu0 %v4695
    %5423 = vmatprep.subr.bf16.mxu0 %v4700
    %5424 = vmatpush1.bf16.msra.mxu0 %v4699
    %5425 = vmatprep.subr.bf16.mxu0 %v4704
    %5426 = vmatpush1.bf16.msra.mxu0 %v4703
    %5427 = vmatprep.subr.bf16.mxu0 %v4708
    %5428 = vmatpush1.bf16.msra.mxu0 %v4707
    %5429 = vmatprep.subr.bf16.mxu0 %v4712
    %5430 = vmatpush1.bf16.msra.mxu0 %v4711
    %5431 = vmatprep.subr.bf16.mxu0 %v4716
    %5432 = vmatpush1.bf16.msra.mxu0 %v4715
    %5433 = vmatprep.subr.bf16.mxu0 %v4720
    %5434 = vmatpush1.bf16.msra.mxu0 %v4719
    %5435 = vmatprep.subr.bf16.mxu0 %v4724
    %5436 = vmatpush1.bf16.msra.mxu0 %v4723
    %5437 = vmatprep.subr.bf16.mxu0 %v4728
    %5438 = vmatpush1.bf16.msra.mxu0 %v4727
    %5439 = vmatprep.subr.bf16.mxu0 %v4732
    %5440 = vmatpush1.bf16.msra.mxu0 %v4731
    %5441 = vmatprep.subr.bf16.mxu0 %v4736
    %5442 = vmatpush1.bf16.msra.mxu0 %v4735
    %5443 = vmatprep.subr.bf16.mxu0 %v4740
    %5444 = vmatpush1.bf16.msra.mxu0 %v4739
    %5445 = vmatprep.subr.bf16.mxu0 %v4744
    %5446 = vmatpush1.bf16.msra.mxu0 %v4743
    %5447 = vmatprep.subr.bf16.mxu0 %v4748
    %5448 = vmatpush1.bf16.msra.mxu0 %v4747
    %5449 = vmatprep.subr.bf16.mxu0 %v4752
    %5450 = vmatpush1.bf16.msra.mxu0 %v4751
    %5451 = vmatprep.subr.bf16.mxu0 %v4756
    %5452 = vmatpush1.bf16.msra.mxu0 %v4755
    %5453 = vmatprep.mubr.bf16.mxu0 %v3024
    %5454 = vmatmul.mubr.bf16.gmra.mrb[0].mxu0 %v3023
    %v5455 = vpop.f32.mrb[0].mxu0
    %v5456 = vadd.f32 %v5413, %v5455
    %v5457 = vpop.f32.mrb[0].mxu0
    %v5458 = vadd.f32 %v5415, %v5457
    %v5459 = vpop.f32.mrb[0].mxu0
    %v5460 = vadd.f32 %v5417, %v5459
    %v5461 = vpop.f32.mrb[0].mxu0
    %v5462 = vadd.f32 %v5419, %v5461
    %5463 = vdwg.mxu0
    %5464 = vmatprep.subr.bf16.mxu0 %v4760
    %5465 = vmatpush1.bf16.msra.mxu0 %v4759
    %5466 = vmatprep.subr.bf16.mxu0 %v4764
    %5467 = vmatpush1.bf16.msra.mxu0 %v4763
    %5468 = vmatprep.subr.bf16.mxu0 %v4768
    %5469 = vmatpush1.bf16.msra.mxu0 %v4767
    %5470 = vmatprep.subr.bf16.mxu0 %v4772
    %5471 = vmatpush1.bf16.msra.mxu0 %v4771
    %5472 = vmatprep.subr.bf16.mxu0 %v4776
    %5473 = vmatpush1.bf16.msra.mxu0 %v4775
    %5474 = vmatprep.subr.bf16.mxu0 %v4780
    %5475 = vmatpush1.bf16.msra.mxu0 %v4779
    %5476 = vmatprep.subr.bf16.mxu0 %v4784
    %5477 = vmatpush1.bf16.msra.mxu0 %v4783
    %5478 = vmatprep.subr.bf16.mxu0 %v4788
    %5479 = vmatpush1.bf16.msra.mxu0 %v4787
    %5480 = vmatprep.subr.bf16.mxu0 %v4792
    %5481 = vmatpush1.bf16.msra.mxu0 %v4791
    %5482 = vmatprep.subr.bf16.mxu0 %v4796
    %5483 = vmatpush1.bf16.msra.mxu0 %v4795
    %5484 = vmatprep.subr.bf16.mxu0 %v4800
    %5485 = vmatpush1.bf16.msra.mxu0 %v4799
    %5486 = vmatprep.subr.bf16.mxu0 %v4804
    %5487 = vmatpush1.bf16.msra.mxu0 %v4803
    %5488 = vmatprep.subr.bf16.mxu0 %v4808
    %5489 = vmatpush1.bf16.msra.mxu0 %v4807
    %5490 = vmatprep.subr.bf16.mxu0 %v4812
    %5491 = vmatpush1.bf16.msra.mxu0 %v4811
    %5492 = vmatprep.subr.bf16.mxu0 %v4816
    %5493 = vmatpush1.bf16.msra.mxu0 %v4815
    %5494 = vmatprep.subr.bf16.mxu0 %v4820
    %5495 = vmatpush1.bf16.msra.mxu0 %v4819
    %5496 = vmatprep.mubr.bf16.mxu0 %v3026
    %5497 = vmatmul.mubr.bf16.gmra.mrb[0].mxu0 %v3025
    %v5498 = vpop.f32.mrb[0].mxu0
    %v5499 = vadd.f32 %v5456, %v5498
    %v5500 = vpop.f32.mrb[0].mxu0
    %v5501 = vadd.f32 %v5458, %v5500
    %v5502 = vpop.f32.mrb[0].mxu0
    %v5503 = vadd.f32 %v5460, %v5502
    %v5504 = vpop.f32.mrb[0].mxu0
    %v5505 = vadd.f32 %v5462, %v5504
    %5506 = vdwg.mxu0
    %5507 = vmatprep.subr.bf16.mxu0 %v4824
    %5508 = vmatpush1.bf16.msra.mxu0 %v4823
    %5509 = vmatprep.subr.bf16.mxu0 %v4828
    %5510 = vmatpush1.bf16.msra.mxu0 %v4827
    %5511 = vmatprep.subr.bf16.mxu0 %v4832
    %5512 = vmatpush1.bf16.msra.mxu0 %v4831
    %5513 = vmatprep.subr.bf16.mxu0 %v4836
    %5514 = vmatpush1.bf16.msra.mxu0 %v4835
    %5515 = vmatprep.subr.bf16.mxu0 %v4840
    %5516 = vmatpush1.bf16.msra.mxu0 %v4839
    %5517 = vmatprep.subr.bf16.mxu0 %v4844
    %5518 = vmatpush1.bf16.msra.mxu0 %v4843
    %5519 = vmatprep.subr.bf16.mxu0 %v4848
    %5520 = vmatpush1.bf16.msra.mxu0 %v4847
    %5521 = vmatprep.subr.bf16.mxu0 %v4852
    %5522 = vmatpush1.bf16.msra.mxu0 %v4851
    %5523 = vmatprep.subr.bf16.mxu0 %v4856
    %5524 = vmatpush1.bf16.msra.mxu0 %v4855
    %5525 = vmatprep.subr.bf16.mxu0 %v4860
    %5526 = vmatpush1.bf16.msra.mxu0 %v4859
    %5527 = vmatprep.subr.bf16.mxu0 %v4864
    %5528 = vmatpush1.bf16.msra.mxu0 %v4863
    %5529 = vmatprep.subr.bf16.mxu0 %v4868
    %5530 = vmatpush1.bf16.msra.mxu0 %v4867
    %5531 = vmatprep.subr.bf16.mxu0 %v4872
    %5532 = vmatpush1.bf16.msra.mxu0 %v4871
    %5533 = vmatprep.subr.bf16.mxu0 %v4876
    %5534 = vmatpush1.bf16.msra.mxu0 %v4875
    %5535 = vmatprep.subr.bf16.mxu0 %v4880
    %5536 = vmatpush1.bf16.msra.mxu0 %v4879
    %5537 = vmatprep.subr.bf16.mxu0 %v4884
    %5538 = vmatpush1.bf16.msra.mxu0 %v4883
    %5539 = vmatprep.mubr.bf16.mxu0 %v3028
    %5540 = vmatmul.mubr.bf16.gmra.mrb[0].mxu0 %v3027
    %v5541 = vpop.f32.mrb[0].mxu0
    %v5542 = vadd.f32 %v5499, %v5541
    %v5543 = vpop.f32.mrb[0].mxu0
    %v5544 = vadd.f32 %v5501, %v5543
    %v5545 = vpop.f32.mrb[0].mxu0
    %v5546 = vadd.f32 %v5503, %v5545
    %v5547 = vpop.f32.mrb[0].mxu0
    %v5548 = vadd.f32 %v5505, %v5547
    %5549 = vdwg.mxu0
    %5550 = vmatprep.subr.bf16.mxu0 %v4888
    %5551 = vmatpush1.bf16.msra.mxu0 %v4887
    %5552 = vmatprep.subr.bf16.mxu0 %v4892
    %5553 = vmatpush1.bf16.msra.mxu0 %v4891
    %5554 = vmatprep.subr.bf16.mxu0 %v4896
    %5555 = vmatpush1.bf16.msra.mxu0 %v4895
    %5556 = vmatprep.subr.bf16.mxu0 %v4900
    %5557 = vmatpush1.bf16.msra.mxu0 %v4899
    %5558 = vmatprep.subr.bf16.mxu0 %v4904
    %5559 = vmatpush1.bf16.msra.mxu0 %v4903
    %5560 = vmatprep.subr.bf16.mxu0 %v4908
    %5561 = vmatpush1.bf16.msra.mxu0 %v4907
    %5562 = vmatprep.subr.bf16.mxu0 %v4912
    %5563 = vmatpush1.bf16.msra.mxu0 %v4911
    %5564 = vmatprep.subr.bf16.mxu0 %v4916
    %5565 = vmatpush1.bf16.msra.mxu0 %v4915
    %5566 = vmatprep.subr.bf16.mxu0 %v4920
    %5567 = vmatpush1.bf16.msra.mxu0 %v4919
    %5568 = vmatprep.subr.bf16.mxu0 %v4924
    %5569 = vmatpush1.bf16.msra.mxu0 %v4923
    %5570 = vmatprep.subr.bf16.mxu0 %v4928
    %5571 = vmatpush1.bf16.msra.mxu0 %v4927
    %5572 = vmatprep.subr.bf16.mxu0 %v4932
    %5573 = vmatpush1.bf16.msra.mxu0 %v4931
    %5574 = vmatprep.subr.bf16.mxu0 %v4936
    %5575 = vmatpush1.bf16.msra.mxu0 %v4935
    %5576 = vmatprep.subr.bf16.mxu0 %v4940
    %5577 = vmatpush1.bf16.msra.mxu0 %v4939
    %5578 = vmatprep.subr.bf16.mxu0 %v4944
    %5579 = vmatpush1.bf16.msra.mxu0 %v4943
    %5580 = vmatprep.subr.bf16.mxu0 %v4948
    %5581 = vmatpush1.bf16.msra.mxu0 %v4947
    %5582 = vmatprep.mubr.bf16.mxu0 %v3030
    %5583 = vmatmul.mubr.bf16.gmra.mrb[0].mxu0 %v3029
    %v5584 = vpop.f32.mrb[0].mxu0
    %v5585 = vadd.f32 %v5542, %v5584
    %v5586 = vpop.f32.mrb[0].mxu0
    %v5587 = vadd.f32 %v5544, %v5586
    %v5588 = vpop.f32.mrb[0].mxu0
    %v5589 = vadd.f32 %v5546, %v5588
    %v5590 = vpop.f32.mrb[0].mxu0
    %v5591 = vadd.f32 %v5548, %v5590
    %5592 = vdwg.mxu0
    %5593 = vmatprep.subr.bf16.mxu0 %v4570
    %5594 = vmatpush1.bf16.msra.mxu0 %v4569
    %5595 = vmatprep.subr.bf16.mxu0 %v4574
    %5596 = vmatpush1.bf16.msra.mxu0 %v4573
    %5597 = vmatprep.subr.bf16.mxu0 %v4578
    %5598 = vmatpush1.bf16.msra.mxu0 %v4577
    %5599 = vmatprep.subr.bf16.mxu0 %v4582
    %5600 = vmatpush1.bf16.msra.mxu0 %v4581
    %5601 = vmatprep.subr.bf16.mxu0 %v4586
    %5602 = vmatpush1.bf16.msra.mxu0 %v4585
    %5603 = vmatprep.subr.bf16.mxu0 %v4590
    %5604 = vmatpush1.bf16.msra.mxu0 %v4589
    %5605 = vmatprep.subr.bf16.mxu0 %v4594
    %5606 = vmatpush1.bf16.msra.mxu0 %v4593
    %5607 = vmatprep.subr.bf16.mxu0 %v4598
    %5608 = vmatpush1.bf16.msra.mxu0 %v4597
    %5609 = vmatprep.subr.bf16.mxu0 %v4602
    %5610 = vmatpush1.bf16.msra.mxu0 %v4601
    %5611 = vmatprep.subr.bf16.mxu0 %v4606
    %5612 = vmatpush1.bf16.msra.mxu0 %v4605
    %5613 = vmatprep.subr.bf16.mxu0 %v4610
    %5614 = vmatpush1.bf16.msra.mxu0 %v4609
    %5615 = vmatprep.subr.bf16.mxu0 %v4614
    %5616 = vmatpush1.bf16.msra.mxu0 %v4613
    %5617 = vmatprep.subr.bf16.mxu0 %v4618
    %5618 = vmatpush1.bf16.msra.mxu0 %v4617
    %5619 = vmatprep.subr.bf16.mxu0 %v4622
    %5620 = vmatpush1.bf16.msra.mxu0 %v4621
    %5621 = vmatprep.subr.bf16.mxu0 %v4626
    %5622 = vmatpush1.bf16.msra.mxu0 %v4625
    %5623 = vmatprep.subr.bf16.mxu0 %v4630
    %5624 = vmatpush1.bf16.msra.mxu0 %v4629
    %5625 = vmatprep.mubr.bf16.mxu0 %v3020
    %5626 = vmatmul.mubr.bf16.gmra.mrb[0].mxu0 %v3019
    %v5627 = vpop.f32.mrb[0].mxu0
    %v5628 = vadd.f32 %v44, %v5627
    %v5629 = vpop.f32.mrb[0].mxu0
    %v5630 = vadd.f32 %v45, %v5629
    %v5631 = vpop.f32.mrb[0].mxu0
    %v5632 = vadd.f32 %v48, %v5631
    %v5633 = vpop.f32.mrb[0].mxu0
    %v5634 = vadd.f32 %v49, %v5633
    %5635 = vdwg.mxu0
    %5636 = vmatprep.subr.bf16.mxu0 %v4634
    %5637 = vmatpush1.bf16.msra.mxu0 %v4633
    %5638 = vmatprep.subr.bf16.mxu0 %v4638
    %5639 = vmatpush1.bf16.msra.mxu0 %v4637
    %5640 = vmatprep.subr.bf16.mxu0 %v4642
    %5641 = vmatpush1.bf16.msra.mxu0 %v4641
    %5642 = vmatprep.subr.bf16.mxu0 %v4646
    %5643 = vmatpush1.bf16.msra.mxu0 %v4645
    %5644 = vmatprep.subr.bf16.mxu0 %v4650
    %5645 = vmatpush1.bf16.msra.mxu0 %v4649
    %5646 = vmatprep.subr.bf16.mxu0 %v4654
    %5647 = vmatpush1.bf16.msra.mxu0 %v4653
    %5648 = vmatprep.subr.bf16.mxu0 %v4658
    %5649 = vmatpush1.bf16.msra.mxu0 %v4657
    %5650 = vmatprep.subr.bf16.mxu0 %v4662
    %5651 = vmatpush1.bf16.msra.mxu0 %v4661
    %5652 = vmatprep.subr.bf16.mxu0 %v4666
    %5653 = vmatpush1.bf16.msra.mxu0 %v4665
    %5654 = vmatprep.subr.bf16.mxu0 %v4670
    %5655 = vmatpush1.bf16.msra.mxu0 %v4669
    %5656 = vmatprep.subr.bf16.mxu0 %v4674
    %5657 = vmatpush1.bf16.msra.mxu0 %v4673
    %5658 = vmatprep.subr.bf16.mxu0 %v4678
    %5659 = vmatpush1.bf16.msra.mxu0 %v4677
    %5660 = vmatprep.subr.bf16.mxu0 %v4682
    %5661 = vmatpush1.bf16.msra.mxu0 %v4681
    %5662 = vmatprep.subr.bf16.mxu0 %v4686
    %5663 = vmatpush1.bf16.msra.mxu0 %v4685
    %5664 = vmatprep.subr.bf16.mxu0 %v4690
    %5665 = vmatpush1.bf16.msra.mxu0 %v4689
    %5666 = vmatprep.subr.bf16.mxu0 %v4694
    %5667 = vmatpush1.bf16.msra.mxu0 %v4693
    %5668 = vmatprep.mubr.bf16.mxu0 %v3022
    %5669 = vmatmul.mubr.bf16.gmra.mrb[0].mxu0 %v3021
    %v5670 = vpop.f32.mrb[0].mxu0
    %v5671 = vadd.f32 %v5628, %v5670
    %v5672 = vpop.f32.mrb[0].mxu0
    %v5673 = vadd.f32 %v5630, %v5672
    %v5674 = vpop.f32.mrb[0].mxu0
    %v5675 = vadd.f32 %v5632, %v5674
    %v5676 = vpop.f32.mrb[0].mxu0
    %v5677 = vadd.f32 %v5634, %v5676
    %5678 = vdwg.mxu0
    %5679 = vmatprep.subr.bf16.mxu0 %v4698
    %5680 = vmatpush1.bf16.msra.mxu0 %v4697
    %5681 = vmatprep.subr.bf16.mxu0 %v4702
    %5682 = vmatpush1.bf16.msra.mxu0 %v4701
    %5683 = vmatprep.subr.bf16.mxu0 %v4706
    %5684 = vmatpush1.bf16.msra.mxu0 %v4705
    %5685 = vmatprep.subr.bf16.mxu0 %v4710
    %5686 = vmatpush1.bf16.msra.mxu0 %v4709
    %5687 = vmatprep.subr.bf16.mxu0 %v4714
    %5688 = vmatpush1.bf16.msra.mxu0 %v4713
    %5689 = vmatprep.subr.bf16.mxu0 %v4718
    %5690 = vmatpush1.bf16.msra.mxu0 %v4717
    %5691 = vmatprep.subr.bf16.mxu0 %v4722
    %5692 = vmatpush1.bf16.msra.mxu0 %v4721
    %5693 = vmatprep.subr.bf16.mxu0 %v4726
    %5694 = vmatpush1.bf16.msra.mxu0 %v4725
    %5695 = vmatprep.subr.bf16.mxu0 %v4730
    %5696 = vmatpush1.bf16.msra.mxu0 %v4729
    %5697 = vmatprep.subr.bf16.mxu0 %v4734
    %5698 = vmatpush1.bf16.msra.mxu0 %v4733
    %5699 = vmatprep.subr.bf16.mxu0 %v4738
    %5700 = vmatpush1.bf16.msra.mxu0 %v4737
    %5701 = vmatprep.subr.bf16.mxu0 %v4742
    %5702 = vmatpush1.bf16.msra.mxu0 %v4741
    %5703 = vmatprep.subr.bf16.mxu0 %v4746
    %5704 = vmatpush1.bf16.msra.mxu0 %v4745
    %5705 = vmatprep.subr.bf16.mxu0 %v4750
    %5706 = vmatpush1.bf16.msra.mxu0 %v4749
    %5707 = vmatprep.subr.bf16.mxu0 %v4754
    %5708 = vmatpush1.bf16.msra.mxu0 %v4753
    %5709 = vmatprep.subr.bf16.mxu0 %v4758
    %5710 = vmatpush1.bf16.msra.mxu0 %v4757
    %5711 = vmatprep.mubr.bf16.mxu0 %v3024
    %5712 = vmatmul.mubr.bf16.gmra.mrb[0].mxu0 %v3023
    %v5713 = vpop.f32.mrb[0].mxu0
    %v5714 = vadd.f32 %v5671, %v5713
    %v5715 = vpop.f32.mrb[0].mxu0
    %v5716 = vadd.f32 %v5673, %v5715
    %v5717 = vpop.f32.mrb[0].mxu0
    %v5718 = vadd.f32 %v5675, %v5717
    %v5719 = vpop.f32.mrb[0].mxu0
    %v5720 = vadd.f32 %v5677, %v5719
    %5721 = vdwg.mxu0
    %5722 = vmatprep.subr.bf16.mxu0 %v4762
    %5723 = vmatpush1.bf16.msra.mxu0 %v4761
    %5724 = vmatprep.subr.bf16.mxu0 %v4766
    %5725 = vmatpush1.bf16.msra.mxu0 %v4765
    %5726 = vmatprep.subr.bf16.mxu0 %v4770
    %5727 = vmatpush1.bf16.msra.mxu0 %v4769
    %5728 = vmatprep.subr.bf16.mxu0 %v4774
    %5729 = vmatpush1.bf16.msra.mxu0 %v4773
    %5730 = vmatprep.subr.bf16.mxu0 %v4778
    %5731 = vmatpush1.bf16.msra.mxu0 %v4777
    %5732 = vmatprep.subr.bf16.mxu0 %v4782
    %5733 = vmatpush1.bf16.msra.mxu0 %v4781
    %5734 = vmatprep.subr.bf16.mxu0 %v4786
    %5735 = vmatpush1.bf16.msra.mxu0 %v4785
    %5736 = vmatprep.subr.bf16.mxu0 %v4790
    %5737 = vmatpush1.bf16.msra.mxu0 %v4789
    %5738 = vmatprep.subr.bf16.mxu0 %v4794
    %5739 = vmatpush1.bf16.msra.mxu0 %v4793
    %5740 = vmatprep.subr.bf16.mxu0 %v4798
    %5741 = vmatpush1.bf16.msra.mxu0 %v4797
    %5742 = vmatprep.subr.bf16.mxu0 %v4802
    %5743 = vmatpush1.bf16.msra.mxu0 %v4801
    %5744 = vmatprep.subr.bf16.mxu0 %v4806
    %5745 = vmatpush1.bf16.msra.mxu0 %v4805
    %5746 = vmatprep.subr.bf16.mxu0 %v4810
    %5747 = vmatpush1.bf16.msra.mxu0 %v4809
    %5748 = vmatprep.subr.bf16.mxu0 %v4814
    %5749 = vmatpush1.bf16.msra.mxu0 %v4813
    %5750 = vmatprep.subr.bf16.mxu0 %v4818
    %5751 = vmatpush1.bf16.msra.mxu0 %v4817
    %5752 = vmatprep.subr.bf16.mxu0 %v4822
    %5753 = vmatpush1.bf16.msra.mxu0 %v4821
    %5754 = vmatprep.mubr.bf16.mxu0 %v3026
    %5755 = vmatmul.mubr.bf16.gmra.mrb[0].mxu0 %v3025
    %v5756 = vpop.f32.mrb[0].mxu0
    %v5757 = vadd.f32 %v5714, %v5756
    %v5758 = vpop.f32.mrb[0].mxu0
    %v5759 = vadd.f32 %v5716, %v5758
    %v5760 = vpop.f32.mrb[0].mxu0
    %v5761 = vadd.f32 %v5718, %v5760
    %v5762 = vpop.f32.mrb[0].mxu0
    %v5763 = vadd.f32 %v5720, %v5762
    %5764 = vdwg.mxu0
    %5765 = vmatprep.subr.bf16.mxu0 %v4826
    %5766 = vmatpush1.bf16.msra.mxu0 %v4825
    %5767 = vmatprep.subr.bf16.mxu0 %v4830
    %5768 = vmatpush1.bf16.msra.mxu0 %v4829
    %5769 = vmatprep.subr.bf16.mxu0 %v4834
    %5770 = vmatpush1.bf16.msra.mxu0 %v4833
    %5771 = vmatprep.subr.bf16.mxu0 %v4838
    %5772 = vmatpush1.bf16.msra.mxu0 %v4837
    %5773 = vmatprep.subr.bf16.mxu0 %v4842
    %5774 = vmatpush1.bf16.msra.mxu0 %v4841
    %5775 = vmatprep.subr.bf16.mxu0 %v4846
    %5776 = vmatpush1.bf16.msra.mxu0 %v4845
    %5777 = vmatprep.subr.bf16.mxu0 %v4850
    %5778 = vmatpush1.bf16.msra.mxu0 %v4849
    %5779 = vmatprep.subr.bf16.mxu0 %v4854
    %5780 = vmatpush1.bf16.msra.mxu0 %v4853
    %5781 = vmatprep.subr.bf16.mxu0 %v4858
    %5782 = vmatpush1.bf16.msra.mxu0 %v4857
    %5783 = vmatprep.subr.bf16.mxu0 %v4862
    %5784 = vmatpush1.bf16.msra.mxu0 %v4861
    %5785 = vmatprep.subr.bf16.mxu0 %v4866
    %5786 = vmatpush1.bf16.msra.mxu0 %v4865
    %5787 = vmatprep.subr.bf16.mxu0 %v4870
    %5788 = vmatpush1.bf16.msra.mxu0 %v4869
    %5789 = vmatprep.subr.bf16.mxu0 %v4874
    %5790 = vmatpush1.bf16.msra.mxu0 %v4873
    %5791 = vmatprep.subr.bf16.mxu0 %v4878
    %5792 = vmatpush1.bf16.msra.mxu0 %v4877
    %5793 = vmatprep.subr.bf16.mxu0 %v4882
    %5794 = vmatpush1.bf16.msra.mxu0 %v4881
    %5795 = vmatprep.subr.bf16.mxu0 %v4886
    %5796 = vmatpush1.bf16.msra.mxu0 %v4885
    %5797 = vmatprep.mubr.bf16.mxu0 %v3028
    %5798 = vmatmul.mubr.bf16.gmra.mrb[0].mxu0 %v3027
    %v5799 = vpop.f32.mrb[0].mxu0
    %v5800 = vadd.f32 %v5757, %v5799
    %v5801 = vpop.f32.mrb[0].mxu0
    %v5802 = vadd.f32 %v5759, %v5801
    %v5803 = vpop.f32.mrb[0].mxu0
    %v5804 = vadd.f32 %v5761, %v5803
    %v5805 = vpop.f32.mrb[0].mxu0
    %v5806 = vadd.f32 %v5763, %v5805
    %5807 = vdwg.mxu0
    %5808 = vmatprep.subr.bf16.mxu0 %v4890
    %5809 = vmatpush1.bf16.msra.mxu0 %v4889
    %5810 = vmatprep.subr.bf16.mxu0 %v4894
    %5811 = vmatpush1.bf16.msra.mxu0 %v4893
    %5812 = vmatprep.subr.bf16.mxu0 %v4898
    %5813 = vmatpush1.bf16.msra.mxu0 %v4897
    %5814 = vmatprep.subr.bf16.mxu0 %v4902
    %5815 = vmatpush1.bf16.msra.mxu0 %v4901
    %5816 = vmatprep.subr.bf16.mxu0 %v4906
    %5817 = vmatpush1.bf16.msra.mxu0 %v4905
    %5818 = vmatprep.subr.bf16.mxu0 %v4910
    %5819 = vmatpush1.bf16.msra.mxu0 %v4909
    %5820 = vmatprep.subr.bf16.mxu0 %v4914
    %5821 = vmatpush1.bf16.msra.mxu0 %v4913
    %5822 = vmatprep.subr.bf16.mxu0 %v4918
    %5823 = vmatpush1.bf16.msra.mxu0 %v4917
    %5824 = vmatprep.subr.bf16.mxu0 %v4922
    %5825 = vmatpush1.bf16.msra.mxu0 %v4921
    %5826 = vmatprep.subr.bf16.mxu0 %v4926
    %5827 = vmatpush1.bf16.msra.mxu0 %v4925
    %5828 = vmatprep.subr.bf16.mxu0 %v4930
    %5829 = vmatpush1.bf16.msra.mxu0 %v4929
    %5830 = vmatprep.subr.bf16.mxu0 %v4934
    %5831 = vmatpush1.bf16.msra.mxu0 %v4933
    %5832 = vmatprep.subr.bf16.mxu0 %v4938
    %5833 = vmatpush1.bf16.msra.mxu0 %v4937
    %5834 = vmatprep.subr.bf16.mxu0 %v4942
    %5835 = vmatpush1.bf16.msra.mxu0 %v4941
    %5836 = vmatprep.subr.bf16.mxu0 %v4946
    %5837 = vmatpush1.bf16.msra.mxu0 %v4945
    %5838 = vmatprep.subr.bf16.mxu0 %v4950
    %5839 = vmatpush1.bf16.msra.mxu0 %v4949
    %5840 = vmatprep.mubr.bf16.mxu0 %v3030
    %5841 = vmatmul.mubr.bf16.gmra.mrb[0].mxu0 %v3029
    %v5842 = vpop.f32.mrb[0].mxu0
    %v5843 = vadd.f32 %v5800, %v5842
    %v5844 = vpop.f32.mrb[0].mxu0
    %v5845 = vadd.f32 %v5802, %v5844
    %v5846 = vpop.f32.mrb[0].mxu0
    %v5847 = vadd.f32 %v5804, %v5846
    %v5848 = vpop.f32.mrb[0].mxu0
    %v5849 = vadd.f32 %v5806, %v5848
    %5850 = vdwg.mxu0
    %v5851 = vmax.f32 %v5585, 0.0
    %v5852 = vmax.f32 %v5587, 0.0
    %v5853 = vmax.f32 %v5843, 0.0
    %v5854 = vmax.f32 %v5845, 0.0
    %v5855 = vmax.f32 %v5589, 0.0
    %v5856 = vmax.f32 %v5591, 0.0
    %v5857 = vmax.f32 %v5847, 0.0
    %v5858 = vmax.f32 %v5849, 0.0
    %5859 = vst [vmem:[%s3] sm:$0xff] %v5851
    %5860 = vst [vmem:[%s3 + $0x8] sm:$0xff] %v5852
    %5861 = vst [vmem:[%s3 + $0x10] sm:$0xff] %v5853
    %5862 = vst [vmem:[%s3 + $0x18] sm:$0xff] %v5854
    %5863 = vst [vmem:[%s3 + $0x20] sm:$0xff] %v5855
    %5864 = vst [vmem:[%s3 + $0x28] sm:$0xff] %v5856
    %5865 = vst [vmem:[%s3 + $0x30] sm:$0xff] %v5857
    %5866 = vst [vmem:[%s3 + $0x38] sm:$0xff] %v5858
    // Predicated region
    $region22: #{residual_block_forward.1} parent=1 // pred_check
      _
    $region23: #{residual_block_forward.1} parent=1 // pred_check_branch
      %5868 = sbr.rel (0) target = $region25
    $region24: #{residual_block_forward.1} parent=1 // pred_region
      _
    $region25: #{residual_block_forward.1} parent=1 // pred_fallthru
      _
    // Predicated region
    $region26: #{residual_block_forward.1} parent=1 // pred_check
      _
    $region27: #{residual_block_forward.1} parent=1 // pred_check_branch
      %5870 = sbr.rel (0) target = $region29
    $region28: #{residual_block_forward.1} parent=1 // pred_region
      _
    $region29: #{residual_block_forward.1} parent=1 // pred_fallthru
      _
    %5871 = vsyncpa [#allocation3], 1
    %5872 = vsyncpa [#allocation5], 1

</llo_original>
